<compile_context>
chip_gen: v6e
topology: v6e:2x2x1
jax: 0.10.0
libtpu: 0.0.40
codegen_flags: <defaults>
</compile_context>

<pallas_src>
import math
from functools import partial

import jax
import jax.numpy as jnp
import numpy as np
from jax.experimental import pallas as pl
from jax.experimental.pallas import tpu as pltpu

# ----------------------------- model config ---------------------------------
IMG_SIZE = 16
PATCH_SIZE = 8
IN_CHANS = 3
EMBED_DIM = 64                              # real channel width
DEPTH = 2
NUM_HEADS = 4
MLP_RATIO = 4.0
HIDDEN_DIM = int(EMBED_DIM * MLP_RATIO)     # 256
LN_EPS = 1e-6
POS_EMBED_TOKENS = 1370                     # hard-coded in the reference module (1 + 37*37)
C_PAD = 128                                 # lane-dense padded channel width (64 -> 128)
INTERP_OFFSET = 0.1

assert HIDDEN_DIM == 2 * C_PAD              # MLP hidden split into two 128-lane halves

# --------------------- per-depth weight-slab row layout ----------------------
# All rows are C_PAD lanes wide.  Matrices first (so every 128-row matrix starts
# sublane-aligned), 1-row vectors at the end.
_W_SECTIONS = [
    ("wq", C_PAD), ("wk", C_PAD), ("wv", C_PAD), ("proj_w", C_PAD),
    ("fc1_wa", C_PAD), ("fc1_wb", C_PAD), ("fc2_wa", C_PAD), ("fc2_wb", C_PAD),
    ("ln1_w", 1), ("ln1_b", 1), ("bq", 1), ("bk", 1), ("bv", 1),
    ("proj_b", 1), ("g1", 1), ("ln2_w", 1), ("ln2_b", 1),
    ("fc1_ba", 1), ("fc1_bb", 1), ("fc2_b", 1), ("g2", 1),
]
W_OFF = {}
_o = 0
for _n, _s in _W_SECTIONS:
    W_OFF[_n] = (_o, _s)
    _o += _s
W_ROWS = ((_o + 7) // 8) * 8


# ----------------------------- small helpers --------------------------------
def _gelu_tanh(x):
    """tanh-approx GELU: the tanh runs on the EUP (near-free slot); error vs exact
    erf GELU is ~1e-3 absolute, far inside the check tolerance."""
    c0 = math.sqrt(2.0 / math.pi)
    return 0.5 * x * (1.0 + jnp.tanh(c0 * (x + 0.044715 * (x * x * x))))


def _cubic_weights(t, A=-0.75):
    # PyTorch bicubic kernel (A = -0.75); pure Python floats (trace-time only).
    w0 = ((A * (t + 1) - 5 * A) * (t + 1) + 8 * A) * (t + 1) - 4 * A
    w1 = ((A + 2) * t - (A + 3)) * t * t + 1
    w2 = ((A + 2) * (1 - t) - (A + 3)) * (1 - t) * (1 - t) + 1
    w3 = ((A * (2 - t) - 5 * A) * (2 - t) + 8 * A) * (2 - t) - 4 * A
    return (w0, w1, w2, w3)


def _build_interp_matrix(npatch, w, h, patch_size, n_pos_tokens,
                         interpolate_offset=INTERP_OFFSET):
    """Dense (npatch, M*M) tap matrix replicating F.interpolate(mode='bicubic',
    align_corners=False, scale_factor=(sx, sy)) on the (M, M) pos-embed grid."""
    N = n_pos_tokens - 1
    if npatch == N and w == h:
        return np.eye(N, dtype=np.float32)
    M = int(math.sqrt(N))
    assert M * M == N
    w0, h0 = w // patch_size, h // patch_size
    if interpolate_offset:
        sx = float(w0 + interpolate_offset) / M
        sy = float(h0 + interpolate_offset) / M
        out_h, out_w = int(math.floor(M * sx)), int(math.floor(M * sy))
        scale_h, scale_w = 1.0 / sx, 1.0 / sy
    else:
        out_h, out_w = w0, h0
        scale_h, scale_w = M / out_h, M / out_w
    assert out_h * out_w == npatch
    mat = np.zeros((npatch, N), np.float32)
    for oy in range(out_h):
        src_y = scale_h * (oy + 0.5) - 0.5
        iy = math.floor(src_y)
        wy = _cubic_weights(src_y - iy)
        for ox in range(out_w):
            src_x = scale_w * (ox + 0.5) - 0.5
            ix = math.floor(src_x)
            wx = _cubic_weights(src_x - ix)
            row = oy * out_w + ox
            for a in range(4):
                yy = min(max(iy - 1 + a, 0), M - 1)
                for b in range(4):
                    xx = min(max(ix - 1 + b, 0), M - 1)
                    mat[row, yy * M + xx] += wy[a] * wx[b]
    return mat


# ----------------------------- fused Pallas kernel ---------------------------
def _dino_fused_kernel(
    patches_ref, const_ref, wslab_ref,          # inputs (wslab stays in HBM)
    out_ref,                                    # (B, C_PAD) output
    wbuf_ref, wsem,                             # VMEM weight scratch + DMA sems
    *, batch, n_patches, depth, num_heads, c_real, eps, coff,
):
    f32 = jnp.float32
    c_pad = out_ref.shape[1]
    n_tok = 1 + n_patches
    bn = batch * n_tok
    hbn = num_heads * bn

    # --- kick off per-block weight DMAs; block d=1 hides behind block-0 compute.
    copies = [pltpu.make_async_copy(wslab_ref.at[d], wbuf_ref.at[d], wsem.at[d])
              for d in range(depth)]
    for cp in copies:
        cp.start()

    def cget(name, width=None):
        o, r = coff[name]
        v = const_ref[o:o + r, :]
        return v if width is None else v[:, :width]

    # Channel mask (1.0 on the c_real real lanes, 0.0 on padding) — hoisted once.
    lane = jax.lax.broadcasted_iota(jnp.int32, (1, c_pad), 1)
    cmask = (lane < c_real).astype(f32)
    inv_c = 1.0 / c_real

    def layernorm(t, w, b):
        # LN over the c_real real channels only (padding lanes of t are always 0).
        tm = t * cmask
        mu = jnp.sum(tm, axis=-1, keepdims=True) * inv_c
        cen = (t - mu) * cmask
        var = jnp.sum(cen * cen, axis=-1, keepdims=True) * inv_c
        return cen * jax.lax.rsqrt(var + eps) * w + b

    # 1) Patch embedding: stride==kernel conv as one MXU matmul.
    tok = jnp.dot(patches_ref[...], cget("patch_w"),
                  preferred_element_type=f32) + cget("patch_b")           # (B*Np, Cp)

    # 2) Token assembly + positional embedding, fully in registers:
    #    x = S_tok @ tok  +  S_pos @ [cls+pos_cls ; pos_patches]
    x = (jnp.dot(cget("s_tok", batch * n_patches), tok, preferred_element_type=f32)
         + jnp.dot(cget("s_pos", n_tok), cget("tokpos"), preferred_element_type=f32))

    # Attention head-stacking constants (all static, from the const slab).
    t_rep = cget("t_rep", bn)          # (HBN, BN)   sublane head replication
    r_cat = cget("r_cat", hbn)         # (BN, HBN)   head concat-by-sum
    head_mask = cget("head_mask")      # (HBN, Cp)   per-head lane mask
    neg_bias = cget("neg_bias", hbn)   # (HBN, HBN)  -1e30 off (head, image) blocks

    # 3) Transformer blocks (static unroll over depth).
    for d in range(depth):
        copies[d].wait()               # block-0 waits ~immediately; block-1 overlapped

        def wrow(name, _d=d):
            o, r = W_OFF[name]
            return wbuf_ref[_d, o:o + r, :]

        # --- attention: x + gamma1 * proj(MHSA(LN(x))), heads stacked on sublanes ---
        h = layernorm(x, wrow("ln1_w"), wrow("ln1_b"))
        q = jnp.dot(h, wrow("wq"), preferred_element_type=f32) + wrow("bq")   # scale folded in
        k = jnp.dot(h, wrow("wk"), preferred_element_type=f32) + wrow("bk")
        v = jnp.dot(h, wrow("wv"), preferred_element_type=f32) + wrow("bv")
        q_blk = jnp.dot(t_rep, q, preferred_element_type=f32) * head_mask     # (HBN, Cp)
        k_blk = jnp.dot(t_rep, k, preferred_element_type=f32)
        v_blk = jnp.dot(t_rep, v, preferred_element_type=f32) * head_mask
        s = jax.lax.dot_general(q_blk, k_blk, (((1,), (1,)), ((), ())),
                                preferred_element_type=f32) + neg_bias        # (HBN, HBN)
        s = s - jnp.max(s, axis=-1, keepdims=True)
        e = jnp.exp(s)
        p = e * pl.reciprocal(jnp.sum(e, axis=-1, keepdims=True), approx=True)
        o_blk = jnp.dot(p, v_blk, preferred_element_type=f32)                 # (HBN, Cp)
        o_cat = jnp.dot(r_cat, o_blk, preferred_element_type=f32)             # (BN, Cp)
        attn = jnp.dot(o_cat, wrow("proj_w"), preferred_element_type=f32) + wrow("proj_b")
        x = x + wrow("g1") * attn

        # --- MLP: x + gamma2 * fc2(gelu(fc1(LN(x)))), hidden split in two 128 halves ---
        h2 = layernorm(x, wrow("ln2_w"), wrow("ln2_b"))
        ha = _gelu_tanh(jnp.dot(h2, wrow("fc1_wa"), preferred_element_type=f32)
                        + wrow("fc1_ba"))
        hb = _gelu_tanh(jnp.dot(h2, wrow("fc1_wb"), preferred_element_type=f32)
                        + wrow("fc1_bb"))
        mlp = (jnp.dot(ha, wrow("fc2_wa"), preferred_element_type=f32)
               + jnp.dot(hb, wrow("fc2_wb"), preferred_element_type=f32)
               + wrow("fc2_b"))
        x = x + wrow("g2") * mlp

    # 4) Final LayerNorm on the CLS rows only (LN is per-token -> identical result).
    out_ref[...] = layernorm(x[0:batch, :], cget("norm_w"), cget("norm_b"))


# ------------------------------- forward wrapper ------------------------------
def dino_forward(x, packed, *, patch_size=PATCH_SIZE, num_heads=NUM_HEADS,
                 interpolate_offset=INTERP_OFFSET):
    """Equivalent of DinoVisionTransformer.forward(x, is_training=False, masks=None)."""
    B, c_in, w_img, h_img = x.shape
    P = patch_size
    g0, g1 = w_img // P, h_img // P
    n_patch = g0 * g1
    n_tok = 1 + n_patch                          # CLS + patches (0 register tokens)
    bn = B * n_tok
    hbn = num_heads * bn
    hd = EMBED_DIM // num_heads
    # TODO(synk): masks path (mask_token substitution) not implemented — masks=None only.
    # TODO(synk): fully-resident (BN)^2 attention; a flash-style tiled variant is needed
    #             before scaling to real DINO resolutions.
    assert hbn <= C_PAD, "head-stacked attention requires num_heads*B*(1+Np) <= 128"

    # im2col glue (tiny tensor, one XLA op): NCHW -> (B*Np, C*P*P)
    patches = x.reshape(B, c_in, g0, P, g1, P).transpose(0, 2, 4, 1, 3, 5)
    patches = patches.reshape(B * n_patch, c_in * P * P)

    # Pos-embed bicubic resize as ONE tiny wrapper-side matmul (perf review #1).
    n_pos = packed["pos_grid"].shape[0] + 1
    interp = jnp.asarray(
        _build_interp_matrix(n_patch, w_img, h_img, P, n_pos, interpolate_offset))
    pos_p = interp @ packed["pos_grid"]                         # (Np, C_PAD)
    tokpos = jnp.concatenate([packed["cls_pos"], pos_p], axis=0)  # (1+Np, C_PAD)

    # ---- trace-time assembly / head-stacking constants (numpy) ----
    def padlanes(a):
        return np.pad(a.astype(np.float32), ((0, 0), (0, C_PAD - a.shape[1])))

    # token order: [cls_0 .. cls_{B-1}, patches_b0, patches_b1, ...]
    tok_batch = np.concatenate([np.arange(B), np.repeat(np.arange(B), n_patch)])
    s_pos = np.zeros((bn, n_tok), np.float32)                   # places cls+pos rows
    s_pos[np.arange(B), 0] = 1.0
    for b in range(B):
        s_pos[B + b * n_patch + np.arange(n_patch), 1 + np.arange(n_patch)] = 1.0
    s_tok = np.zeros((bn, B * n_patch), np.float32)             # places patch tokens
    s_tok[B + np.arange(B * n_patch), np.arange(B * n_patch)] = 1.0
    t_rep = np.tile(np.eye(bn, dtype=np.float32), (num_heads, 1))   # (HBN, BN)
    r_cat = np.tile(np.eye(bn, dtype=np.float32), (1, num_heads))   # (BN, HBN)
    lanes = np.arange(C_PAD)
    head_of_row = np.repeat(np.arange(num_heads), bn)
    head_mask = ((lanes[None, :] >= head_of_row[:, None] * hd)
                 & (lanes[None, :] < (head_of_row[:, None] + 1) * hd)).astype(np.float32)
    batch_of_row = np.tile(tok_batch, num_heads)
    allowed = ((head_of_row[:, None] == head_of_row[None, :])
               & (batch_of_row[:, None] == batch_of_row[None, :]))
    neg_bias = np.where(allowed, 0.0, -1e30).astype(np.float32)     # (HBN, HBN)

    # ---- coalesce constants into ONE 128-lane slab (perf review #2) ----
    sections = [
        ("patch_w", packed["patch_w"]),
        ("head_mask", jnp.asarray(head_mask)),
        ("neg_bias", jnp.asarray(padlanes(neg_bias))),
        ("t_rep", jnp.asarray(padlanes(t_rep))),
        ("r_cat", jnp.asarray(padlanes(r_cat))),
        ("s_pos", jnp.asarray(padlanes(s_pos))),
        ("s_tok", jnp.asarray(padlanes(s_tok))),
        ("tokpos", tokpos),
        ("patch_b", packed["patch_b"]),
        ("norm_w", packed["norm_w"]),
        ("norm_b", packed["norm_b"]),
    ]
    coff, parts, off = {}, [], 0
    for name, arr in sections:
        coff[name] = (off, arr.shape[0])
        parts.append(arr)
        off += arr.shape[0]
    const_slab = jnp.concatenate(parts, axis=0)
    pad_rows = ((off + 7) // 8) * 8 - off
    if pad_rows:
        const_slab = jnp.pad(const_slab, ((0, pad_rows), (0, 0)))

    kernel = partial(_dino_fused_kernel, batch=B, n_patches=n_patch, depth=DEPTH,
                     num_heads=num_heads, c_real=EMBED_DIM, eps=LN_EPS, coff=coff)

    vmem = pl.BlockSpec(memory_space=pltpu.MemorySpace.VMEM)
    out_pad = pl.pallas_call(
        kernel,
        out_shape=jax.ShapeDtypeStruct((B, C_PAD), jnp.float32),
        in_specs=[vmem, vmem, pl.BlockSpec(memory_space=pl.ANY)],   # weight slab stays in HBM
        out_specs=vmem,
        scratch_shapes=[pltpu.VMEM((DEPTH, W_ROWS, C_PAD), jnp.float32),
                        pltpu.SemaphoreType.DMA((DEPTH,))],
    )(patches, const_slab, packed["wslab"])

    return out_pad[:, :EMBED_DIM]                # head = nn.Identity(); CLS features


# ------------------------------- param packing --------------------------------
def pack_params(params):
    """One-time repack: pad the 64-wide channel dim to 128 lanes (zero padding keeps
    pad lanes exactly 0 through the network), fold the attention scale into Wq/bq,
    pre-add cls + pos_cls, and pack all per-block weights into one (DEPTH, R, 128)
    slab laid out per _W_SECTIONS."""
    E = EMBED_DIM
    padc = C_PAD - E
    scale = float(E // NUM_HEADS) ** -0.5

    def pad_vec(v):                                  # (E,) -> (1, C_PAD)
        return jnp.pad(v.reshape(1, E), ((0, 0), (0, padc)))

    def pad_cols(m):                                 # (R, E) -> (R, C_PAD)
        return jnp.pad(m, ((0, 0), (0, padc)))

    def pad_sq(m):                                   # (E, E) -> (C_PAD, C_PAD)
        return jnp.pad(m, ((0, padc), (0, padc)))

    packed = {
        "patch_w": pad_cols(params["patch_w"].reshape(E, -1).T),     # (C*P*P, C_PAD)
        "patch_b": pad_vec(params["patch_b"]),
        # cls + class-pos pre-added (perf review #3)
        "cls_pos": pad_cols(params["cls_token"].reshape(1, E) + params["pos_embed"][0, :1]),
        "pos_grid": pad_cols(params["pos_embed"][0, 1:]),             # (1369, C_PAD)
        "norm_w": pad_vec(params["norm_w"]),
        "norm_b": pad_vec(params["norm_b"]),
    }

    depth_slabs = []
    for blk in params["blocks"]:
        w_qkv, b_qkv = blk["w_qkv"], blk["b_qkv"]
        sec = {
            "wq": pad_sq(w_qkv[:, 0:E] * scale),                      # attn scale folded in
            "wk": pad_sq(w_qkv[:, E:2 * E]),
            "wv": pad_sq(w_qkv[:, 2 * E:3 * E]),
            "proj_w": pad_sq(blk["w_proj"]),
            "fc1_wa": jnp.pad(blk["w_fc1"][:, :C_PAD], ((0, padc), (0, 0))),
            "fc1_wb": jnp.pad(blk["w_fc1"][:, C_PAD:], ((0, padc), (0, 0))),
            "fc2_wa": pad_cols(blk["w_fc2"][:C_PAD, :]),
            "fc2_wb": pad_cols(blk["w_fc2"][C_PAD:, :]),
            "ln1_w": pad_vec(blk["ln1_w"]), "ln1_b": pad_vec(blk["ln1_b"]),
            "bq": pad_vec(b_qkv[0:E] * scale),
            "bk": pad_vec(b_qkv[E:2 * E]),
            "bv": pad_vec(b_qkv[2 * E:3 * E]),
            "proj_b": pad_vec(blk["b_proj"]), "g1": pad_vec(blk["gamma1"]),
            "ln2_w": pad_vec(blk["ln2_w"]), "ln2_b": pad_vec(blk["ln2_b"]),
            "fc1_ba": blk["b_fc1"][:C_PAD].reshape(1, C_PAD),
            "fc1_bb": blk["b_fc1"][C_PAD:].reshape(1, C_PAD),
            "fc2_b": pad_vec(blk["b_fc2"]), "g2": pad_vec(blk["gamma2"]),
        }
        rows = jnp.concatenate([sec[n] for n, _ in _W_SECTIONS], axis=0)
        rows = jnp.pad(rows, ((0, W_ROWS - rows.shape[0]), (0, 0)))
        depth_slabs.append(rows)
    packed["wslab"] = jnp.stack(depth_slabs, axis=0)                  # (DEPTH, W_ROWS, C_PAD)
    return packed


# ------------------------------- param init -----------------------------------
def init_params(key):
    keys = iter(jax.random.split(key, 4 + 8 * DEPTH))
    nrm = lambda shape, s=0.02: s * jax.random.normal(next(keys), shape, jnp.float32)

    params = {
        "patch_w": nrm((EMBED_DIM, IN_CHANS, PATCH_SIZE, PATCH_SIZE)),
        "patch_b": nrm((EMBED_DIM,)),
        "cls_token": nrm((1, 1, EMBED_DIM)),
        "pos_embed": nrm((1, POS_EMBED_TOKENS, EMBED_DIM)),
        "mask_token": jnp.zeros((1, EMBED_DIM), jnp.float32),   # unused (masks=None)
        "norm_w": jnp.ones((EMBED_DIM,), jnp.float32),
        "norm_b": jnp.zeros((EMBED_DIM,), jnp.float32),
        "blocks": [],
    }
    for _ in range(DEPTH):
        params["blocks"].append({
            "ln1_w": jnp.ones((EMBED_DIM,), jnp.float32),
            "ln1_b": jnp.zeros((EMBED_DIM,), jnp.float32),
            "w_qkv": nrm((EMBED_DIM, 3 * EMBED_DIM)),
            "b_qkv": nrm((3 * EMBED_DIM,)),
            "w_proj": nrm((EMBED_DIM, EMBED_DIM)),
            "b_proj": nrm((EMBED_DIM,)),
            "gamma1": jnp.ones((EMBED_DIM,), jnp.float32),       # LayerScale init = ones
            "ln2_w": jnp.ones((EMBED_DIM,), jnp.float32),
            "ln2_b": jnp.zeros((EMBED_DIM,), jnp.float32),
            "w_fc1": nrm((EMBED_DIM, HIDDEN_DIM)),
            "b_fc1": nrm((HIDDEN_DIM,)),
            "w_fc2": nrm((HIDDEN_DIM, EMBED_DIM)),
            "b_fc2": nrm((EMBED_DIM,)),
            "gamma2": jnp.ones((EMBED_DIM,), jnp.float32),
        })
    return params


# ------------------------ plain-JAX reference (for checking) -------------------
def _reference_forward(x, params, *, patch_size=PATCH_SIZE, num_heads=NUM_HEADS):
    B, c_in, w_img, h_img = x.shape
    P = patch_size
    g0, g1 = w_img // P, h_img // P
    n_patch = g0 * g1
    E = EMBED_DIM
    patches = x.reshape(B, c_in, g0, P, g1, P).transpose(0, 2, 4, 1, 3, 5)
    patches = patches.reshape(B, n_patch, -1)
    tok = patches @ params["patch_w"].reshape(E, -1).T + params["patch_b"]
    cls = jnp.broadcast_to(params["cls_token"], (B, 1, E))
    t = jnp.concatenate([cls, tok], axis=1)
    interp = jnp.asarray(
        _build_interp_matrix(n_patch, w_img, h_img, P, params["pos_embed"].shape[1]))
    pos_p = interp @ params["pos_embed"][0, 1:]
    t = t + jnp.concatenate([params["pos_embed"][:, :1], pos_p[None]], axis=1)

    def ln(z, w, b):
        mu = z.mean(-1, keepdims=True)
        var = ((z - mu) ** 2).mean(-1, keepdims=True)
        return (z - mu) / jnp.sqrt(var + LN_EPS) * w + b

    hd = E // num_heads
    for blk in params["blocks"]:
        h = ln(t, blk["ln1_w"], blk["ln1_b"])
        qkv = h @ blk["w_qkv"] + blk["b_qkv"]
        q, k, v = qkv[..., :E], qkv[..., E:2 * E], qkv[..., 2 * E:]
        qh = q.reshape(B, -1, num_heads, hd).transpose(0, 2, 1, 3)
        kh = k.reshape(B, -1, num_heads, hd).transpose(0, 2, 1, 3)
        vh = v.reshape(B, -1, num_heads, hd).transpose(0, 2, 1, 3)
        s = jnp.einsum("bhqd,bhkd->bhqk", qh, kh) * (hd ** -0.5)
        p = jax.nn.softmax(s, axis=-1)
        o = jnp.einsum("bhqk,bhkd->bhqd", p, vh).transpose(0, 2, 1, 3).reshape(B, -1, E)
        t = t + blk["gamma1"] * (o @ blk["w_proj"] + blk["b_proj"])
        h2 = ln(t, blk["ln2_w"], blk["ln2_b"])
        h2 = jax.nn.gelu(h2 @ blk["w_fc1"] + blk["b_fc1"], approximate=False)
        t = t + blk["gamma2"] * (h2 @ blk["w_fc2"] + blk["b_fc2"])
    return ln(t, params["norm_w"], params["norm_b"])[:, 0]


# ---------------------------------- main ---------------------------------------
if __name__ == "__main__":
    key = jax.random.PRNGKey(0)
    k_x, k_p = jax.random.split(key)
    x = jax.random.normal(k_x, (2, IN_CHANS, IMG_SIZE, IMG_SIZE), jnp.float32)

    params = init_params(k_p)
    packed = pack_params(params)            # one-time pad / transpose / slab packing

    out = jax.block_until_ready(jax.jit(dino_forward)(x, packed))

    assert out.shape == (2, EMBED_DIM), out.shape
    assert bool(jnp.all(jnp.isfinite(out)))

    # Cross-check the fused Pallas kernel against a plain-JAX reference forward.
    ref = jax.block_until_ready(jax.jit(_reference_forward)(x, params))
    err = float(jnp.max(jnp.abs(out - ref)))
    assert err < 3e-2, f"max |kernel - reference| = {err}"

    print("KERNEL_OK")
</pallas_src>

<mosaic_0001>
module attributes {stable_mosaic.version = 11 : i64} {
  func.func @_dino_fused_kernel(%arg0: memref<8x192xf32, #tpu.memory_space<vmem>>, %arg1: memref<352x128xf32, #tpu.memory_space<vmem>>, %arg2: memref<2x1040x128xf32, #tpu.memory_space<any>>, %arg3: memref<2x128xf32, #tpu.memory_space<vmem>>, %arg4: memref<2x1040x128xf32, #tpu.memory_space<vmem>>, %arg5: memref<2x!tpu.dma_semaphore, #tpu.memory_space<semaphore_mem>>) attributes {dimension_semantics = [], scalar_prefetch = 0 : i64, scratch_operands = 2 : i64, tpu.core_type = #tpu.core_type<tc>} {
    %c0_i32 = arith.constant 0 : i32
    %c0_i32_0 = arith.constant 0 : i32
    %c0_i32_1 = arith.constant 0 : i32
    %c0_i32_2 = arith.constant 0 : i32
    %c0_i32_3 = arith.constant 0 : i32
    %0 = tpu.memref_slice %arg2[%c0_i32, %c0_i32_2, %c0_i32_3] : memref<2x1040x128xf32, #tpu.memory_space<any>> -> memref<1x1040x128xf32, #tpu.memory_space<any>>
    %1 = tpu.memref_squeeze %0 : memref<1x1040x128xf32, #tpu.memory_space<any>> -> memref<1040x128xf32, #tpu.memory_space<any>>
    %c0_i32_4 = arith.constant 0 : i32
    %c0_i32_5 = arith.constant 0 : i32
    %2 = tpu.memref_slice %arg4[%c0_i32_0, %c0_i32_4, %c0_i32_5] : memref<2x1040x128xf32, #tpu.memory_space<vmem>> -> memref<1x1040x128xf32, #tpu.memory_space<vmem>>
    %3 = tpu.memref_squeeze %2 : memref<1x1040x128xf32, #tpu.memory_space<vmem>> -> memref<1040x128xf32, #tpu.memory_space<vmem>>
    %4 = tpu.memref_slice %arg5[%c0_i32_1] : memref<2x!tpu.dma_semaphore, #tpu.memory_space<semaphore_mem>> -> memref<1x!tpu.dma_semaphore, #tpu.memory_space<semaphore_mem>>
    %5 = tpu.memref_squeeze %4 : memref<1x!tpu.dma_semaphore, #tpu.memory_space<semaphore_mem>> -> memref<!tpu.dma_semaphore, #tpu.memory_space<semaphore_mem>>
    tpu.enqueue_dma source(%1 : memref<1040x128xf32, #tpu.memory_space<any>>) target(%3 : memref<1040x128xf32, #tpu.memory_space<vmem>>) target_semaphore(%5 : memref<!tpu.dma_semaphore, #tpu.memory_space<semaphore_mem>>)
    %c1_i32 = arith.constant 1 : i32
    %c1_i32_6 = arith.constant 1 : i32
    %c1_i32_7 = arith.constant 1 : i32
    %c0_i32_8 = arith.constant 0 : i32
    %c0_i32_9 = arith.constant 0 : i32
    %6 = tpu.memref_slice %arg2[%c1_i32, %c0_i32_8, %c0_i32_9] : memref<2x1040x128xf32, #tpu.memory_space<any>> -> memref<1x1040x128xf32, #tpu.memory_space<any>>
    %7 = tpu.memref_squeeze %6 : memref<1x1040x128xf32, #tpu.memory_space<any>> -> memref<1040x128xf32, #tpu.memory_space<any>>
    %c0_i32_10 = arith.constant 0 : i32
    %c0_i32_11 = arith.constant 0 : i32
    %8 = tpu.memref_slice %arg4[%c1_i32_6, %c0_i32_10, %c0_i32_11] : memref<2x1040x128xf32, #tpu.memory_space<vmem>> -> memref<1x1040x128xf32, #tpu.memory_space<vmem>>
    %9 = tpu.memref_squeeze %8 : memref<1x1040x128xf32, #tpu.memory_space<vmem>> -> memref<1040x128xf32, #tpu.memory_space<vmem>>
    %10 = tpu.memref_slice %arg5[%c1_i32_7] : memref<2x!tpu.dma_semaphore, #tpu.memory_space<semaphore_mem>> -> memref<1x!tpu.dma_semaphore, #tpu.memory_space<semaphore_mem>>
    %11 = tpu.memref_squeeze %10 : memref<1x!tpu.dma_semaphore, #tpu.memory_space<semaphore_mem>> -> memref<!tpu.dma_semaphore, #tpu.memory_space<semaphore_mem>>
    tpu.enqueue_dma source(%7 : memref<1040x128xf32, #tpu.memory_space<any>>) target(%9 : memref<1040x128xf32, #tpu.memory_space<vmem>>) target_semaphore(%11 : memref<!tpu.dma_semaphore, #tpu.memory_space<semaphore_mem>>)
    %12 = tpu.iota {dimensions = array<i32: 1>} : vector<1x128xi32>
    %c64_i32 = arith.constant 64 : i32
    %13 = vector.broadcast %c64_i32 : i32 to vector<1x128xi32>
    %14 = arith.cmpi slt, %12, %13 : vector<1x128xi32>
    %15 = arith.extui %14 : vector<1x128xi1> to vector<1x128xi32>
    %16 = arith.sitofp %15 : vector<1x128xi32> to vector<1x128xf32>
    %c0 = arith.constant 0 : index
    %c0_12 = arith.constant 0 : index
    %17 = vector.load %arg0[%c0, %c0_12] : memref<8x192xf32, #tpu.memory_space<vmem>>, vector<8x192xf32>
    %c0_13 = arith.constant 0 : index
    %c0_14 = arith.constant 0 : index
    %18 = vector.load %arg1[%c0_13, %c0_14] : memref<352x128xf32, #tpu.memory_space<vmem>>, vector<192x128xf32>
    %cst = arith.constant dense<0.000000e+00> : vector<8x128xf32>
    %19 = tpu.matmul %17, %18, %cst {dimension_numbers = #tpu.dot_dimension_numbers<[1], [0], [0], [1], [0, 0, 1, 1], [], []>} : vector<8x192xf32>, vector<192x128xf32>, vector<8x128xf32> -> vector<8x128xf32>
    %c347 = arith.constant 347 : index
    %c0_15 = arith.constant 0 : index
    %20 = vector.load %arg1[%c347, %c0_15] : memref<352x128xf32, #tpu.memory_space<vmem>>, vector<1x128xf32>
    %21 = vector.broadcast %20 : vector<1x128xf32> to vector<8x128xf32>
    %22 = arith.addf %19, %21 : vector<8x128xf32>
    %c332 = arith.constant 332 : index
    %c0_16 = arith.constant 0 : index
    %23 = vector.load %arg1[%c332, %c0_16] : memref<352x128xf32, #tpu.memory_space<vmem>>, vector<10x128xf32>
    %24 = vector.extract_strided_slice %23 {offsets = [0, 0], sizes = [10, 8], strides = [1, 1]} : vector<10x128xf32> to vector<10x8xf32>
    %cst_17 = arith.constant dense<0.000000e+00> : vector<10x128xf32>
    %25 = tpu.matmul %24, %22, %cst_17 {dimension_numbers = #tpu.dot_dimension_numbers<[1], [0], [0], [1], [0, 0, 1, 1], [], []>} : vector<10x8xf32>, vector<8x128xf32>, vector<10x128xf32> -> vector<10x128xf32>
    %c322 = arith.constant 322 : index
    %c0_18 = arith.constant 0 : index
    %26 = vector.load %arg1[%c322, %c0_18] : memref<352x128xf32, #tpu.memory_space<vmem>>, vector<10x128xf32>
    %27 = vector.extract_strided_slice %26 {offsets = [0, 0], sizes = [10, 5], strides = [1, 1]} : vector<10x128xf32> to vector<10x5xf32>
    %c342 = arith.constant 342 : index
    %c0_19 = arith.constant 0 : index
    %28 = vector.load %arg1[%c342, %c0_19] : memref<352x128xf32, #tpu.memory_space<vmem>>, vector<5x128xf32>
    %cst_20 = arith.constant dense<0.000000e+00> : vector<10x128xf32>
    %29 = tpu.matmul %27, %28, %cst_20 {dimension_numbers = #tpu.dot_dimension_numbers<[1], [0], [0], [1], [0, 0, 1, 1], [], []>} : vector<10x5xf32>, vector<5x128xf32>, vector<10x128xf32> -> vector<10x128xf32>
    %30 = arith.addf %25, %29 : vector<10x128xf32>
    %c272 = arith.constant 272 : index
    %c0_21 = arith.constant 0 : index
    %31 = vector.load %arg1[%c272, %c0_21] : memref<352x128xf32, #tpu.memory_space<vmem>>, vector<40x128xf32>
    %32 = vector.extract_strided_slice %31 {offsets = [0, 0], sizes = [40, 10], strides = [1, 1]} : vector<40x128xf32> to vector<40x10xf32>
    %c312 = arith.constant 312 : index
    %c0_22 = arith.constant 0 : index
    %33 = vector.load %arg1[%c312, %c0_22] : memref<352x128xf32, #tpu.memory_space<vmem>>, vector<10x128xf32>
    %34 = vector.extract_strided_slice %33 {offsets = [0, 0], sizes = [10, 40], strides = [1, 1]} : vector<10x128xf32> to vector<10x40xf32>
    %c192 = arith.constant 192 : index
    %c0_23 = arith.constant 0 : index
    %35 = vector.load %arg1[%c192, %c0_23] : memref<352x128xf32, #tpu.memory_space<vmem>>, vector<40x128xf32>
    %c232 = arith.constant 232 : index
    %c0_24 = arith.constant 0 : index
    %36 = vector.load %arg1[%c232, %c0_24] : memref<352x128xf32, #tpu.memory_space<vmem>>, vector<40x128xf32>
    %37 = vector.extract_strided_slice %36 {offsets = [0, 0], sizes = [40, 40], strides = [1, 1]} : vector<40x128xf32> to vector<40x40xf32>
    %c0_i32_25 = arith.constant 0 : i32
    %c0_i32_26 = arith.constant 0 : i32
    %c0_i32_27 = arith.constant 0 : i32
    %c0_i32_28 = arith.constant 0 : i32
    %c0_i32_29 = arith.constant 0 : i32
    %38 = tpu.memref_slice %arg2[%c0_i32_25, %c0_i32_28, %c0_i32_29] : memref<2x1040x128xf32, #tpu.memory_space<any>> -> memref<1x1040x128xf32, #tpu.memory_space<any>>
    %39 = tpu.memref_squeeze %38 : memref<1x1040x128xf32, #tpu.memory_space<any>> -> memref<1040x128xf32, #tpu.memory_space<any>>
    %c0_i32_30 = arith.constant 0 : i32
    %c0_i32_31 = arith.constant 0 : i32
    %40 = tpu.memref_slice %arg4[%c0_i32_26, %c0_i32_30, %c0_i32_31] : memref<2x1040x128xf32, #tpu.memory_space<vmem>> -> memref<1x1040x128xf32, #tpu.memory_space<vmem>>
    %41 = tpu.memref_squeeze %40 : memref<1x1040x128xf32, #tpu.memory_space<vmem>> -> memref<1040x128xf32, #tpu.memory_space<vmem>>
    %42 = tpu.memref_slice %arg5[%c0_i32_27] : memref<2x!tpu.dma_semaphore, #tpu.memory_space<semaphore_mem>> -> memref<1x!tpu.dma_semaphore, #tpu.memory_space<semaphore_mem>>
    %43 = tpu.memref_squeeze %42 : memref<1x!tpu.dma_semaphore, #tpu.memory_space<semaphore_mem>> -> memref<!tpu.dma_semaphore, #tpu.memory_space<semaphore_mem>>
    tpu.wait_dma2 semaphore(%43 : memref<!tpu.dma_semaphore, #tpu.memory_space<semaphore_mem>>) src(%39 : memref<1040x128xf32, #tpu.memory_space<any>>) dst(%41 : memref<1040x128xf32, #tpu.memory_space<vmem>>)
    %c0_32 = arith.constant 0 : index
    %c1024 = arith.constant 1024 : index
    %c0_33 = arith.constant 0 : index
    %44 = vector.load %arg4[%c0_32, %c1024, %c0_33] : memref<2x1040x128xf32, #tpu.memory_space<vmem>>, vector<1x1x128xf32>
    %45 = vector.shape_cast %44 : vector<1x1x128xf32> to vector<1x128xf32>
    %c0_34 = arith.constant 0 : index
    %c1025 = arith.constant 1025 : index
    %c0_35 = arith.constant 0 : index
    %46 = vector.load %arg4[%c0_34, %c1025, %c0_35] : memref<2x1040x128xf32, #tpu.memory_space<vmem>>, vector<1x1x128xf32>
    %47 = vector.shape_cast %46 : vector<1x1x128xf32> to vector<1x128xf32>
    %48 = vector.broadcast %16 : vector<1x128xf32> to vector<10x128xf32>
    %49 = arith.mulf %30, %48 : vector<10x128xf32>
    %cst_36 = arith.constant dense<0.000000e+00> : vector<10xf32>
    %50 = vector.multi_reduction <add>, %49, %cst_36 [1] : vector<10x128xf32> to vector<10xf32>
    %51 = vector.shape_cast %50 : vector<10xf32> to vector<10x1xf32>
    %cst_37 = arith.constant 1.562500e-02 : f32
    %52 = vector.broadcast %cst_37 : f32 to vector<10x1xf32>
    %53 = arith.mulf %51, %52 : vector<10x1xf32>
    %54 = vector.broadcast %53 : vector<10x1xf32> to vector<10x128xf32>
    %55 = arith.subf %30, %54 : vector<10x128xf32>
    %56 = vector.broadcast %16 : vector<1x128xf32> to vector<10x128xf32>
    %57 = arith.mulf %55, %56 : vector<10x128xf32>
    %58 = arith.mulf %57, %57 : vector<10x128xf32>
    %cst_38 = arith.constant dense<0.000000e+00> : vector<10xf32>
    %59 = vector.multi_reduction <add>, %58, %cst_38 [1] : vector<10x128xf32> to vector<10xf32>
    %60 = vector.shape_cast %59 : vector<10xf32> to vector<10x1xf32>
    %cst_39 = arith.constant 1.562500e-02 : f32
    %61 = vector.broadcast %cst_39 : f32 to vector<10x1xf32>
    %62 = arith.mulf %60, %61 : vector<10x1xf32>
    %cst_40 = arith.constant 9.99999997E-7 : f32
    %63 = vector.broadcast %cst_40 : f32 to vector<10x1xf32>
    %64 = arith.addf %62, %63 : vector<10x1xf32>
    %65 = math.rsqrt %64 : vector<10x1xf32>
    %66 = vector.broadcast %65 : vector<10x1xf32> to vector<10x128xf32>
    %67 = arith.mulf %57, %66 : vector<10x128xf32>
    %68 = vector.broadcast %45 : vector<1x128xf32> to vector<10x128xf32>
    %69 = arith.mulf %67, %68 : vector<10x128xf32>
    %70 = vector.broadcast %47 : vector<1x128xf32> to vector<10x128xf32>
    %71 = arith.addf %69, %70 : vector<10x128xf32>
    %c0_41 = arith.constant 0 : index
    %c0_42 = arith.constant 0 : index
    %c0_43 = arith.constant 0 : index
    %72 = vector.load %arg4[%c0_41, %c0_42, %c0_43] : memref<2x1040x128xf32, #tpu.memory_space<vmem>>, vector<1x128x128xf32>
    %73 = vector.shape_cast %72 : vector<1x128x128xf32> to vector<128x128xf32>
    %cst_44 = arith.constant dense<0.000000e+00> : vector<10x128xf32>
    %74 = tpu.matmul %71, %73, %cst_44 {dimension_numbers = #tpu.dot_dimension_numbers<[1], [0], [0], [1], [0, 0, 1, 1], [], []>} : vector<10x128xf32>, vector<128x128xf32>, vector<10x128xf32> -> vector<10x128xf32>
    %c0_45 = arith.constant 0 : index
    %c1026 = arith.constant 1026 : index
    %c0_46 = arith.constant 0 : index
    %75 = vector.load %arg4[%c0_45, %c1026, %c0_46] : memref<2x1040x128xf32, #tpu.memory_space<vmem>>, vector<1x1x128xf32>
    %76 = vector.shape_cast %75 : vector<1x1x128xf32> to vector<1x128xf32>
    %77 = vector.broadcast %76 : vector<1x128xf32> to vector<10x128xf32>
    %78 = arith.addf %74, %77 : vector<10x128xf32>
    %c0_47 = arith.constant 0 : index
    %c128 = arith.constant 128 : index
    %c0_48 = arith.constant 0 : index
    %79 = vector.load %arg4[%c0_47, %c128, %c0_48] : memref<2x1040x128xf32, #tpu.memory_space<vmem>>, vector<1x128x128xf32>
    %80 = vector.shape_cast %79 : vector<1x128x128xf32> to vector<128x128xf32>
    %cst_49 = arith.constant dense<0.000000e+00> : vector<10x128xf32>
    %81 = tpu.matmul %71, %80, %cst_49 {dimension_numbers = #tpu.dot_dimension_numbers<[1], [0], [0], [1], [0, 0, 1, 1], [], []>} : vector<10x128xf32>, vector<128x128xf32>, vector<10x128xf32> -> vector<10x128xf32>
    %c0_50 = arith.constant 0 : index
    %c1027 = arith.constant 1027 : index
    %c0_51 = arith.constant 0 : index
    %82 = vector.load %arg4[%c0_50, %c1027, %c0_51] : memref<2x1040x128xf32, #tpu.memory_space<vmem>>, vector<1x1x128xf32>
    %83 = vector.shape_cast %82 : vector<1x1x128xf32> to vector<1x128xf32>
    %84 = vector.broadcast %83 : vector<1x128xf32> to vector<10x128xf32>
    %85 = arith.addf %81, %84 : vector<10x128xf32>
    %c0_52 = arith.constant 0 : index
    %c256 = arith.constant 256 : index
    %c0_53 = arith.constant 0 : index
    %86 = vector.load %arg4[%c0_52, %c256, %c0_53] : memref<2x1040x128xf32, #tpu.memory_space<vmem>>, vector<1x128x128xf32>
    %87 = vector.shape_cast %86 : vector<1x128x128xf32> to vector<128x128xf32>
    %cst_54 = arith.constant dense<0.000000e+00> : vector<10x128xf32>
    %88 = tpu.matmul %71, %87, %cst_54 {dimension_numbers = #tpu.dot_dimension_numbers<[1], [0], [0], [1], [0, 0, 1, 1], [], []>} : vector<10x128xf32>, vector<128x128xf32>, vector<10x128xf32> -> vector<10x128xf32>
    %c0_55 = arith.constant 0 : index
    %c1028 = arith.constant 1028 : index
    %c0_56 = arith.constant 0 : index
    %89 = vector.load %arg4[%c0_55, %c1028, %c0_56] : memref<2x1040x128xf32, #tpu.memory_space<vmem>>, vector<1x1x128xf32>
    %90 = vector.shape_cast %89 : vector<1x1x128xf32> to vector<1x128xf32>
    %91 = vector.broadcast %90 : vector<1x128xf32> to vector<10x128xf32>
    %92 = arith.addf %88, %91 : vector<10x128xf32>
    %cst_57 = arith.constant dense<0.000000e+00> : vector<40x128xf32>
    %93 = tpu.matmul %32, %78, %cst_57 {dimension_numbers = #tpu.dot_dimension_numbers<[1], [0], [0], [1], [0, 0, 1, 1], [], []>} : vector<40x10xf32>, vector<10x128xf32>, vector<40x128xf32> -> vector<40x128xf32>
    %94 = arith.mulf %93, %35 : vector<40x128xf32>
    %cst_58 = arith.constant dense<0.000000e+00> : vector<40x128xf32>
    %95 = tpu.matmul %32, %85, %cst_58 {dimension_numbers = #tpu.dot_dimension_numbers<[1], [0], [0], [1], [0, 0, 1, 1], [], []>} : vector<40x10xf32>, vector<10x128xf32>, vector<40x128xf32> -> vector<40x128xf32>
    %cst_59 = arith.constant dense<0.000000e+00> : vector<40x128xf32>
    %96 = tpu.matmul %32, %92, %cst_59 {dimension_numbers = #tpu.dot_dimension_numbers<[1], [0], [0], [1], [0, 0, 1, 1], [], []>} : vector<40x10xf32>, vector<10x128xf32>, vector<40x128xf32> -> vector<40x128xf32>
    %97 = arith.mulf %96, %35 : vector<40x128xf32>
    %cst_60 = arith.constant dense<0.000000e+00> : vector<40x40xf32>
    %98 = tpu.matmul %94, %95, %cst_60 {dimension_numbers = #tpu.dot_dimension_numbers<[1], [1], [0], [0], [0, 0, 1, 0], [], []>} : vector<40x128xf32>, vector<40x128xf32>, vector<40x40xf32> -> vector<40x40xf32>
    %99 = arith.addf %98, %37 : vector<40x40xf32>
    %cst_61 = arith.constant dense<0xFF800000> : vector<40xf32>
    %100 = vector.multi_reduction <maximumf>, %99, %cst_61 [1] : vector<40x40xf32> to vector<40xf32>
    %101 = vector.shape_cast %100 : vector<40xf32> to vector<40x1xf32>
    %102 = vector.broadcast %101 : vector<40x1xf32> to vector<40x40xf32>
    %103 = arith.subf %99, %102 : vector<40x40xf32>
    %104 = math.exp %103 : vector<40x40xf32>
    %cst_62 = arith.constant dense<0.000000e+00> : vector<40xf32>
    %105 = vector.multi_reduction <add>, %104, %cst_62 [1] : vector<40x40xf32> to vector<40xf32>
    %106 = vector.shape_cast %105 : vector<40xf32> to vector<40x1xf32>
    %107 = tpu.reciprocal %106 {approx = true} : vector<40x1xf32> -> vector<40x1xf32>
    %108 = vector.broadcast %107 : vector<40x1xf32> to vector<40x40xf32>
    %109 = arith.mulf %104, %108 : vector<40x40xf32>
    %cst_63 = arith.constant dense<0.000000e+00> : vector<40x128xf32>
    %110 = tpu.matmul %109, %97, %cst_63 {dimension_numbers = #tpu.dot_dimension_numbers<[1], [0], [0], [1], [0, 0, 1, 1], [], []>} : vector<40x40xf32>, vector<40x128xf32>, vector<40x128xf32> -> vector<40x128xf32>
    %cst_64 = arith.constant dense<0.000000e+00> : vector<10x128xf32>
    %111 = tpu.matmul %34, %110, %cst_64 {dimension_numbers = #tpu.dot_dimension_numbers<[1], [0], [0], [1], [0, 0, 1, 1], [], []>} : vector<10x40xf32>, vector<40x128xf32>, vector<10x128xf32> -> vector<10x128xf32>
    %c0_65 = arith.constant 0 : index
    %c384 = arith.constant 384 : index
    %c0_66 = arith.constant 0 : index
    %112 = vector.load %arg4[%c0_65, %c384, %c0_66] : memref<2x1040x128xf32, #tpu.memory_space<vmem>>, vector<1x128x128xf32>
    %113 = vector.shape_cast %112 : vector<1x128x128xf32> to vector<128x128xf32>
    %cst_67 = arith.constant dense<0.000000e+00> : vector<10x128xf32>
    %114 = tpu.matmul %111, %113, %cst_67 {dimension_numbers = #tpu.dot_dimension_numbers<[1], [0], [0], [1], [0, 0, 1, 1], [], []>} : vector<10x128xf32>, vector<128x128xf32>, vector<10x128xf32> -> vector<10x128xf32>
    %c0_68 = arith.constant 0 : index
    %c1029 = arith.constant 1029 : index
    %c0_69 = arith.constant 0 : index
    %115 = vector.load %arg4[%c0_68, %c1029, %c0_69] : memref<2x1040x128xf32, #tpu.memory_space<vmem>>, vector<1x1x128xf32>
    %116 = vector.shape_cast %115 : vector<1x1x128xf32> to vector<1x128xf32>
    %117 = vector.broadcast %116 : vector<1x128xf32> to vector<10x128xf32>
    %118 = arith.addf %114, %117 : vector<10x128xf32>
    %c0_70 = arith.constant 0 : index
    %c1030 = arith.constant 1030 : index
    %c0_71 = arith.constant 0 : index
    %119 = vector.load %arg4[%c0_70, %c1030, %c0_71] : memref<2x1040x128xf32, #tpu.memory_space<vmem>>, vector<1x1x128xf32>
    %120 = vector.shape_cast %119 : vector<1x1x128xf32> to vector<1x128xf32>
    %121 = vector.broadcast %120 : vector<1x128xf32> to vector<10x128xf32>
    %122 = arith.mulf %121, %118 : vector<10x128xf32>
    %123 = arith.addf %30, %122 : vector<10x128xf32>
    %c0_72 = arith.constant 0 : index
    %c1031 = arith.constant 1031 : index
    %c0_73 = arith.constant 0 : index
    %124 = vector.load %arg4[%c0_72, %c1031, %c0_73] : memref<2x1040x128xf32, #tpu.memory_space<vmem>>, vector<1x1x128xf32>
    %125 = vector.shape_cast %124 : vector<1x1x128xf32> to vector<1x128xf32>
    %c0_74 = arith.constant 0 : index
    %c1032 = arith.constant 1032 : index
    %c0_75 = arith.constant 0 : index
    %126 = vector.load %arg4[%c0_74, %c1032, %c0_75] : memref<2x1040x128xf32, #tpu.memory_space<vmem>>, vector<1x1x128xf32>
    %127 = vector.shape_cast %126 : vector<1x1x128xf32> to vector<1x128xf32>
    %128 = vector.broadcast %16 : vector<1x128xf32> to vector<10x128xf32>
    %129 = arith.mulf %123, %128 : vector<10x128xf32>
    %cst_76 = arith.constant dense<0.000000e+00> : vector<10xf32>
    %130 = vector.multi_reduction <add>, %129, %cst_76 [1] : vector<10x128xf32> to vector<10xf32>
    %131 = vector.shape_cast %130 : vector<10xf32> to vector<10x1xf32>
    %cst_77 = arith.constant 1.562500e-02 : f32
    %132 = vector.broadcast %cst_77 : f32 to vector<10x1xf32>
    %133 = arith.mulf %131, %132 : vector<10x1xf32>
    %134 = vector.broadcast %133 : vector<10x1xf32> to vector<10x128xf32>
    %135 = arith.subf %123, %134 : vector<10x128xf32>
    %136 = vector.broadcast %16 : vector<1x128xf32> to vector<10x128xf32>
    %137 = arith.mulf %135, %136 : vector<10x128xf32>
    %138 = arith.mulf %137, %137 : vector<10x128xf32>
    %cst_78 = arith.constant dense<0.000000e+00> : vector<10xf32>
    %139 = vector.multi_reduction <add>, %138, %cst_78 [1] : vector<10x128xf32> to vector<10xf32>
    %140 = vector.shape_cast %139 : vector<10xf32> to vector<10x1xf32>
    %cst_79 = arith.constant 1.562500e-02 : f32
    %141 = vector.broadcast %cst_79 : f32 to vector<10x1xf32>
    %142 = arith.mulf %140, %141 : vector<10x1xf32>
    %cst_80 = arith.constant 9.99999997E-7 : f32
    %143 = vector.broadcast %cst_80 : f32 to vector<10x1xf32>
    %144 = arith.addf %142, %143 : vector<10x1xf32>
    %145 = math.rsqrt %144 : vector<10x1xf32>
    %146 = vector.broadcast %145 : vector<10x1xf32> to vector<10x128xf32>
    %147 = arith.mulf %137, %146 : vector<10x128xf32>
    %148 = vector.broadcast %125 : vector<1x128xf32> to vector<10x128xf32>
    %149 = arith.mulf %147, %148 : vector<10x128xf32>
    %150 = vector.broadcast %127 : vector<1x128xf32> to vector<10x128xf32>
    %151 = arith.addf %149, %150 : vector<10x128xf32>
    %c0_81 = arith.constant 0 : index
    %c512 = arith.constant 512 : index
    %c0_82 = arith.constant 0 : index
    %152 = vector.load %arg4[%c0_81, %c512, %c0_82] : memref<2x1040x128xf32, #tpu.memory_space<vmem>>, vector<1x128x128xf32>
    %153 = vector.shape_cast %152 : vector<1x128x128xf32> to vector<128x128xf32>
    %cst_83 = arith.constant dense<0.000000e+00> : vector<10x128xf32>
    %154 = tpu.matmul %151, %153, %cst_83 {dimension_numbers = #tpu.dot_dimension_numbers<[1], [0], [0], [1], [0, 0, 1, 1], [], []>} : vector<10x128xf32>, vector<128x128xf32>, vector<10x128xf32> -> vector<10x128xf32>
    %c0_84 = arith.constant 0 : index
    %c1033 = arith.constant 1033 : index
    %c0_85 = arith.constant 0 : index
    %155 = vector.load %arg4[%c0_84, %c1033, %c0_85] : memref<2x1040x128xf32, #tpu.memory_space<vmem>>, vector<1x1x128xf32>
    %156 = vector.shape_cast %155 : vector<1x1x128xf32> to vector<1x128xf32>
    %157 = vector.broadcast %156 : vector<1x128xf32> to vector<10x128xf32>
    %158 = arith.addf %154, %157 : vector<10x128xf32>
    %cst_86 = arith.constant 5.000000e-01 : f32
    %159 = vector.broadcast %cst_86 : f32 to vector<10x128xf32>
    %160 = arith.mulf %159, %158 : vector<10x128xf32>
    %161 = arith.mulf %158, %158 : vector<10x128xf32>
    %162 = arith.mulf %161, %158 : vector<10x128xf32>
    %cst_87 = arith.constant 4.471500e-02 : f32
    %163 = vector.broadcast %cst_87 : f32 to vector<10x128xf32>
    %164 = arith.mulf %163, %162 : vector<10x128xf32>
    %165 = arith.addf %158, %164 : vector<10x128xf32>
    %cst_88 = arith.constant 0.797884583 : f32
    %166 = vector.broadcast %cst_88 : f32 to vector<10x128xf32>
    %167 = arith.mulf %166, %165 : vector<10x128xf32>
    %168 = math.tanh %167 : vector<10x128xf32>
    %cst_89 = arith.constant 1.000000e+00 : f32
    %169 = vector.broadcast %cst_89 : f32 to vector<10x128xf32>
    %170 = arith.addf %169, %168 : vector<10x128xf32>
    %171 = arith.mulf %160, %170 : vector<10x128xf32>
    %c0_90 = arith.constant 0 : index
    %c640 = arith.constant 640 : index
    %c0_91 = arith.constant 0 : index
    %172 = vector.load %arg4[%c0_90, %c640, %c0_91] : memref<2x1040x128xf32, #tpu.memory_space<vmem>>, vector<1x128x128xf32>
    %173 = vector.shape_cast %172 : vector<1x128x128xf32> to vector<128x128xf32>
    %cst_92 = arith.constant dense<0.000000e+00> : vector<10x128xf32>
    %174 = tpu.matmul %151, %173, %cst_92 {dimension_numbers = #tpu.dot_dimension_numbers<[1], [0], [0], [1], [0, 0, 1, 1], [], []>} : vector<10x128xf32>, vector<128x128xf32>, vector<10x128xf32> -> vector<10x128xf32>
    %c0_93 = arith.constant 0 : index
    %c1034 = arith.constant 1034 : index
    %c0_94 = arith.constant 0 : index
    %175 = vector.load %arg4[%c0_93, %c1034, %c0_94] : memref<2x1040x128xf32, #tpu.memory_space<vmem>>, vector<1x1x128xf32>
    %176 = vector.shape_cast %175 : vector<1x1x128xf32> to vector<1x128xf32>
    %177 = vector.broadcast %176 : vector<1x128xf32> to vector<10x128xf32>
    %178 = arith.addf %174, %177 : vector<10x128xf32>
    %cst_95 = arith.constant 5.000000e-01 : f32
    %179 = vector.broadcast %cst_95 : f32 to vector<10x128xf32>
    %180 = arith.mulf %179, %178 : vector<10x128xf32>
    %181 = arith.mulf %178, %178 : vector<10x128xf32>
    %182 = arith.mulf %181, %178 : vector<10x128xf32>
    %cst_96 = arith.constant 4.471500e-02 : f32
    %183 = vector.broadcast %cst_96 : f32 to vector<10x128xf32>
    %184 = arith.mulf %183, %182 : vector<10x128xf32>
    %185 = arith.addf %178, %184 : vector<10x128xf32>
    %cst_97 = arith.constant 0.797884583 : f32
    %186 = vector.broadcast %cst_97 : f32 to vector<10x128xf32>
    %187 = arith.mulf %186, %185 : vector<10x128xf32>
    %188 = math.tanh %187 : vector<10x128xf32>
    %cst_98 = arith.constant 1.000000e+00 : f32
    %189 = vector.broadcast %cst_98 : f32 to vector<10x128xf32>
    %190 = arith.addf %189, %188 : vector<10x128xf32>
    %191 = arith.mulf %180, %190 : vector<10x128xf32>
    %c0_99 = arith.constant 0 : index
    %c768 = arith.constant 768 : index
    %c0_100 = arith.constant 0 : index
    %192 = vector.load %arg4[%c0_99, %c768, %c0_100] : memref<2x1040x128xf32, #tpu.memory_space<vmem>>, vector<1x128x128xf32>
    %193 = vector.shape_cast %192 : vector<1x128x128xf32> to vector<128x128xf32>
    %cst_101 = arith.constant dense<0.000000e+00> : vector<10x128xf32>
    %194 = tpu.matmul %171, %193, %cst_101 {dimension_numbers = #tpu.dot_dimension_numbers<[1], [0], [0], [1], [0, 0, 1, 1], [], []>} : vector<10x128xf32>, vector<128x128xf32>, vector<10x128xf32> -> vector<10x128xf32>
    %c0_102 = arith.constant 0 : index
    %c896 = arith.constant 896 : index
    %c0_103 = arith.constant 0 : index
    %195 = vector.load %arg4[%c0_102, %c896, %c0_103] : memref<2x1040x128xf32, #tpu.memory_space<vmem>>, vector<1x128x128xf32>
    %196 = vector.shape_cast %195 : vector<1x128x128xf32> to vector<128x128xf32>
    %cst_104 = arith.constant dense<0.000000e+00> : vector<10x128xf32>
    %197 = tpu.matmul %191, %196, %cst_104 {dimension_numbers = #tpu.dot_dimension_numbers<[1], [0], [0], [1], [0, 0, 1, 1], [], []>} : vector<10x128xf32>, vector<128x128xf32>, vector<10x128xf32> -> vector<10x128xf32>
    %198 = arith.addf %194, %197 : vector<10x128xf32>
    %c0_105 = arith.constant 0 : index
    %c1035 = arith.constant 1035 : index
    %c0_106 = arith.constant 0 : index
    %199 = vector.load %arg4[%c0_105, %c1035, %c0_106] : memref<2x1040x128xf32, #tpu.memory_space<vmem>>, vector<1x1x128xf32>
    %200 = vector.shape_cast %199 : vector<1x1x128xf32> to vector<1x128xf32>
    %201 = vector.broadcast %200 : vector<1x128xf32> to vector<10x128xf32>
    %202 = arith.addf %198, %201 : vector<10x128xf32>
    %c0_107 = arith.constant 0 : index
    %c1036 = arith.constant 1036 : index
    %c0_108 = arith.constant 0 : index
    %203 = vector.load %arg4[%c0_107, %c1036, %c0_108] : memref<2x1040x128xf32, #tpu.memory_space<vmem>>, vector<1x1x128xf32>
    %204 = vector.shape_cast %203 : vector<1x1x128xf32> to vector<1x128xf32>
    %205 = vector.broadcast %204 : vector<1x128xf32> to vector<10x128xf32>
    %206 = arith.mulf %205, %202 : vector<10x128xf32>
    %207 = arith.addf %123, %206 : vector<10x128xf32>
    %c1_i32_109 = arith.constant 1 : i32
    %c1_i32_110 = arith.constant 1 : i32
    %c1_i32_111 = arith.constant 1 : i32
    %c0_i32_112 = arith.constant 0 : i32
    %c0_i32_113 = arith.constant 0 : i32
    %208 = tpu.memref_slice %arg2[%c1_i32_109, %c0_i32_112, %c0_i32_113] : memref<2x1040x128xf32, #tpu.memory_space<any>> -> memref<1x1040x128xf32, #tpu.memory_space<any>>
    %209 = tpu.memref_squeeze %208 : memref<1x1040x128xf32, #tpu.memory_space<any>> -> memref<1040x128xf32, #tpu.memory_space<any>>
    %c0_i32_114 = arith.constant 0 : i32
    %c0_i32_115 = arith.constant 0 : i32
    %210 = tpu.memref_slice %arg4[%c1_i32_110, %c0_i32_114, %c0_i32_115] : memref<2x1040x128xf32, #tpu.memory_space<vmem>> -> memref<1x1040x128xf32, #tpu.memory_space<vmem>>
    %211 = tpu.memref_squeeze %210 : memref<1x1040x128xf32, #tpu.memory_space<vmem>> -> memref<1040x128xf32, #tpu.memory_space<vmem>>
    %212 = tpu.memref_slice %arg5[%c1_i32_111] : memref<2x!tpu.dma_semaphore, #tpu.memory_space<semaphore_mem>> -> memref<1x!tpu.dma_semaphore, #tpu.memory_space<semaphore_mem>>
    %213 = tpu.memref_squeeze %212 : memref<1x!tpu.dma_semaphore, #tpu.memory_space<semaphore_mem>> -> memref<!tpu.dma_semaphore, #tpu.memory_space<semaphore_mem>>
    tpu.wait_dma2 semaphore(%213 : memref<!tpu.dma_semaphore, #tpu.memory_space<semaphore_mem>>) src(%209 : memref<1040x128xf32, #tpu.memory_space<any>>) dst(%211 : memref<1040x128xf32, #tpu.memory_space<vmem>>)
    %c1 = arith.constant 1 : index
    %c1024_116 = arith.constant 1024 : index
    %c0_117 = arith.constant 0 : index
    %214 = vector.load %arg4[%c1, %c1024_116, %c0_117] : memref<2x1040x128xf32, #tpu.memory_space<vmem>>, vector<1x1x128xf32>
    %215 = vector.shape_cast %214 : vector<1x1x128xf32> to vector<1x128xf32>
    %c1_118 = arith.constant 1 : index
    %c1025_119 = arith.constant 1025 : index
    %c0_120 = arith.constant 0 : index
    %216 = vector.load %arg4[%c1_118, %c1025_119, %c0_120] : memref<2x1040x128xf32, #tpu.memory_space<vmem>>, vector<1x1x128xf32>
    %217 = vector.shape_cast %216 : vector<1x1x128xf32> to vector<1x128xf32>
    %218 = vector.broadcast %16 : vector<1x128xf32> to vector<10x128xf32>
    %219 = arith.mulf %207, %218 : vector<10x128xf32>
    %cst_121 = arith.constant dense<0.000000e+00> : vector<10xf32>
    %220 = vector.multi_reduction <add>, %219, %cst_121 [1] : vector<10x128xf32> to vector<10xf32>
    %221 = vector.shape_cast %220 : vector<10xf32> to vector<10x1xf32>
    %cst_122 = arith.constant 1.562500e-02 : f32
    %222 = vector.broadcast %cst_122 : f32 to vector<10x1xf32>
    %223 = arith.mulf %221, %222 : vector<10x1xf32>
    %224 = vector.broadcast %223 : vector<10x1xf32> to vector<10x128xf32>
    %225 = arith.subf %207, %224 : vector<10x128xf32>
    %226 = vector.broadcast %16 : vector<1x128xf32> to vector<10x128xf32>
    %227 = arith.mulf %225, %226 : vector<10x128xf32>
    %228 = arith.mulf %227, %227 : vector<10x128xf32>
    %cst_123 = arith.constant dense<0.000000e+00> : vector<10xf32>
    %229 = vector.multi_reduction <add>, %228, %cst_123 [1] : vector<10x128xf32> to vector<10xf32>
    %230 = vector.shape_cast %229 : vector<10xf32> to vector<10x1xf32>
    %cst_124 = arith.constant 1.562500e-02 : f32
    %231 = vector.broadcast %cst_124 : f32 to vector<10x1xf32>
    %232 = arith.mulf %230, %231 : vector<10x1xf32>
    %cst_125 = arith.constant 9.99999997E-7 : f32
    %233 = vector.broadcast %cst_125 : f32 to vector<10x1xf32>
    %234 = arith.addf %232, %233 : vector<10x1xf32>
    %235 = math.rsqrt %234 : vector<10x1xf32>
    %236 = vector.broadcast %235 : vector<10x1xf32> to vector<10x128xf32>
    %237 = arith.mulf %227, %236 : vector<10x128xf32>
    %238 = vector.broadcast %215 : vector<1x128xf32> to vector<10x128xf32>
    %239 = arith.mulf %237, %238 : vector<10x128xf32>
    %240 = vector.broadcast %217 : vector<1x128xf32> to vector<10x128xf32>
    %241 = arith.addf %239, %240 : vector<10x128xf32>
    %c1_126 = arith.constant 1 : index
    %c0_127 = arith.constant 0 : index
    %c0_128 = arith.constant 0 : index
    %242 = vector.load %arg4[%c1_126, %c0_127, %c0_128] : memref<2x1040x128xf32, #tpu.memory_space<vmem>>, vector<1x128x128xf32>
    %243 = vector.shape_cast %242 : vector<1x128x128xf32> to vector<128x128xf32>
    %cst_129 = arith.constant dense<0.000000e+00> : vector<10x128xf32>
    %244 = tpu.matmul %241, %243, %cst_129 {dimension_numbers = #tpu.dot_dimension_numbers<[1], [0], [0], [1], [0, 0, 1, 1], [], []>} : vector<10x128xf32>, vector<128x128xf32>, vector<10x128xf32> -> vector<10x128xf32>
    %c1_130 = arith.constant 1 : index
    %c1026_131 = arith.constant 1026 : index
    %c0_132 = arith.constant 0 : index
    %245 = vector.load %arg4[%c1_130, %c1026_131, %c0_132] : memref<2x1040x128xf32, #tpu.memory_space<vmem>>, vector<1x1x128xf32>
    %246 = vector.shape_cast %245 : vector<1x1x128xf32> to vector<1x128xf32>
    %247 = vector.broadcast %246 : vector<1x128xf32> to vector<10x128xf32>
    %248 = arith.addf %244, %247 : vector<10x128xf32>
    %c1_133 = arith.constant 1 : index
    %c128_134 = arith.constant 128 : index
    %c0_135 = arith.constant 0 : index
    %249 = vector.load %arg4[%c1_133, %c128_134, %c0_135] : memref<2x1040x128xf32, #tpu.memory_space<vmem>>, vector<1x128x128xf32>
    %250 = vector.shape_cast %249 : vector<1x128x128xf32> to vector<128x128xf32>
    %cst_136 = arith.constant dense<0.000000e+00> : vector<10x128xf32>
    %251 = tpu.matmul %241, %250, %cst_136 {dimension_numbers = #tpu.dot_dimension_numbers<[1], [0], [0], [1], [0, 0, 1, 1], [], []>} : vector<10x128xf32>, vector<128x128xf32>, vector<10x128xf32> -> vector<10x128xf32>
    %c1_137 = arith.constant 1 : index
    %c1027_138 = arith.constant 1027 : index
    %c0_139 = arith.constant 0 : index
    %252 = vector.load %arg4[%c1_137, %c1027_138, %c0_139] : memref<2x1040x128xf32, #tpu.memory_space<vmem>>, vector<1x1x128xf32>
    %253 = vector.shape_cast %252 : vector<1x1x128xf32> to vector<1x128xf32>
    %254 = vector.broadcast %253 : vector<1x128xf32> to vector<10x128xf32>
    %255 = arith.addf %251, %254 : vector<10x128xf32>
    %c1_140 = arith.constant 1 : index
    %c256_141 = arith.constant 256 : index
    %c0_142 = arith.constant 0 : index
    %256 = vector.load %arg4[%c1_140, %c256_141, %c0_142] : memref<2x1040x128xf32, #tpu.memory_space<vmem>>, vector<1x128x128xf32>
    %257 = vector.shape_cast %256 : vector<1x128x128xf32> to vector<128x128xf32>
    %cst_143 = arith.constant dense<0.000000e+00> : vector<10x128xf32>
    %258 = tpu.matmul %241, %257, %cst_143 {dimension_numbers = #tpu.dot_dimension_numbers<[1], [0], [0], [1], [0, 0, 1, 1], [], []>} : vector<10x128xf32>, vector<128x128xf32>, vector<10x128xf32> -> vector<10x128xf32>
    %c1_144 = arith.constant 1 : index
    %c1028_145 = arith.constant 1028 : index
    %c0_146 = arith.constant 0 : index
    %259 = vector.load %arg4[%c1_144, %c1028_145, %c0_146] : memref<2x1040x128xf32, #tpu.memory_space<vmem>>, vector<1x1x128xf32>
    %260 = vector.shape_cast %259 : vector<1x1x128xf32> to vector<1x128xf32>
    %261 = vector.broadcast %260 : vector<1x128xf32> to vector<10x128xf32>
    %262 = arith.addf %258, %261 : vector<10x128xf32>
    %cst_147 = arith.constant dense<0.000000e+00> : vector<40x128xf32>
    %263 = tpu.matmul %32, %248, %cst_147 {dimension_numbers = #tpu.dot_dimension_numbers<[1], [0], [0], [1], [0, 0, 1, 1], [], []>} : vector<40x10xf32>, vector<10x128xf32>, vector<40x128xf32> -> vector<40x128xf32>
    %264 = arith.mulf %263, %35 : vector<40x128xf32>
    %cst_148 = arith.constant dense<0.000000e+00> : vector<40x128xf32>
    %265 = tpu.matmul %32, %255, %cst_148 {dimension_numbers = #tpu.dot_dimension_numbers<[1], [0], [0], [1], [0, 0, 1, 1], [], []>} : vector<40x10xf32>, vector<10x128xf32>, vector<40x128xf32> -> vector<40x128xf32>
    %cst_149 = arith.constant dense<0.000000e+00> : vector<40x128xf32>
    %266 = tpu.matmul %32, %262, %cst_149 {dimension_numbers = #tpu.dot_dimension_numbers<[1], [0], [0], [1], [0, 0, 1, 1], [], []>} : vector<40x10xf32>, vector<10x128xf32>, vector<40x128xf32> -> vector<40x128xf32>
    %267 = arith.mulf %266, %35 : vector<40x128xf32>
    %cst_150 = arith.constant dense<0.000000e+00> : vector<40x40xf32>
    %268 = tpu.matmul %264, %265, %cst_150 {dimension_numbers = #tpu.dot_dimension_numbers<[1], [1], [0], [0], [0, 0, 1, 0], [], []>} : vector<40x128xf32>, vector<40x128xf32>, vector<40x40xf32> -> vector<40x40xf32>
    %269 = arith.addf %268, %37 : vector<40x40xf32>
    %cst_151 = arith.constant dense<0xFF800000> : vector<40xf32>
    %270 = vector.multi_reduction <maximumf>, %269, %cst_151 [1] : vector<40x40xf32> to vector<40xf32>
    %271 = vector.shape_cast %270 : vector<40xf32> to vector<40x1xf32>
    %272 = vector.broadcast %271 : vector<40x1xf32> to vector<40x40xf32>
    %273 = arith.subf %269, %272 : vector<40x40xf32>
    %274 = math.exp %273 : vector<40x40xf32>
    %cst_152 = arith.constant dense<0.000000e+00> : vector<40xf32>
    %275 = vector.multi_reduction <add>, %274, %cst_152 [1] : vector<40x40xf32> to vector<40xf32>
    %276 = vector.shape_cast %275 : vector<40xf32> to vector<40x1xf32>
    %277 = tpu.reciprocal %276 {approx = true} : vector<40x1xf32> -> vector<40x1xf32>
    %278 = vector.broadcast %277 : vector<40x1xf32> to vector<40x40xf32>
    %279 = arith.mulf %274, %278 : vector<40x40xf32>
    %cst_153 = arith.constant dense<0.000000e+00> : vector<40x128xf32>
    %280 = tpu.matmul %279, %267, %cst_153 {dimension_numbers = #tpu.dot_dimension_numbers<[1], [0], [0], [1], [0, 0, 1, 1], [], []>} : vector<40x40xf32>, vector<40x128xf32>, vector<40x128xf32> -> vector<40x128xf32>
    %cst_154 = arith.constant dense<0.000000e+00> : vector<10x128xf32>
    %281 = tpu.matmul %34, %280, %cst_154 {dimension_numbers = #tpu.dot_dimension_numbers<[1], [0], [0], [1], [0, 0, 1, 1], [], []>} : vector<10x40xf32>, vector<40x128xf32>, vector<10x128xf32> -> vector<10x128xf32>
    %c1_155 = arith.constant 1 : index
    %c384_156 = arith.constant 384 : index
    %c0_157 = arith.constant 0 : index
    %282 = vector.load %arg4[%c1_155, %c384_156, %c0_157] : memref<2x1040x128xf32, #tpu.memory_space<vmem>>, vector<1x128x128xf32>
    %283 = vector.shape_cast %282 : vector<1x128x128xf32> to vector<128x128xf32>
    %cst_158 = arith.constant dense<0.000000e+00> : vector<10x128xf32>
    %284 = tpu.matmul %281, %283, %cst_158 {dimension_numbers = #tpu.dot_dimension_numbers<[1], [0], [0], [1], [0, 0, 1, 1], [], []>} : vector<10x128xf32>, vector<128x128xf32>, vector<10x128xf32> -> vector<10x128xf32>
    %c1_159 = arith.constant 1 : index
    %c1029_160 = arith.constant 1029 : index
    %c0_161 = arith.constant 0 : index
    %285 = vector.load %arg4[%c1_159, %c1029_160, %c0_161] : memref<2x1040x128xf32, #tpu.memory_space<vmem>>, vector<1x1x128xf32>
    %286 = vector.shape_cast %285 : vector<1x1x128xf32> to vector<1x128xf32>
    %287 = vector.broadcast %286 : vector<1x128xf32> to vector<10x128xf32>
    %288 = arith.addf %284, %287 : vector<10x128xf32>
    %c1_162 = arith.constant 1 : index
    %c1030_163 = arith.constant 1030 : index
    %c0_164 = arith.constant 0 : index
    %289 = vector.load %arg4[%c1_162, %c1030_163, %c0_164] : memref<2x1040x128xf32, #tpu.memory_space<vmem>>, vector<1x1x128xf32>
    %290 = vector.shape_cast %289 : vector<1x1x128xf32> to vector<1x128xf32>
    %291 = vector.broadcast %290 : vector<1x128xf32> to vector<10x128xf32>
    %292 = arith.mulf %291, %288 : vector<10x128xf32>
    %293 = arith.addf %207, %292 : vector<10x128xf32>
    %c1_165 = arith.constant 1 : index
    %c1031_166 = arith.constant 1031 : index
    %c0_167 = arith.constant 0 : index
    %294 = vector.load %arg4[%c1_165, %c1031_166, %c0_167] : memref<2x1040x128xf32, #tpu.memory_space<vmem>>, vector<1x1x128xf32>
    %295 = vector.shape_cast %294 : vector<1x1x128xf32> to vector<1x128xf32>
    %c1_168 = arith.constant 1 : index
    %c1032_169 = arith.constant 1032 : index
    %c0_170 = arith.constant 0 : index
    %296 = vector.load %arg4[%c1_168, %c1032_169, %c0_170] : memref<2x1040x128xf32, #tpu.memory_space<vmem>>, vector<1x1x128xf32>
    %297 = vector.shape_cast %296 : vector<1x1x128xf32> to vector<1x128xf32>
    %298 = vector.broadcast %16 : vector<1x128xf32> to vector<10x128xf32>
    %299 = arith.mulf %293, %298 : vector<10x128xf32>
    %cst_171 = arith.constant dense<0.000000e+00> : vector<10xf32>
    %300 = vector.multi_reduction <add>, %299, %cst_171 [1] : vector<10x128xf32> to vector<10xf32>
    %301 = vector.shape_cast %300 : vector<10xf32> to vector<10x1xf32>
    %cst_172 = arith.constant 1.562500e-02 : f32
    %302 = vector.broadcast %cst_172 : f32 to vector<10x1xf32>
    %303 = arith.mulf %301, %302 : vector<10x1xf32>
    %304 = vector.broadcast %303 : vector<10x1xf32> to vector<10x128xf32>
    %305 = arith.subf %293, %304 : vector<10x128xf32>
    %306 = vector.broadcast %16 : vector<1x128xf32> to vector<10x128xf32>
    %307 = arith.mulf %305, %306 : vector<10x128xf32>
    %308 = arith.mulf %307, %307 : vector<10x128xf32>
    %cst_173 = arith.constant dense<0.000000e+00> : vector<10xf32>
    %309 = vector.multi_reduction <add>, %308, %cst_173 [1] : vector<10x128xf32> to vector<10xf32>
    %310 = vector.shape_cast %309 : vector<10xf32> to vector<10x1xf32>
    %cst_174 = arith.constant 1.562500e-02 : f32
    %311 = vector.broadcast %cst_174 : f32 to vector<10x1xf32>
    %312 = arith.mulf %310, %311 : vector<10x1xf32>
    %cst_175 = arith.constant 9.99999997E-7 : f32
    %313 = vector.broadcast %cst_175 : f32 to vector<10x1xf32>
    %314 = arith.addf %312, %313 : vector<10x1xf32>
    %315 = math.rsqrt %314 : vector<10x1xf32>
    %316 = vector.broadcast %315 : vector<10x1xf32> to vector<10x128xf32>
    %317 = arith.mulf %307, %316 : vector<10x128xf32>
    %318 = vector.broadcast %295 : vector<1x128xf32> to vector<10x128xf32>
    %319 = arith.mulf %317, %318 : vector<10x128xf32>
    %320 = vector.broadcast %297 : vector<1x128xf32> to vector<10x128xf32>
    %321 = arith.addf %319, %320 : vector<10x128xf32>
    %c1_176 = arith.constant 1 : index
    %c512_177 = arith.constant 512 : index
    %c0_178 = arith.constant 0 : index
    %322 = vector.load %arg4[%c1_176, %c512_177, %c0_178] : memref<2x1040x128xf32, #tpu.memory_space<vmem>>, vector<1x128x128xf32>
    %323 = vector.shape_cast %322 : vector<1x128x128xf32> to vector<128x128xf32>
    %cst_179 = arith.constant dense<0.000000e+00> : vector<10x128xf32>
    %324 = tpu.matmul %321, %323, %cst_179 {dimension_numbers = #tpu.dot_dimension_numbers<[1], [0], [0], [1], [0, 0, 1, 1], [], []>} : vector<10x128xf32>, vector<128x128xf32>, vector<10x128xf32> -> vector<10x128xf32>
    %c1_180 = arith.constant 1 : index
    %c1033_181 = arith.constant 1033 : index
    %c0_182 = arith.constant 0 : index
    %325 = vector.load %arg4[%c1_180, %c1033_181, %c0_182] : memref<2x1040x128xf32, #tpu.memory_space<vmem>>, vector<1x1x128xf32>
    %326 = vector.shape_cast %325 : vector<1x1x128xf32> to vector<1x128xf32>
    %327 = vector.broadcast %326 : vector<1x128xf32> to vector<10x128xf32>
    %328 = arith.addf %324, %327 : vector<10x128xf32>
    %cst_183 = arith.constant 5.000000e-01 : f32
    %329 = vector.broadcast %cst_183 : f32 to vector<10x128xf32>
    %330 = arith.mulf %329, %328 : vector<10x128xf32>
    %331 = arith.mulf %328, %328 : vector<10x128xf32>
    %332 = arith.mulf %331, %328 : vector<10x128xf32>
    %cst_184 = arith.constant 4.471500e-02 : f32
    %333 = vector.broadcast %cst_184 : f32 to vector<10x128xf32>
    %334 = arith.mulf %333, %332 : vector<10x128xf32>
    %335 = arith.addf %328, %334 : vector<10x128xf32>
    %cst_185 = arith.constant 0.797884583 : f32
    %336 = vector.broadcast %cst_185 : f32 to vector<10x128xf32>
    %337 = arith.mulf %336, %335 : vector<10x128xf32>
    %338 = math.tanh %337 : vector<10x128xf32>
    %cst_186 = arith.constant 1.000000e+00 : f32
    %339 = vector.broadcast %cst_186 : f32 to vector<10x128xf32>
    %340 = arith.addf %339, %338 : vector<10x128xf32>
    %341 = arith.mulf %330, %340 : vector<10x128xf32>
    %c1_187 = arith.constant 1 : index
    %c640_188 = arith.constant 640 : index
    %c0_189 = arith.constant 0 : index
    %342 = vector.load %arg4[%c1_187, %c640_188, %c0_189] : memref<2x1040x128xf32, #tpu.memory_space<vmem>>, vector<1x128x128xf32>
    %343 = vector.shape_cast %342 : vector<1x128x128xf32> to vector<128x128xf32>
    %cst_190 = arith.constant dense<0.000000e+00> : vector<10x128xf32>
    %344 = tpu.matmul %321, %343, %cst_190 {dimension_numbers = #tpu.dot_dimension_numbers<[1], [0], [0], [1], [0, 0, 1, 1], [], []>} : vector<10x128xf32>, vector<128x128xf32>, vector<10x128xf32> -> vector<10x128xf32>
    %c1_191 = arith.constant 1 : index
    %c1034_192 = arith.constant 1034 : index
    %c0_193 = arith.constant 0 : index
    %345 = vector.load %arg4[%c1_191, %c1034_192, %c0_193] : memref<2x1040x128xf32, #tpu.memory_space<vmem>>, vector<1x1x128xf32>
    %346 = vector.shape_cast %345 : vector<1x1x128xf32> to vector<1x128xf32>
    %347 = vector.broadcast %346 : vector<1x128xf32> to vector<10x128xf32>
    %348 = arith.addf %344, %347 : vector<10x128xf32>
    %cst_194 = arith.constant 5.000000e-01 : f32
    %349 = vector.broadcast %cst_194 : f32 to vector<10x128xf32>
    %350 = arith.mulf %349, %348 : vector<10x128xf32>
    %351 = arith.mulf %348, %348 : vector<10x128xf32>
    %352 = arith.mulf %351, %348 : vector<10x128xf32>
    %cst_195 = arith.constant 4.471500e-02 : f32
    %353 = vector.broadcast %cst_195 : f32 to vector<10x128xf32>
    %354 = arith.mulf %353, %352 : vector<10x128xf32>
    %355 = arith.addf %348, %354 : vector<10x128xf32>
    %cst_196 = arith.constant 0.797884583 : f32
    %356 = vector.broadcast %cst_196 : f32 to vector<10x128xf32>
    %357 = arith.mulf %356, %355 : vector<10x128xf32>
    %358 = math.tanh %357 : vector<10x128xf32>
    %cst_197 = arith.constant 1.000000e+00 : f32
    %359 = vector.broadcast %cst_197 : f32 to vector<10x128xf32>
    %360 = arith.addf %359, %358 : vector<10x128xf32>
    %361 = arith.mulf %350, %360 : vector<10x128xf32>
    %c1_198 = arith.constant 1 : index
    %c768_199 = arith.constant 768 : index
    %c0_200 = arith.constant 0 : index
    %362 = vector.load %arg4[%c1_198, %c768_199, %c0_200] : memref<2x1040x128xf32, #tpu.memory_space<vmem>>, vector<1x128x128xf32>
    %363 = vector.shape_cast %362 : vector<1x128x128xf32> to vector<128x128xf32>
    %cst_201 = arith.constant dense<0.000000e+00> : vector<10x128xf32>
    %364 = tpu.matmul %341, %363, %cst_201 {dimension_numbers = #tpu.dot_dimension_numbers<[1], [0], [0], [1], [0, 0, 1, 1], [], []>} : vector<10x128xf32>, vector<128x128xf32>, vector<10x128xf32> -> vector<10x128xf32>
    %c1_202 = arith.constant 1 : index
    %c896_203 = arith.constant 896 : index
    %c0_204 = arith.constant 0 : index
    %365 = vector.load %arg4[%c1_202, %c896_203, %c0_204] : memref<2x1040x128xf32, #tpu.memory_space<vmem>>, vector<1x128x128xf32>
    %366 = vector.shape_cast %365 : vector<1x128x128xf32> to vector<128x128xf32>
    %cst_205 = arith.constant dense<0.000000e+00> : vector<10x128xf32>
    %367 = tpu.matmul %361, %366, %cst_205 {dimension_numbers = #tpu.dot_dimension_numbers<[1], [0], [0], [1], [0, 0, 1, 1], [], []>} : vector<10x128xf32>, vector<128x128xf32>, vector<10x128xf32> -> vector<10x128xf32>
    %368 = arith.addf %364, %367 : vector<10x128xf32>
    %c1_206 = arith.constant 1 : index
    %c1035_207 = arith.constant 1035 : index
    %c0_208 = arith.constant 0 : index
    %369 = vector.load %arg4[%c1_206, %c1035_207, %c0_208] : memref<2x1040x128xf32, #tpu.memory_space<vmem>>, vector<1x1x128xf32>
    %370 = vector.shape_cast %369 : vector<1x1x128xf32> to vector<1x128xf32>
    %371 = vector.broadcast %370 : vector<1x128xf32> to vector<10x128xf32>
    %372 = arith.addf %368, %371 : vector<10x128xf32>
    %c1_209 = arith.constant 1 : index
    %c1036_210 = arith.constant 1036 : index
    %c0_211 = arith.constant 0 : index
    %373 = vector.load %arg4[%c1_209, %c1036_210, %c0_211] : memref<2x1040x128xf32, #tpu.memory_space<vmem>>, vector<1x1x128xf32>
    %374 = vector.shape_cast %373 : vector<1x1x128xf32> to vector<1x128xf32>
    %375 = vector.broadcast %374 : vector<1x128xf32> to vector<10x128xf32>
    %376 = arith.mulf %375, %372 : vector<10x128xf32>
    %377 = arith.addf %293, %376 : vector<10x128xf32>
    %378 = vector.extract_strided_slice %377 {offsets = [0, 0], sizes = [2, 128], strides = [1, 1]} : vector<10x128xf32> to vector<2x128xf32>
    %c348 = arith.constant 348 : index
    %c0_212 = arith.constant 0 : index
    %379 = vector.load %arg1[%c348, %c0_212] : memref<352x128xf32, #tpu.memory_space<vmem>>, vector<1x128xf32>
    %c349 = arith.constant 349 : index
    %c0_213 = arith.constant 0 : index
    %380 = vector.load %arg1[%c349, %c0_213] : memref<352x128xf32, #tpu.memory_space<vmem>>, vector<1x128xf32>
    %381 = vector.broadcast %16 : vector<1x128xf32> to vector<2x128xf32>
    %382 = arith.mulf %378, %381 : vector<2x128xf32>
    %cst_214 = arith.constant dense<0.000000e+00> : vector<2xf32>
    %383 = vector.multi_reduction <add>, %382, %cst_214 [1] : vector<2x128xf32> to vector<2xf32>
    %384 = vector.shape_cast %383 : vector<2xf32> to vector<2x1xf32>
    %cst_215 = arith.constant 1.562500e-02 : f32
    %385 = vector.broadcast %cst_215 : f32 to vector<2x1xf32>
    %386 = arith.mulf %384, %385 : vector<2x1xf32>
    %387 = vector.broadcast %386 : vector<2x1xf32> to vector<2x128xf32>
    %388 = arith.subf %378, %387 : vector<2x128xf32>
    %389 = vector.broadcast %16 : vector<1x128xf32> to vector<2x128xf32>
    %390 = arith.mulf %388, %389 : vector<2x128xf32>
    %391 = arith.mulf %390, %390 : vector<2x128xf32>
    %cst_216 = arith.constant dense<0.000000e+00> : vector<2xf32>
    %392 = vector.multi_reduction <add>, %391, %cst_216 [1] : vector<2x128xf32> to vector<2xf32>
    %393 = vector.shape_cast %392 : vector<2xf32> to vector<2x1xf32>
    %cst_217 = arith.constant 1.562500e-02 : f32
    %394 = vector.broadcast %cst_217 : f32 to vector<2x1xf32>
    %395 = arith.mulf %393, %394 : vector<2x1xf32>
    %cst_218 = arith.constant 9.99999997E-7 : f32
    %396 = vector.broadcast %cst_218 : f32 to vector<2x1xf32>
    %397 = arith.addf %395, %396 : vector<2x1xf32>
    %398 = math.rsqrt %397 : vector<2x1xf32>
    %399 = vector.broadcast %398 : vector<2x1xf32> to vector<2x128xf32>
    %400 = arith.mulf %390, %399 : vector<2x128xf32>
    %401 = vector.broadcast %379 : vector<1x128xf32> to vector<2x128xf32>
    %402 = arith.mulf %400, %401 : vector<2x128xf32>
    %403 = vector.broadcast %380 : vector<1x128xf32> to vector<2x128xf32>
    %404 = arith.addf %402, %403 : vector<2x128xf32>
    %c0_219 = arith.constant 0 : index
    %c0_220 = arith.constant 0 : index
    %405 = vector.load %arg3[%c0_219, %c0_220] : memref<2x128xf32, #tpu.memory_space<vmem>>, vector<2x128xf32>
    tpu.vector_store %arg3[%c0_219, %c0_220], %404 {strides = array<i32>} : memref<2x128xf32, #tpu.memory_space<vmem>>, vector<2x128xf32>,
    return
  }
}

</mosaic_0001>

<llo_original>
// kernel: dino_forward.1
$region0: #{dino_forward.1}
  #allocation0 [shape = 'u32[]', space=smem, size = 0x4, offset = 0x4, fixed_abs, tag = 'smem constant byte address 0x4 - core index']
  #allocation1 [shape = 'u32[144,128]{1,0:T(1,128)}', space=vmem, size = 0x12000, scoped, tag = 'internal scratch']
  #allocation2 [shape = 'f32[2,1040,128]{2,1,0:T(8,128)}', space=vmem, size = 0x104000, scoped, tag = 'scratch operand']
  #allocation3 [shape = 's32[2]{0}', space=sflag, size = 0x8, scoped, tag = 'scratch operand']
  #allocation6 [shape = 's32[]', space=sflag, size = 0x4, offset = 0, fixed_abs, tag = 'sflag constant byte address 0x0 - dummy sync flag']
  #allocation7 [shape = 's32[]', space=sflag, size = 0x4, offset = 0, fixed_abs, tag = 'sflag constant byte address 0x0 - dummy sync flag']
  %s0 = inlined_call_operand.vmem [shape: f32[8,192], index: 0, kind: input, shape index: {}]
  %s1 = inlined_call_operand.vmem [shape: f32[352,128], index: 1, kind: input, shape index: {}]
  %s2 = inlined_call_operand.vmem [shape: f32[2,1040,128], index: 2, kind: input, shape index: {}]
  %s3 = inlined_call_operand.hbm [shape: f32[2,128], index: 3, kind: output, shape index: {}]
  %s4 = sld [smem:[#allocation0]]
  $region86: #{dino_forward.1} parent=0
    _
  %s6 = ssub.s32 1, %s4
  %s7 = scalar_select 0, %s6, %s4
  $region1: #{dino_forward.1} parent=0
    #allocation4 [shape = 'u8[1024]{0}', space=vmem, size = 0x400, scoped, tag = 'output window, operand 0, single buffered']
    #allocation5 [shape = 's32[1]{0}', space=sflag, size = 0x4, scoped, tag = 'scoped memory for dino_forward.1']
    %8 = vsyncpa [#allocation5], 0
    // Predicated region
    $region2: #{dino_forward.1} parent=1 // pred_check
      _
    $region3: #{dino_forward.1} parent=1 // pred_check_branch
      %10 = sbr.rel (0) target = $region5
    $region4: #{dino_forward.1} parent=1 // pred_region
      _
    $region5: #{dino_forward.1} parent=1 // pred_fallthru
      _
    // Predicated region
    $region6: #{dino_forward.1} parent=1 // pred_check
      _
    $region7: #{dino_forward.1} parent=1 // pred_check_branch
      %12 = sbr.rel (0) target = $region9
    $region8: #{dino_forward.1} parent=1 // pred_region
      _
    $region9: #{dino_forward.1} parent=1 // pred_fallthru
      _
    %p14 = scmp.lt.u32.totalorder 1040, 8
    %p15 = pneg %p14
    // Predicated region
    $region10: #{dino_forward.1} parent=1 // pred_check
      _
    $region11: #{dino_forward.1} parent=1 // pred_check_branch
      %17 = sbr.rel (%p14) target = $region13
    $region12: #{dino_forward.1} parent=1 // pred_region
      %s33 = sand.u32 1040, 7
      %p34 = scmp.eq.s32.totalorder %s33, 0
      // Predicated region
      $region25: #{dino_forward.1} parent=12 // pred_check
        %p35 = pneg %p34
      $region26: #{dino_forward.1} parent=12 // pred_check_branch
        %37 = sbr.rel (%p35) target = $region28
      $region27: #{dino_forward.1} parent=12 // pred_region
        loop: start=0, step=1, limit=1
        $region29: #{dino_forward.1} parent=27 // loop_pre_header
          _
        $region30: #{dino_forward.1} parent=27 // loop_header
          %s39 = sphi 0, %s43
          %p40 = scmp.ge.s32.totalorder %s39, 1
          %s44 = sphi %s2, %s2
          %s45 = sphi [#allocation2], [#allocation2]
        $region31: #{dino_forward.1} parent=27 // loop_header_branch
          %42 = sbr.rel (%p40) target = $region35
        $region32: #{dino_forward.1} parent=27 // loop_body
          %v46 = vld [vmem:[%s44] sm:$0xff]
          %47 = vst [vmem:[%s45] sm:$0xff] %v46
          %v48 = vld [vmem:[%s44 + $0x8] sm:$0xff]
          %49 = vst [vmem:[%s45 + $0x8] sm:$0xff] %v48
          %v50 = vld [vmem:[%s44 + $0x10] sm:$0xff]
          %51 = vst [vmem:[%s45 + $0x10] sm:$0xff] %v50
          %v52 = vld [vmem:[%s44 + $0x18] sm:$0xff]
          %53 = vst [vmem:[%s45 + $0x18] sm:$0xff] %v52
          %v54 = vld [vmem:[%s44 + $0x20] sm:$0xff]
          %55 = vst [vmem:[%s45 + $0x20] sm:$0xff] %v54
          %v56 = vld [vmem:[%s44 + $0x28] sm:$0xff]
          %57 = vst [vmem:[%s45 + $0x28] sm:$0xff] %v56
          %v58 = vld [vmem:[%s44 + $0x30] sm:$0xff]
          %59 = vst [vmem:[%s45 + $0x30] sm:$0xff] %v58
          %v60 = vld [vmem:[%s44 + $0x38] sm:$0xff]
          %61 = vst [vmem:[%s45 + $0x38] sm:$0xff] %v60
          %v62 = vld [vmem:[%s44 + $0x40] sm:$0xff]
          %63 = vst [vmem:[%s45 + $0x40] sm:$0xff] %v62
          %v64 = vld [vmem:[%s44 + $0x48] sm:$0xff]
          %65 = vst [vmem:[%s45 + $0x48] sm:$0xff] %v64
          %v66 = vld [vmem:[%s44 + $0x50] sm:$0xff]
          %67 = vst [vmem:[%s45 + $0x50] sm:$0xff] %v66
          %v68 = vld [vmem:[%s44 + $0x58] sm:$0xff]
          %69 = vst [vmem:[%s45 + $0x58] sm:$0xff] %v68
          %v70 = vld [vmem:[%s44 + $0x60] sm:$0xff]
          %71 = vst [vmem:[%s45 + $0x60] sm:$0xff] %v70
          %v72 = vld [vmem:[%s44 + $0x68] sm:$0xff]
          %73 = vst [vmem:[%s45 + $0x68] sm:$0xff] %v72
          %v74 = vld [vmem:[%s44 + $0x70] sm:$0xff]
          %75 = vst [vmem:[%s45 + $0x70] sm:$0xff] %v74
          %v76 = vld [vmem:[%s44 + $0x78] sm:$0xff]
          %77 = vst [vmem:[%s45 + $0x78] sm:$0xff] %v76
          %v78 = vld [vmem:[%s44 + $0x80] sm:$0xff]
          %79 = vst [vmem:[%s45 + $0x80] sm:$0xff] %v78
          %v80 = vld [vmem:[%s44 + $0x88] sm:$0xff]
          %81 = vst [vmem:[%s45 + $0x88] sm:$0xff] %v80
          %v82 = vld [vmem:[%s44 + $0x90] sm:$0xff]
          %83 = vst [vmem:[%s45 + $0x90] sm:$0xff] %v82
          %v84 = vld [vmem:[%s44 + $0x98] sm:$0xff]
          %85 = vst [vmem:[%s45 + $0x98] sm:$0xff] %v84
          %v86 = vld [vmem:[%s44 + $0xa0] sm:$0xff]
          %87 = vst [vmem:[%s45 + $0xa0] sm:$0xff] %v86
          %v88 = vld [vmem:[%s44 + $0xa8] sm:$0xff]
          %89 = vst [vmem:[%s45 + $0xa8] sm:$0xff] %v88
          %v90 = vld [vmem:[%s44 + $0xb0] sm:$0xff]
          %91 = vst [vmem:[%s45 + $0xb0] sm:$0xff] %v90
          %v92 = vld [vmem:[%s44 + $0xb8] sm:$0xff]
          %93 = vst [vmem:[%s45 + $0xb8] sm:$0xff] %v92
          %v94 = vld [vmem:[%s44 + $0xc0] sm:$0xff]
          %95 = vst [vmem:[%s45 + $0xc0] sm:$0xff] %v94
          %v96 = vld [vmem:[%s44 + $0xc8] sm:$0xff]
          %97 = vst [vmem:[%s45 + $0xc8] sm:$0xff] %v96
          %v98 = vld [vmem:[%s44 + $0xd0] sm:$0xff]
          %99 = vst [vmem:[%s45 + $0xd0] sm:$0xff] %v98
          %v100 = vld [vmem:[%s44 + $0xd8] sm:$0xff]
          %101 = vst [vmem:[%s45 + $0xd8] sm:$0xff] %v100
          %v102 = vld [vmem:[%s44 + $0xe0] sm:$0xff]
          %103 = vst [vmem:[%s45 + $0xe0] sm:$0xff] %v102
          %v104 = vld [vmem:[%s44 + $0xe8] sm:$0xff]
          %105 = vst [vmem:[%s45 + $0xe8] sm:$0xff] %v104
          %v106 = vld [vmem:[%s44 + $0xf0] sm:$0xff]
          %107 = vst [vmem:[%s45 + $0xf0] sm:$0xff] %v106
          %v108 = vld [vmem:[%s44 + $0xf8] sm:$0xff]
          %109 = vst [vmem:[%s45 + $0xf8] sm:$0xff] %v108
          %v110 = vld [vmem:[%s44 + $0x100] sm:$0xff]
          %111 = vst [vmem:[%s45 + $0x100] sm:$0xff] %v110
          %v112 = vld [vmem:[%s44 + $0x108] sm:$0xff]
          %113 = vst [vmem:[%s45 + $0x108] sm:$0xff] %v112
          %v114 = vld [vmem:[%s44 + $0x110] sm:$0xff]
          %115 = vst [vmem:[%s45 + $0x110] sm:$0xff] %v114
          %v116 = vld [vmem:[%s44 + $0x118] sm:$0xff]
          %117 = vst [vmem:[%s45 + $0x118] sm:$0xff] %v116
          %v118 = vld [vmem:[%s44 + $0x120] sm:$0xff]
          %119 = vst [vmem:[%s45 + $0x120] sm:$0xff] %v118
          %v120 = vld [vmem:[%s44 + $0x128] sm:$0xff]
          %121 = vst [vmem:[%s45 + $0x128] sm:$0xff] %v120
          %v122 = vld [vmem:[%s44 + $0x130] sm:$0xff]
          %123 = vst [vmem:[%s45 + $0x130] sm:$0xff] %v122
          %v124 = vld [vmem:[%s44 + $0x138] sm:$0xff]
          %125 = vst [vmem:[%s45 + $0x138] sm:$0xff] %v124
          %v126 = vld [vmem:[%s44 + $0x140] sm:$0xff]
          %127 = vst [vmem:[%s45 + $0x140] sm:$0xff] %v126
          %v128 = vld [vmem:[%s44 + $0x148] sm:$0xff]
          %129 = vst [vmem:[%s45 + $0x148] sm:$0xff] %v128
          %v130 = vld [vmem:[%s44 + $0x150] sm:$0xff]
          %131 = vst [vmem:[%s45 + $0x150] sm:$0xff] %v130
          %v132 = vld [vmem:[%s44 + $0x158] sm:$0xff]
          %133 = vst [vmem:[%s45 + $0x158] sm:$0xff] %v132
          %v134 = vld [vmem:[%s44 + $0x160] sm:$0xff]
          %135 = vst [vmem:[%s45 + $0x160] sm:$0xff] %v134
          %v136 = vld [vmem:[%s44 + $0x168] sm:$0xff]
          %137 = vst [vmem:[%s45 + $0x168] sm:$0xff] %v136
          %v138 = vld [vmem:[%s44 + $0x170] sm:$0xff]
          %139 = vst [vmem:[%s45 + $0x170] sm:$0xff] %v138
          %v140 = vld [vmem:[%s44 + $0x178] sm:$0xff]
          %141 = vst [vmem:[%s45 + $0x178] sm:$0xff] %v140
          %v142 = vld [vmem:[%s44 + $0x180] sm:$0xff]
          %143 = vst [vmem:[%s45 + $0x180] sm:$0xff] %v142
          %v144 = vld [vmem:[%s44 + $0x188] sm:$0xff]
          %145 = vst [vmem:[%s45 + $0x188] sm:$0xff] %v144
          %v146 = vld [vmem:[%s44 + $0x190] sm:$0xff]
          %147 = vst [vmem:[%s45 + $0x190] sm:$0xff] %v146
          %v148 = vld [vmem:[%s44 + $0x198] sm:$0xff]
          %149 = vst [vmem:[%s45 + $0x198] sm:$0xff] %v148
          %v150 = vld [vmem:[%s44 + $0x1a0] sm:$0xff]
          %151 = vst [vmem:[%s45 + $0x1a0] sm:$0xff] %v150
          %v152 = vld [vmem:[%s44 + $0x1a8] sm:$0xff]
          %153 = vst [vmem:[%s45 + $0x1a8] sm:$0xff] %v152
          %v154 = vld [vmem:[%s44 + $0x1b0] sm:$0xff]
          %155 = vst [vmem:[%s45 + $0x1b0] sm:$0xff] %v154
          %v156 = vld [vmem:[%s44 + $0x1b8] sm:$0xff]
          %157 = vst [vmem:[%s45 + $0x1b8] sm:$0xff] %v156
          %v158 = vld [vmem:[%s44 + $0x1c0] sm:$0xff]
          %159 = vst [vmem:[%s45 + $0x1c0] sm:$0xff] %v158
          %v160 = vld [vmem:[%s44 + $0x1c8] sm:$0xff]
          %161 = vst [vmem:[%s45 + $0x1c8] sm:$0xff] %v160
          %v162 = vld [vmem:[%s44 + $0x1d0] sm:$0xff]
          %163 = vst [vmem:[%s45 + $0x1d0] sm:$0xff] %v162
          %v164 = vld [vmem:[%s44 + $0x1d8] sm:$0xff]
          %165 = vst [vmem:[%s45 + $0x1d8] sm:$0xff] %v164
          %v166 = vld [vmem:[%s44 + $0x1e0] sm:$0xff]
          %167 = vst [vmem:[%s45 + $0x1e0] sm:$0xff] %v166
          %v168 = vld [vmem:[%s44 + $0x1e8] sm:$0xff]
          %169 = vst [vmem:[%s45 + $0x1e8] sm:$0xff] %v168
          %v170 = vld [vmem:[%s44 + $0x1f0] sm:$0xff]
          %171 = vst [vmem:[%s45 + $0x1f0] sm:$0xff] %v170
          %v172 = vld [vmem:[%s44 + $0x1f8] sm:$0xff]
          %173 = vst [vmem:[%s45 + $0x1f8] sm:$0xff] %v172
          %v174 = vld [vmem:[%s44 + $0x200] sm:$0xff]
          %175 = vst [vmem:[%s45 + $0x200] sm:$0xff] %v174
          %v176 = vld [vmem:[%s44 + $0x208] sm:$0xff]
          %177 = vst [vmem:[%s45 + $0x208] sm:$0xff] %v176
          %v178 = vld [vmem:[%s44 + $0x210] sm:$0xff]
          %179 = vst [vmem:[%s45 + $0x210] sm:$0xff] %v178
          %v180 = vld [vmem:[%s44 + $0x218] sm:$0xff]
          %181 = vst [vmem:[%s45 + $0x218] sm:$0xff] %v180
          %v182 = vld [vmem:[%s44 + $0x220] sm:$0xff]
          %183 = vst [vmem:[%s45 + $0x220] sm:$0xff] %v182
          %v184 = vld [vmem:[%s44 + $0x228] sm:$0xff]
          %185 = vst [vmem:[%s45 + $0x228] sm:$0xff] %v184
          %v186 = vld [vmem:[%s44 + $0x230] sm:$0xff]
          %187 = vst [vmem:[%s45 + $0x230] sm:$0xff] %v186
          %v188 = vld [vmem:[%s44 + $0x238] sm:$0xff]
          %189 = vst [vmem:[%s45 + $0x238] sm:$0xff] %v188
          %v190 = vld [vmem:[%s44 + $0x240] sm:$0xff]
          %191 = vst [vmem:[%s45 + $0x240] sm:$0xff] %v190
          %v192 = vld [vmem:[%s44 + $0x248] sm:$0xff]
          %193 = vst [vmem:[%s45 + $0x248] sm:$0xff] %v192
          %v194 = vld [vmem:[%s44 + $0x250] sm:$0xff]
          %195 = vst [vmem:[%s45 + $0x250] sm:$0xff] %v194
          %v196 = vld [vmem:[%s44 + $0x258] sm:$0xff]
          %197 = vst [vmem:[%s45 + $0x258] sm:$0xff] %v196
          %v198 = vld [vmem:[%s44 + $0x260] sm:$0xff]
          %199 = vst [vmem:[%s45 + $0x260] sm:$0xff] %v198
          %v200 = vld [vmem:[%s44 + $0x268] sm:$0xff]
          %201 = vst [vmem:[%s45 + $0x268] sm:$0xff] %v200
          %v202 = vld [vmem:[%s44 + $0x270] sm:$0xff]
          %203 = vst [vmem:[%s45 + $0x270] sm:$0xff] %v202
          %v204 = vld [vmem:[%s44 + $0x278] sm:$0xff]
          %205 = vst [vmem:[%s45 + $0x278] sm:$0xff] %v204
          %v206 = vld [vmem:[%s44 + $0x280] sm:$0xff]
          %207 = vst [vmem:[%s45 + $0x280] sm:$0xff] %v206
          %v208 = vld [vmem:[%s44 + $0x288] sm:$0xff]
          %209 = vst [vmem:[%s45 + $0x288] sm:$0xff] %v208
          %v210 = vld [vmem:[%s44 + $0x290] sm:$0xff]
          %211 = vst [vmem:[%s45 + $0x290] sm:$0xff] %v210
          %v212 = vld [vmem:[%s44 + $0x298] sm:$0xff]
          %213 = vst [vmem:[%s45 + $0x298] sm:$0xff] %v212
          %v214 = vld [vmem:[%s44 + $0x2a0] sm:$0xff]
          %215 = vst [vmem:[%s45 + $0x2a0] sm:$0xff] %v214
          %v216 = vld [vmem:[%s44 + $0x2a8] sm:$0xff]
          %217 = vst [vmem:[%s45 + $0x2a8] sm:$0xff] %v216
          %v218 = vld [vmem:[%s44 + $0x2b0] sm:$0xff]
          %219 = vst [vmem:[%s45 + $0x2b0] sm:$0xff] %v218
          %v220 = vld [vmem:[%s44 + $0x2b8] sm:$0xff]
          %221 = vst [vmem:[%s45 + $0x2b8] sm:$0xff] %v220
          %v222 = vld [vmem:[%s44 + $0x2c0] sm:$0xff]
          %223 = vst [vmem:[%s45 + $0x2c0] sm:$0xff] %v222
          %v224 = vld [vmem:[%s44 + $0x2c8] sm:$0xff]
          %225 = vst [vmem:[%s45 + $0x2c8] sm:$0xff] %v224
          %v226 = vld [vmem:[%s44 + $0x2d0] sm:$0xff]
          %227 = vst [vmem:[%s45 + $0x2d0] sm:$0xff] %v226
          %v228 = vld [vmem:[%s44 + $0x2d8] sm:$0xff]
          %229 = vst [vmem:[%s45 + $0x2d8] sm:$0xff] %v228
          %v230 = vld [vmem:[%s44 + $0x2e0] sm:$0xff]
          %231 = vst [vmem:[%s45 + $0x2e0] sm:$0xff] %v230
          %v232 = vld [vmem:[%s44 + $0x2e8] sm:$0xff]
          %233 = vst [vmem:[%s45 + $0x2e8] sm:$0xff] %v232
          %v234 = vld [vmem:[%s44 + $0x2f0] sm:$0xff]
          %235 = vst [vmem:[%s45 + $0x2f0] sm:$0xff] %v234
          %v236 = vld [vmem:[%s44 + $0x2f8] sm:$0xff]
          %237 = vst [vmem:[%s45 + $0x2f8] sm:$0xff] %v236
          %v238 = vld [vmem:[%s44 + $0x300] sm:$0xff]
          %239 = vst [vmem:[%s45 + $0x300] sm:$0xff] %v238
          %v240 = vld [vmem:[%s44 + $0x308] sm:$0xff]
          %241 = vst [vmem:[%s45 + $0x308] sm:$0xff] %v240
          %v242 = vld [vmem:[%s44 + $0x310] sm:$0xff]
          %243 = vst [vmem:[%s45 + $0x310] sm:$0xff] %v242
          %v244 = vld [vmem:[%s44 + $0x318] sm:$0xff]
          %245 = vst [vmem:[%s45 + $0x318] sm:$0xff] %v244
          %v246 = vld [vmem:[%s44 + $0x320] sm:$0xff]
          %247 = vst [vmem:[%s45 + $0x320] sm:$0xff] %v246
          %v248 = vld [vmem:[%s44 + $0x328] sm:$0xff]
          %249 = vst [vmem:[%s45 + $0x328] sm:$0xff] %v248
          %v250 = vld [vmem:[%s44 + $0x330] sm:$0xff]
          %251 = vst [vmem:[%s45 + $0x330] sm:$0xff] %v250
          %v252 = vld [vmem:[%s44 + $0x338] sm:$0xff]
          %253 = vst [vmem:[%s45 + $0x338] sm:$0xff] %v252
          %v254 = vld [vmem:[%s44 + $0x340] sm:$0xff]
          %255 = vst [vmem:[%s45 + $0x340] sm:$0xff] %v254
          %v256 = vld [vmem:[%s44 + $0x348] sm:$0xff]
          %257 = vst [vmem:[%s45 + $0x348] sm:$0xff] %v256
          %v258 = vld [vmem:[%s44 + $0x350] sm:$0xff]
          %259 = vst [vmem:[%s45 + $0x350] sm:$0xff] %v258
          %v260 = vld [vmem:[%s44 + $0x358] sm:$0xff]
          %261 = vst [vmem:[%s45 + $0x358] sm:$0xff] %v260
          %v262 = vld [vmem:[%s44 + $0x360] sm:$0xff]
          %263 = vst [vmem:[%s45 + $0x360] sm:$0xff] %v262
          %v264 = vld [vmem:[%s44 + $0x368] sm:$0xff]
          %265 = vst [vmem:[%s45 + $0x368] sm:$0xff] %v264
          %v266 = vld [vmem:[%s44 + $0x370] sm:$0xff]
          %267 = vst [vmem:[%s45 + $0x370] sm:$0xff] %v266
          %v268 = vld [vmem:[%s44 + $0x378] sm:$0xff]
          %269 = vst [vmem:[%s45 + $0x378] sm:$0xff] %v268
          %v270 = vld [vmem:[%s44 + $0x380] sm:$0xff]
          %271 = vst [vmem:[%s45 + $0x380] sm:$0xff] %v270
          %v272 = vld [vmem:[%s44 + $0x388] sm:$0xff]
          %273 = vst [vmem:[%s45 + $0x388] sm:$0xff] %v272
          %v274 = vld [vmem:[%s44 + $0x390] sm:$0xff]
          %275 = vst [vmem:[%s45 + $0x390] sm:$0xff] %v274
          %v276 = vld [vmem:[%s44 + $0x398] sm:$0xff]
          %277 = vst [vmem:[%s45 + $0x398] sm:$0xff] %v276
          %v278 = vld [vmem:[%s44 + $0x3a0] sm:$0xff]
          %279 = vst [vmem:[%s45 + $0x3a0] sm:$0xff] %v278
          %v280 = vld [vmem:[%s44 + $0x3a8] sm:$0xff]
          %281 = vst [vmem:[%s45 + $0x3a8] sm:$0xff] %v280
          %v282 = vld [vmem:[%s44 + $0x3b0] sm:$0xff]
          %283 = vst [vmem:[%s45 + $0x3b0] sm:$0xff] %v282
          %v284 = vld [vmem:[%s44 + $0x3b8] sm:$0xff]
          %285 = vst [vmem:[%s45 + $0x3b8] sm:$0xff] %v284
          %v286 = vld [vmem:[%s44 + $0x3c0] sm:$0xff]
          %287 = vst [vmem:[%s45 + $0x3c0] sm:$0xff] %v286
          %v288 = vld [vmem:[%s44 + $0x3c8] sm:$0xff]
          %289 = vst [vmem:[%s45 + $0x3c8] sm:$0xff] %v288
          %v290 = vld [vmem:[%s44 + $0x3d0] sm:$0xff]
          %291 = vst [vmem:[%s45 + $0x3d0] sm:$0xff] %v290
          %v292 = vld [vmem:[%s44 + $0x3d8] sm:$0xff]
          %293 = vst [vmem:[%s45 + $0x3d8] sm:$0xff] %v292
          %v294 = vld [vmem:[%s44 + $0x3e0] sm:$0xff]
          %295 = vst [vmem:[%s45 + $0x3e0] sm:$0xff] %v294
          %v296 = vld [vmem:[%s44 + $0x3e8] sm:$0xff]
          %297 = vst [vmem:[%s45 + $0x3e8] sm:$0xff] %v296
          %v298 = vld [vmem:[%s44 + $0x3f0] sm:$0xff]
          %299 = vst [vmem:[%s45 + $0x3f0] sm:$0xff] %v298
          %v300 = vld [vmem:[%s44 + $0x3f8] sm:$0xff]
          %301 = vst [vmem:[%s45 + $0x3f8] sm:$0xff] %v300
          %v302 = vld [vmem:[%s44 + $0x400] sm:$0xff]
          %303 = vst [vmem:[%s45 + $0x400] sm:$0xff] %v302
          %v304 = vld [vmem:[%s44 + $0x408] sm:$0xff]
          %305 = vst [vmem:[%s45 + $0x408] sm:$0xff] %v304
        $region33: #{dino_forward.1} parent=27 // loop_footer
          %s43 = sadd.s32 1, %s39
        $region34: #{dino_forward.1} parent=27 // loop_footer_branch
          %38 = sbr.rel target = $region30
        $region35: #{dino_forward.1} parent=27 // loop_exit
          _
      $region28: #{dino_forward.1} parent=12 // pred_fallthru
        _
      %p306 = pneg %p34
      // Predicated region
      $region36: #{dino_forward.1} parent=12 // pred_check
        _
      $region37: #{dino_forward.1} parent=12 // pred_check_branch
        %308 = sbr.rel (%p34) target = $region39
      $region38: #{dino_forward.1} parent=12 // pred_region
        %s309 = sand.u32 1040, 7
      $region39: #{dino_forward.1} parent=12 // pred_fallthru
        _
    $region13: #{dino_forward.1} parent=1 // pred_fallthru
      _
    // Predicated region
    $region14: #{dino_forward.1} parent=1 // pred_check
      %p18 = pneg %p14
    $region15: #{dino_forward.1} parent=1 // pred_check_branch
      %20 = sbr.rel (%p18) target = $region17
    $region16: #{dino_forward.1} parent=1 // pred_region
      %s21 = sshll.u32 1, 1040
      %s22 = ssub.s32 %s21, 1
      loop: start=0, step=1, limit=1
      $region18: #{dino_forward.1} parent=16 // loop_pre_header
        _
      $region19: #{dino_forward.1} parent=16 // loop_header
        %s24 = sphi 0, %s28
        %p25 = scmp.ge.s32.totalorder %s24, 1
        %s29 = sphi %s2, %s2
        %s30 = sphi [#allocation2], [#allocation2]
      $region20: #{dino_forward.1} parent=16 // loop_header_branch
        %27 = sbr.rel (%p25) target = $region24
      $region21: #{dino_forward.1} parent=16 // loop_body
        %v31 = vld [vmem:[%s29] sm:%s22]
        %32 = vst [vmem:[%s30] sm:%s22] %v31
      $region22: #{dino_forward.1} parent=16 // loop_footer
        %s28 = sadd.s32 1, %s24
      $region23: #{dino_forward.1} parent=16 // loop_footer_branch
        %23 = sbr.rel target = $region19
      $region24: #{dino_forward.1} parent=16 // loop_exit
        _
    $region17: #{dino_forward.1} parent=1 // pred_fallthru
      _
    // Predicated region
    $region40: #{dino_forward.1} parent=1 // pred_check
      _
    $region41: #{dino_forward.1} parent=1 // pred_check_branch
      %312 = sbr.rel (0) target = $region43
    $region42: #{dino_forward.1} parent=1 // pred_region
      %313 = vsyncadd [#allocation3], 16640
    $region43: #{dino_forward.1} parent=1 // pred_fallthru
      _
    %s314 = scalar_lea.vmem %s2, 1040
    %s315 = scalar_lea.vmem [#allocation2], 1040
    %s316 = scalar_lea.sflag [#allocation3], 1
    %p318 = scmp.lt.u32.totalorder 1040, 8
    %p319 = pneg %p318
    // Predicated region
    $region44: #{dino_forward.1} parent=1 // pred_check
      _
    $region45: #{dino_forward.1} parent=1 // pred_check_branch
      %321 = sbr.rel (%p318) target = $region47
    $region46: #{dino_forward.1} parent=1 // pred_region
      %s337 = sand.u32 1040, 7
      %p338 = scmp.eq.s32.totalorder %s337, 0
      // Predicated region
      $region59: #{dino_forward.1} parent=46 // pred_check
        %p339 = pneg %p338
      $region60: #{dino_forward.1} parent=46 // pred_check_branch
        %341 = sbr.rel (%p339) target = $region62
      $region61: #{dino_forward.1} parent=46 // pred_region
        loop: start=0, step=1, limit=1
        $region63: #{dino_forward.1} parent=61 // loop_pre_header
          _
        $region64: #{dino_forward.1} parent=61 // loop_header
          %s343 = sphi 0, %s347
          %p344 = scmp.ge.s32.totalorder %s343, 1
          %s348 = sphi %s314, %s314
          %s349 = sphi %s315, %s315
        $region65: #{dino_forward.1} parent=61 // loop_header_branch
          %346 = sbr.rel (%p344) target = $region69
        $region66: #{dino_forward.1} parent=61 // loop_body
          %v350 = vld [vmem:[%s348] sm:$0xff]
          %351 = vst [vmem:[%s349] sm:$0xff] %v350
          %v352 = vld [vmem:[%s348 + $0x8] sm:$0xff]
          %353 = vst [vmem:[%s349 + $0x8] sm:$0xff] %v352
          %v354 = vld [vmem:[%s348 + $0x10] sm:$0xff]
          %355 = vst [vmem:[%s349 + $0x10] sm:$0xff] %v354
          %v356 = vld [vmem:[%s348 + $0x18] sm:$0xff]
          %357 = vst [vmem:[%s349 + $0x18] sm:$0xff] %v356
          %v358 = vld [vmem:[%s348 + $0x20] sm:$0xff]
          %359 = vst [vmem:[%s349 + $0x20] sm:$0xff] %v358
          %v360 = vld [vmem:[%s348 + $0x28] sm:$0xff]
          %361 = vst [vmem:[%s349 + $0x28] sm:$0xff] %v360
          %v362 = vld [vmem:[%s348 + $0x30] sm:$0xff]
          %363 = vst [vmem:[%s349 + $0x30] sm:$0xff] %v362
          %v364 = vld [vmem:[%s348 + $0x38] sm:$0xff]
          %365 = vst [vmem:[%s349 + $0x38] sm:$0xff] %v364
          %v366 = vld [vmem:[%s348 + $0x40] sm:$0xff]
          %367 = vst [vmem:[%s349 + $0x40] sm:$0xff] %v366
          %v368 = vld [vmem:[%s348 + $0x48] sm:$0xff]
          %369 = vst [vmem:[%s349 + $0x48] sm:$0xff] %v368
          %v370 = vld [vmem:[%s348 + $0x50] sm:$0xff]
          %371 = vst [vmem:[%s349 + $0x50] sm:$0xff] %v370
          %v372 = vld [vmem:[%s348 + $0x58] sm:$0xff]
          %373 = vst [vmem:[%s349 + $0x58] sm:$0xff] %v372
          %v374 = vld [vmem:[%s348 + $0x60] sm:$0xff]
          %375 = vst [vmem:[%s349 + $0x60] sm:$0xff] %v374
          %v376 = vld [vmem:[%s348 + $0x68] sm:$0xff]
          %377 = vst [vmem:[%s349 + $0x68] sm:$0xff] %v376
          %v378 = vld [vmem:[%s348 + $0x70] sm:$0xff]
          %379 = vst [vmem:[%s349 + $0x70] sm:$0xff] %v378
          %v380 = vld [vmem:[%s348 + $0x78] sm:$0xff]
          %381 = vst [vmem:[%s349 + $0x78] sm:$0xff] %v380
          %v382 = vld [vmem:[%s348 + $0x80] sm:$0xff]
          %383 = vst [vmem:[%s349 + $0x80] sm:$0xff] %v382
          %v384 = vld [vmem:[%s348 + $0x88] sm:$0xff]
          %385 = vst [vmem:[%s349 + $0x88] sm:$0xff] %v384
          %v386 = vld [vmem:[%s348 + $0x90] sm:$0xff]
          %387 = vst [vmem:[%s349 + $0x90] sm:$0xff] %v386
          %v388 = vld [vmem:[%s348 + $0x98] sm:$0xff]
          %389 = vst [vmem:[%s349 + $0x98] sm:$0xff] %v388
          %v390 = vld [vmem:[%s348 + $0xa0] sm:$0xff]
          %391 = vst [vmem:[%s349 + $0xa0] sm:$0xff] %v390
          %v392 = vld [vmem:[%s348 + $0xa8] sm:$0xff]
          %393 = vst [vmem:[%s349 + $0xa8] sm:$0xff] %v392
          %v394 = vld [vmem:[%s348 + $0xb0] sm:$0xff]
          %395 = vst [vmem:[%s349 + $0xb0] sm:$0xff] %v394
          %v396 = vld [vmem:[%s348 + $0xb8] sm:$0xff]
          %397 = vst [vmem:[%s349 + $0xb8] sm:$0xff] %v396
          %v398 = vld [vmem:[%s348 + $0xc0] sm:$0xff]
          %399 = vst [vmem:[%s349 + $0xc0] sm:$0xff] %v398
          %v400 = vld [vmem:[%s348 + $0xc8] sm:$0xff]
          %401 = vst [vmem:[%s349 + $0xc8] sm:$0xff] %v400
          %v402 = vld [vmem:[%s348 + $0xd0] sm:$0xff]
          %403 = vst [vmem:[%s349 + $0xd0] sm:$0xff] %v402
          %v404 = vld [vmem:[%s348 + $0xd8] sm:$0xff]
          %405 = vst [vmem:[%s349 + $0xd8] sm:$0xff] %v404
          %v406 = vld [vmem:[%s348 + $0xe0] sm:$0xff]
          %407 = vst [vmem:[%s349 + $0xe0] sm:$0xff] %v406
          %v408 = vld [vmem:[%s348 + $0xe8] sm:$0xff]
          %409 = vst [vmem:[%s349 + $0xe8] sm:$0xff] %v408
          %v410 = vld [vmem:[%s348 + $0xf0] sm:$0xff]
          %411 = vst [vmem:[%s349 + $0xf0] sm:$0xff] %v410
          %v412 = vld [vmem:[%s348 + $0xf8] sm:$0xff]
          %413 = vst [vmem:[%s349 + $0xf8] sm:$0xff] %v412
          %v414 = vld [vmem:[%s348 + $0x100] sm:$0xff]
          %415 = vst [vmem:[%s349 + $0x100] sm:$0xff] %v414
          %v416 = vld [vmem:[%s348 + $0x108] sm:$0xff]
          %417 = vst [vmem:[%s349 + $0x108] sm:$0xff] %v416
          %v418 = vld [vmem:[%s348 + $0x110] sm:$0xff]
          %419 = vst [vmem:[%s349 + $0x110] sm:$0xff] %v418
          %v420 = vld [vmem:[%s348 + $0x118] sm:$0xff]
          %421 = vst [vmem:[%s349 + $0x118] sm:$0xff] %v420
          %v422 = vld [vmem:[%s348 + $0x120] sm:$0xff]
          %423 = vst [vmem:[%s349 + $0x120] sm:$0xff] %v422
          %v424 = vld [vmem:[%s348 + $0x128] sm:$0xff]
          %425 = vst [vmem:[%s349 + $0x128] sm:$0xff] %v424
          %v426 = vld [vmem:[%s348 + $0x130] sm:$0xff]
          %427 = vst [vmem:[%s349 + $0x130] sm:$0xff] %v426
          %v428 = vld [vmem:[%s348 + $0x138] sm:$0xff]
          %429 = vst [vmem:[%s349 + $0x138] sm:$0xff] %v428
          %v430 = vld [vmem:[%s348 + $0x140] sm:$0xff]
          %431 = vst [vmem:[%s349 + $0x140] sm:$0xff] %v430
          %v432 = vld [vmem:[%s348 + $0x148] sm:$0xff]
          %433 = vst [vmem:[%s349 + $0x148] sm:$0xff] %v432
          %v434 = vld [vmem:[%s348 + $0x150] sm:$0xff]
          %435 = vst [vmem:[%s349 + $0x150] sm:$0xff] %v434
          %v436 = vld [vmem:[%s348 + $0x158] sm:$0xff]
          %437 = vst [vmem:[%s349 + $0x158] sm:$0xff] %v436
          %v438 = vld [vmem:[%s348 + $0x160] sm:$0xff]
          %439 = vst [vmem:[%s349 + $0x160] sm:$0xff] %v438
          %v440 = vld [vmem:[%s348 + $0x168] sm:$0xff]
          %441 = vst [vmem:[%s349 + $0x168] sm:$0xff] %v440
          %v442 = vld [vmem:[%s348 + $0x170] sm:$0xff]
          %443 = vst [vmem:[%s349 + $0x170] sm:$0xff] %v442
          %v444 = vld [vmem:[%s348 + $0x178] sm:$0xff]
          %445 = vst [vmem:[%s349 + $0x178] sm:$0xff] %v444
          %v446 = vld [vmem:[%s348 + $0x180] sm:$0xff]
          %447 = vst [vmem:[%s349 + $0x180] sm:$0xff] %v446
          %v448 = vld [vmem:[%s348 + $0x188] sm:$0xff]
          %449 = vst [vmem:[%s349 + $0x188] sm:$0xff] %v448
          %v450 = vld [vmem:[%s348 + $0x190] sm:$0xff]
          %451 = vst [vmem:[%s349 + $0x190] sm:$0xff] %v450
          %v452 = vld [vmem:[%s348 + $0x198] sm:$0xff]
          %453 = vst [vmem:[%s349 + $0x198] sm:$0xff] %v452
          %v454 = vld [vmem:[%s348 + $0x1a0] sm:$0xff]
          %455 = vst [vmem:[%s349 + $0x1a0] sm:$0xff] %v454
          %v456 = vld [vmem:[%s348 + $0x1a8] sm:$0xff]
          %457 = vst [vmem:[%s349 + $0x1a8] sm:$0xff] %v456
          %v458 = vld [vmem:[%s348 + $0x1b0] sm:$0xff]
          %459 = vst [vmem:[%s349 + $0x1b0] sm:$0xff] %v458
          %v460 = vld [vmem:[%s348 + $0x1b8] sm:$0xff]
          %461 = vst [vmem:[%s349 + $0x1b8] sm:$0xff] %v460
          %v462 = vld [vmem:[%s348 + $0x1c0] sm:$0xff]
          %463 = vst [vmem:[%s349 + $0x1c0] sm:$0xff] %v462
          %v464 = vld [vmem:[%s348 + $0x1c8] sm:$0xff]
          %465 = vst [vmem:[%s349 + $0x1c8] sm:$0xff] %v464
          %v466 = vld [vmem:[%s348 + $0x1d0] sm:$0xff]
          %467 = vst [vmem:[%s349 + $0x1d0] sm:$0xff] %v466
          %v468 = vld [vmem:[%s348 + $0x1d8] sm:$0xff]
          %469 = vst [vmem:[%s349 + $0x1d8] sm:$0xff] %v468
          %v470 = vld [vmem:[%s348 + $0x1e0] sm:$0xff]
          %471 = vst [vmem:[%s349 + $0x1e0] sm:$0xff] %v470
          %v472 = vld [vmem:[%s348 + $0x1e8] sm:$0xff]
          %473 = vst [vmem:[%s349 + $0x1e8] sm:$0xff] %v472
          %v474 = vld [vmem:[%s348 + $0x1f0] sm:$0xff]
          %475 = vst [vmem:[%s349 + $0x1f0] sm:$0xff] %v474
          %v476 = vld [vmem:[%s348 + $0x1f8] sm:$0xff]
          %477 = vst [vmem:[%s349 + $0x1f8] sm:$0xff] %v476
          %v478 = vld [vmem:[%s348 + $0x200] sm:$0xff]
          %479 = vst [vmem:[%s349 + $0x200] sm:$0xff] %v478
          %v480 = vld [vmem:[%s348 + $0x208] sm:$0xff]
          %481 = vst [vmem:[%s349 + $0x208] sm:$0xff] %v480
          %v482 = vld [vmem:[%s348 + $0x210] sm:$0xff]
          %483 = vst [vmem:[%s349 + $0x210] sm:$0xff] %v482
          %v484 = vld [vmem:[%s348 + $0x218] sm:$0xff]
          %485 = vst [vmem:[%s349 + $0x218] sm:$0xff] %v484
          %v486 = vld [vmem:[%s348 + $0x220] sm:$0xff]
          %487 = vst [vmem:[%s349 + $0x220] sm:$0xff] %v486
          %v488 = vld [vmem:[%s348 + $0x228] sm:$0xff]
          %489 = vst [vmem:[%s349 + $0x228] sm:$0xff] %v488
          %v490 = vld [vmem:[%s348 + $0x230] sm:$0xff]
          %491 = vst [vmem:[%s349 + $0x230] sm:$0xff] %v490
          %v492 = vld [vmem:[%s348 + $0x238] sm:$0xff]
          %493 = vst [vmem:[%s349 + $0x238] sm:$0xff] %v492
          %v494 = vld [vmem:[%s348 + $0x240] sm:$0xff]
          %495 = vst [vmem:[%s349 + $0x240] sm:$0xff] %v494
          %v496 = vld [vmem:[%s348 + $0x248] sm:$0xff]
          %497 = vst [vmem:[%s349 + $0x248] sm:$0xff] %v496
          %v498 = vld [vmem:[%s348 + $0x250] sm:$0xff]
          %499 = vst [vmem:[%s349 + $0x250] sm:$0xff] %v498
          %v500 = vld [vmem:[%s348 + $0x258] sm:$0xff]
          %501 = vst [vmem:[%s349 + $0x258] sm:$0xff] %v500
          %v502 = vld [vmem:[%s348 + $0x260] sm:$0xff]
          %503 = vst [vmem:[%s349 + $0x260] sm:$0xff] %v502
          %v504 = vld [vmem:[%s348 + $0x268] sm:$0xff]
          %505 = vst [vmem:[%s349 + $0x268] sm:$0xff] %v504
          %v506 = vld [vmem:[%s348 + $0x270] sm:$0xff]
          %507 = vst [vmem:[%s349 + $0x270] sm:$0xff] %v506
          %v508 = vld [vmem:[%s348 + $0x278] sm:$0xff]
          %509 = vst [vmem:[%s349 + $0x278] sm:$0xff] %v508
          %v510 = vld [vmem:[%s348 + $0x280] sm:$0xff]
          %511 = vst [vmem:[%s349 + $0x280] sm:$0xff] %v510
          %v512 = vld [vmem:[%s348 + $0x288] sm:$0xff]
          %513 = vst [vmem:[%s349 + $0x288] sm:$0xff] %v512
          %v514 = vld [vmem:[%s348 + $0x290] sm:$0xff]
          %515 = vst [vmem:[%s349 + $0x290] sm:$0xff] %v514
          %v516 = vld [vmem:[%s348 + $0x298] sm:$0xff]
          %517 = vst [vmem:[%s349 + $0x298] sm:$0xff] %v516
          %v518 = vld [vmem:[%s348 + $0x2a0] sm:$0xff]
          %519 = vst [vmem:[%s349 + $0x2a0] sm:$0xff] %v518
          %v520 = vld [vmem:[%s348 + $0x2a8] sm:$0xff]
          %521 = vst [vmem:[%s349 + $0x2a8] sm:$0xff] %v520
          %v522 = vld [vmem:[%s348 + $0x2b0] sm:$0xff]
          %523 = vst [vmem:[%s349 + $0x2b0] sm:$0xff] %v522
          %v524 = vld [vmem:[%s348 + $0x2b8] sm:$0xff]
          %525 = vst [vmem:[%s349 + $0x2b8] sm:$0xff] %v524
          %v526 = vld [vmem:[%s348 + $0x2c0] sm:$0xff]
          %527 = vst [vmem:[%s349 + $0x2c0] sm:$0xff] %v526
          %v528 = vld [vmem:[%s348 + $0x2c8] sm:$0xff]
          %529 = vst [vmem:[%s349 + $0x2c8] sm:$0xff] %v528
          %v530 = vld [vmem:[%s348 + $0x2d0] sm:$0xff]
          %531 = vst [vmem:[%s349 + $0x2d0] sm:$0xff] %v530
          %v532 = vld [vmem:[%s348 + $0x2d8] sm:$0xff]
          %533 = vst [vmem:[%s349 + $0x2d8] sm:$0xff] %v532
          %v534 = vld [vmem:[%s348 + $0x2e0] sm:$0xff]
          %535 = vst [vmem:[%s349 + $0x2e0] sm:$0xff] %v534
          %v536 = vld [vmem:[%s348 + $0x2e8] sm:$0xff]
          %537 = vst [vmem:[%s349 + $0x2e8] sm:$0xff] %v536
          %v538 = vld [vmem:[%s348 + $0x2f0] sm:$0xff]
          %539 = vst [vmem:[%s349 + $0x2f0] sm:$0xff] %v538
          %v540 = vld [vmem:[%s348 + $0x2f8] sm:$0xff]
          %541 = vst [vmem:[%s349 + $0x2f8] sm:$0xff] %v540
          %v542 = vld [vmem:[%s348 + $0x300] sm:$0xff]
          %543 = vst [vmem:[%s349 + $0x300] sm:$0xff] %v542
          %v544 = vld [vmem:[%s348 + $0x308] sm:$0xff]
          %545 = vst [vmem:[%s349 + $0x308] sm:$0xff] %v544
          %v546 = vld [vmem:[%s348 + $0x310] sm:$0xff]
          %547 = vst [vmem:[%s349 + $0x310] sm:$0xff] %v546
          %v548 = vld [vmem:[%s348 + $0x318] sm:$0xff]
          %549 = vst [vmem:[%s349 + $0x318] sm:$0xff] %v548
          %v550 = vld [vmem:[%s348 + $0x320] sm:$0xff]
          %551 = vst [vmem:[%s349 + $0x320] sm:$0xff] %v550
          %v552 = vld [vmem:[%s348 + $0x328] sm:$0xff]
          %553 = vst [vmem:[%s349 + $0x328] sm:$0xff] %v552
          %v554 = vld [vmem:[%s348 + $0x330] sm:$0xff]
          %555 = vst [vmem:[%s349 + $0x330] sm:$0xff] %v554
          %v556 = vld [vmem:[%s348 + $0x338] sm:$0xff]
          %557 = vst [vmem:[%s349 + $0x338] sm:$0xff] %v556
          %v558 = vld [vmem:[%s348 + $0x340] sm:$0xff]
          %559 = vst [vmem:[%s349 + $0x340] sm:$0xff] %v558
          %v560 = vld [vmem:[%s348 + $0x348] sm:$0xff]
          %561 = vst [vmem:[%s349 + $0x348] sm:$0xff] %v560
          %v562 = vld [vmem:[%s348 + $0x350] sm:$0xff]
          %563 = vst [vmem:[%s349 + $0x350] sm:$0xff] %v562
          %v564 = vld [vmem:[%s348 + $0x358] sm:$0xff]
          %565 = vst [vmem:[%s349 + $0x358] sm:$0xff] %v564
          %v566 = vld [vmem:[%s348 + $0x360] sm:$0xff]
          %567 = vst [vmem:[%s349 + $0x360] sm:$0xff] %v566
          %v568 = vld [vmem:[%s348 + $0x368] sm:$0xff]
          %569 = vst [vmem:[%s349 + $0x368] sm:$0xff] %v568
          %v570 = vld [vmem:[%s348 + $0x370] sm:$0xff]
          %571 = vst [vmem:[%s349 + $0x370] sm:$0xff] %v570
          %v572 = vld [vmem:[%s348 + $0x378] sm:$0xff]
          %573 = vst [vmem:[%s349 + $0x378] sm:$0xff] %v572
          %v574 = vld [vmem:[%s348 + $0x380] sm:$0xff]
          %575 = vst [vmem:[%s349 + $0x380] sm:$0xff] %v574
          %v576 = vld [vmem:[%s348 + $0x388] sm:$0xff]
          %577 = vst [vmem:[%s349 + $0x388] sm:$0xff] %v576
          %v578 = vld [vmem:[%s348 + $0x390] sm:$0xff]
          %579 = vst [vmem:[%s349 + $0x390] sm:$0xff] %v578
          %v580 = vld [vmem:[%s348 + $0x398] sm:$0xff]
          %581 = vst [vmem:[%s349 + $0x398] sm:$0xff] %v580
          %v582 = vld [vmem:[%s348 + $0x3a0] sm:$0xff]
          %583 = vst [vmem:[%s349 + $0x3a0] sm:$0xff] %v582
          %v584 = vld [vmem:[%s348 + $0x3a8] sm:$0xff]
          %585 = vst [vmem:[%s349 + $0x3a8] sm:$0xff] %v584
          %v586 = vld [vmem:[%s348 + $0x3b0] sm:$0xff]
          %587 = vst [vmem:[%s349 + $0x3b0] sm:$0xff] %v586
          %v588 = vld [vmem:[%s348 + $0x3b8] sm:$0xff]
          %589 = vst [vmem:[%s349 + $0x3b8] sm:$0xff] %v588
          %v590 = vld [vmem:[%s348 + $0x3c0] sm:$0xff]
          %591 = vst [vmem:[%s349 + $0x3c0] sm:$0xff] %v590
          %v592 = vld [vmem:[%s348 + $0x3c8] sm:$0xff]
          %593 = vst [vmem:[%s349 + $0x3c8] sm:$0xff] %v592
          %v594 = vld [vmem:[%s348 + $0x3d0] sm:$0xff]
          %595 = vst [vmem:[%s349 + $0x3d0] sm:$0xff] %v594
          %v596 = vld [vmem:[%s348 + $0x3d8] sm:$0xff]
          %597 = vst [vmem:[%s349 + $0x3d8] sm:$0xff] %v596
          %v598 = vld [vmem:[%s348 + $0x3e0] sm:$0xff]
          %599 = vst [vmem:[%s349 + $0x3e0] sm:$0xff] %v598
          %v600 = vld [vmem:[%s348 + $0x3e8] sm:$0xff]
          %601 = vst [vmem:[%s349 + $0x3e8] sm:$0xff] %v600
          %v602 = vld [vmem:[%s348 + $0x3f0] sm:$0xff]
          %603 = vst [vmem:[%s349 + $0x3f0] sm:$0xff] %v602
          %v604 = vld [vmem:[%s348 + $0x3f8] sm:$0xff]
          %605 = vst [vmem:[%s349 + $0x3f8] sm:$0xff] %v604
          %v606 = vld [vmem:[%s348 + $0x400] sm:$0xff]
          %607 = vst [vmem:[%s349 + $0x400] sm:$0xff] %v606
          %v608 = vld [vmem:[%s348 + $0x408] sm:$0xff]
          %609 = vst [vmem:[%s349 + $0x408] sm:$0xff] %v608
        $region67: #{dino_forward.1} parent=61 // loop_footer
          %s347 = sadd.s32 1, %s343
        $region68: #{dino_forward.1} parent=61 // loop_footer_branch
          %342 = sbr.rel target = $region64
        $region69: #{dino_forward.1} parent=61 // loop_exit
          _
      $region62: #{dino_forward.1} parent=46 // pred_fallthru
        _
      %p610 = pneg %p338
      // Predicated region
      $region70: #{dino_forward.1} parent=46 // pred_check
        _
      $region71: #{dino_forward.1} parent=46 // pred_check_branch
        %612 = sbr.rel (%p338) target = $region73
      $region72: #{dino_forward.1} parent=46 // pred_region
        %s613 = sand.u32 1040, 7
      $region73: #{dino_forward.1} parent=46 // pred_fallthru
        _
    $region47: #{dino_forward.1} parent=1 // pred_fallthru
      _
    // Predicated region
    $region48: #{dino_forward.1} parent=1 // pred_check
      %p322 = pneg %p318
    $region49: #{dino_forward.1} parent=1 // pred_check_branch
      %324 = sbr.rel (%p322) target = $region51
    $region50: #{dino_forward.1} parent=1 // pred_region
      %s325 = sshll.u32 1, 1040
      %s326 = ssub.s32 %s325, 1
      loop: start=0, step=1, limit=1
      $region52: #{dino_forward.1} parent=50 // loop_pre_header
        _
      $region53: #{dino_forward.1} parent=50 // loop_header
        %s328 = sphi 0, %s332
        %p329 = scmp.ge.s32.totalorder %s328, 1
        %s333 = sphi %s314, %s314
        %s334 = sphi %s315, %s315
      $region54: #{dino_forward.1} parent=50 // loop_header_branch
        %331 = sbr.rel (%p329) target = $region58
      $region55: #{dino_forward.1} parent=50 // loop_body
        %v335 = vld [vmem:[%s333] sm:%s326]
        %336 = vst [vmem:[%s334] sm:%s326] %v335
      $region56: #{dino_forward.1} parent=50 // loop_footer
        %s332 = sadd.s32 1, %s328
      $region57: #{dino_forward.1} parent=50 // loop_footer_branch
        %327 = sbr.rel target = $region53
      $region58: #{dino_forward.1} parent=50 // loop_exit
        _
    $region51: #{dino_forward.1} parent=1 // pred_fallthru
      _
    // Predicated region
    $region74: #{dino_forward.1} parent=1 // pred_check
      _
    $region75: #{dino_forward.1} parent=1 // pred_check_branch
      %616 = sbr.rel (0) target = $region77
    $region76: #{dino_forward.1} parent=1 // pred_region
      %617 = vsyncadd %s316, 16640
    $region77: #{dino_forward.1} parent=1 // pred_fallthru
      _
    %v618 = vlaneseq
    %v619 = vand.u32 %v618, 127
    %vm620 = vcmp.lt.s32.totalorder %v619, 64
    %v621 = vsel %vm620, 1, 0
    %v622 = vcvt.s32.f32 %v621
    %v623 = vld [vmem:[%s0] sm:$0xff]
    %v624 = vld [vmem:[%s0 + $0x8] sm:$0xff]
    %v625 = vld [vmem:[%s1] sm:$0xff]
    %v626 = vld [vmem:[%s1 + $0x8] sm:$0xff]
    %v627 = vld [vmem:[%s1 + $0x10] sm:$0xff]
    %v628 = vld [vmem:[%s1 + $0x18] sm:$0xff]
    %v629 = vld [vmem:[%s1 + $0x20] sm:$0xff]
    %v630 = vld [vmem:[%s1 + $0x28] sm:$0xff]
    %v631 = vld [vmem:[%s1 + $0x30] sm:$0xff]
    %v632 = vld [vmem:[%s1 + $0x38] sm:$0xff]
    %v633 = vld [vmem:[%s1 + $0x40] sm:$0xff]
    %v634 = vld [vmem:[%s1 + $0x48] sm:$0xff]
    %v635 = vld [vmem:[%s1 + $0x50] sm:$0xff]
    %v636 = vld [vmem:[%s1 + $0x58] sm:$0xff]
    %v637 = vld [vmem:[%s1 + $0x60] sm:$0xff]
    %v638 = vld [vmem:[%s1 + $0x68] sm:$0xff]
    %v639 = vld [vmem:[%s1 + $0x70] sm:$0xff]
    %v640 = vld [vmem:[%s1 + $0x78] sm:$0xff]
    %v641 = vld [vmem:[%s1 + $0x80] sm:$0xff]
    %v642 = vld [vmem:[%s1 + $0x88] sm:$0xff]
    %v643 = vld [vmem:[%s1 + $0x90] sm:$0xff]
    %v644 = vld [vmem:[%s1 + $0x98] sm:$0xff]
    %v645 = vld [vmem:[%s1 + $0xa0] sm:$0xff]
    %v646 = vld [vmem:[%s1 + $0xa8] sm:$0xff]
    %v647 = vld [vmem:[%s1 + $0xb0] sm:$0xff]
    %v648 = vld [vmem:[%s1 + $0xb8] sm:$0xff]
    %v649 = vld [vmem:[%s1 + $0x15b] sm:$0x1]
    %v650 = vlaneseq
    %v651 = vshrl.u32 %v650, 7
    %v652 = vsub.s32 0, %v651
    %v653 = vrot.slane %v649, %v652
    %vm654 = vcmask 523264
    %v656 = vsel %vm654, %v624, 0
    %658 = vmatprep.subr.mxu0 0.0
    %659 = vmatpush1.msra.mxu0 %v640
    %660 = vmatprep.subr.mxu0 0.0
    %661 = vmatpush1.msra.mxu0 %v639
    %662 = vmatprep.subr.mxu0 0.0
    %663 = vmatpush1.msra.mxu0 %v638
    %664 = vmatprep.subr.mxu0 0.0
    %665 = vmatpush1.msra.mxu0 %v637
    %666 = vmatprep.subr.mxu0 0.0
    %667 = vmatpush1.msra.mxu0 %v636
    %668 = vmatprep.subr.mxu0 0.0
    %669 = vmatpush1.msra.mxu0 %v635
    %670 = vmatprep.subr.mxu0 0.0
    %671 = vmatpush1.msra.mxu0 %v634
    %672 = vmatprep.subr.mxu0 0.0
    %673 = vmatpush1.msra.mxu0 %v633
    %674 = vmatprep.subr.mxu0 0.0
    %675 = vmatpush1.msra.mxu0 %v632
    %676 = vmatprep.subr.mxu0 0.0
    %677 = vmatpush1.msra.mxu0 %v631
    %678 = vmatprep.subr.mxu0 0.0
    %679 = vmatpush1.msra.mxu0 %v630
    %680 = vmatprep.subr.mxu0 0.0
    %681 = vmatpush1.msra.mxu0 %v629
    %682 = vmatprep.subr.mxu0 0.0
    %683 = vmatpush1.msra.mxu0 %v628
    %684 = vmatprep.subr.mxu0 0.0
    %685 = vmatpush1.msra.mxu0 %v627
    %686 = vmatprep.subr.mxu0 0.0
    %687 = vmatpush1.msra.mxu0 %v626
    %688 = vmatprep.subr.mxu0 0.0
    %689 = vmatpush1.msra.mxu0 %v625
    %690 = vmatprep.subr.mxu0 0.0
    %691 = vmatpush2.msra.mxu0 0.0
    %692 = vmatprep.subr.mxu0 0.0
    %693 = vmatpush2.msra.mxu0 0.0
    %694 = vmatprep.subr.mxu0 0.0
    %695 = vmatpush2.msra.mxu0 0.0
    %696 = vmatprep.subr.mxu0 0.0
    %697 = vmatpush2.msra.mxu0 0.0
    %698 = vmatprep.subr.mxu0 0.0
    %699 = vmatpush2.msra.mxu0 0.0
    %700 = vmatprep.subr.mxu0 0.0
    %701 = vmatpush2.msra.mxu0 0.0
    %702 = vmatprep.subr.mxu0 0.0
    %703 = vmatpush2.msra.mxu0 0.0
    %704 = vmatprep.subr.mxu0 0.0
    %705 = vmatpush2.msra.mxu0 0.0
    %706 = vmatprep.subr.mxu0 0.0
    %707 = vmatpush2.msra.mxu0 %v648
    %708 = vmatprep.subr.mxu0 0.0
    %709 = vmatpush2.msra.mxu0 %v647
    %710 = vmatprep.subr.mxu0 0.0
    %711 = vmatpush2.msra.mxu0 %v646
    %712 = vmatprep.subr.mxu0 0.0
    %713 = vmatpush2.msra.mxu0 %v645
    %714 = vmatprep.subr.mxu0 0.0
    %715 = vmatpush2.msra.mxu0 %v644
    %716 = vmatprep.subr.mxu0 0.0
    %717 = vmatpush2.msra.mxu0 %v643
    %718 = vmatprep.subr.mxu0 0.0
    %719 = vmatpush2.msra.mxu0 %v642
    %720 = vmatprep.subr.mxu0 0.0
    %721 = vmatpush2.msra.mxu0 %v641
    %722 = vmatprep.mubr.f32.mxu0 %v656
    %723 = vmatmul.mubr.f32.gmra.mxu0 %v623
    %v724 = vpop.f32.mrf.mxu0
    %v725 = vadd.f32 %v653, %v724
    %v726 = vpop.f32.mrf.mxu0
    %727 = vdwg.mxu0
    %v728 = vld [vmem:[%s1 + $0x14c] sm:$0xff]
    %v729 = vld [vmem:[%s1 + $0x154] sm:$0x3]
    %v730 = vld [vmem:[%s1 + $0x142] sm:$0xff]
    %v731 = vld [vmem:[%s1 + $0x14a] sm:$0x3]
    %v732 = vld [vmem:[%s1 + $0x156] sm:$0x1f]
    %vm733 = vcmask 39936
    %v735 = vsel %vm733, %v730, 0
    %v738 = vsel %vm733, %v731, 0
    %vm740 = vcmask 1044480
    %v742 = vsel %vm740, %v732, 0
    %744 = vmatprep.subr.mxu0 0.0
    %745 = vmatpush1.msra.mxu0 0.0
    %746 = vmatprep.subr.mxu0 0.0
    %747 = vmatpush1.msra.mxu0 0.0
    %748 = vmatprep.subr.mxu0 0.0
    %749 = vmatpush1.msra.mxu0 0.0
    %750 = vmatprep.subr.mxu0 0.0
    %751 = vmatpush1.msra.mxu0 0.0
    %752 = vmatprep.subr.mxu0 0.0
    %753 = vmatpush1.msra.mxu0 0.0
    %754 = vmatprep.subr.mxu0 0.0
    %755 = vmatpush1.msra.mxu0 0.0
    %756 = vmatprep.subr.mxu0 0.0
    %757 = vmatpush1.msra.mxu0 0.0
    %758 = vmatprep.subr.mxu0 0.0
    %759 = vmatpush1.msra.mxu0 0.0
    %760 = vmatprep.subr.mxu0 0.0
    %761 = vmatpush1.msra.mxu0 0.0
    %762 = vmatprep.subr.mxu0 0.0
    %763 = vmatpush1.msra.mxu0 0.0
    %764 = vmatprep.subr.mxu0 0.0
    %765 = vmatpush1.msra.mxu0 0.0
    %766 = vmatprep.subr.mxu0 0.0
    %767 = vmatpush1.msra.mxu0 0.0
    %768 = vmatprep.subr.mxu0 0.0
    %769 = vmatpush1.msra.mxu0 0.0
    %770 = vmatprep.subr.mxu0 0.0
    %771 = vmatpush1.msra.mxu0 0.0
    %772 = vmatprep.subr.mxu0 0.0
    %773 = vmatpush1.msra.mxu0 0.0
    %774 = vmatprep.subr.mxu0 0.0
    %775 = vmatpush1.msra.mxu0 %v742
    %776 = vmatprep.subr.mxu0 0.0
    %777 = vmatpush2.msra.mxu0 0.0
    %778 = vmatprep.subr.mxu0 0.0
    %779 = vmatpush2.msra.mxu0 0.0
    %780 = vmatprep.subr.mxu0 0.0
    %781 = vmatpush2.msra.mxu0 0.0
    %782 = vmatprep.subr.mxu0 0.0
    %783 = vmatpush2.msra.mxu0 0.0
    %784 = vmatprep.subr.mxu0 0.0
    %785 = vmatpush2.msra.mxu0 0.0
    %786 = vmatprep.subr.mxu0 0.0
    %787 = vmatpush2.msra.mxu0 0.0
    %788 = vmatprep.subr.mxu0 0.0
    %789 = vmatpush2.msra.mxu0 0.0
    %790 = vmatprep.subr.mxu0 0.0
    %791 = vmatpush2.msra.mxu0 0.0
    %792 = vmatprep.subr.mxu0 0.0
    %793 = vmatpush2.msra.mxu0 0.0
    %794 = vmatprep.subr.mxu0 0.0
    %795 = vmatpush2.msra.mxu0 0.0
    %796 = vmatprep.subr.mxu0 0.0
    %797 = vmatpush2.msra.mxu0 0.0
    %798 = vmatprep.subr.mxu0 0.0
    %799 = vmatpush2.msra.mxu0 0.0
    %800 = vmatprep.subr.mxu0 0.0
    %801 = vmatpush2.msra.mxu0 0.0
    %802 = vmatprep.subr.mxu0 0.0
    %803 = vmatpush2.msra.mxu0 0.0
    %804 = vmatprep.subr.mxu0 0.0
    %805 = vmatpush2.msra.mxu0 0.0
    %806 = vmatprep.subr.mxu0 0.0
    %807 = vmatpush2.msra.mxu0 0.0
    %808 = vmatprep.mubr.f32.mxu0 0.0
    %809 = vmatmul.mubr.f32.gmra.mxu0 %v735
    %v810 = vpop.f32.mrf.mxu0
    %v811 = vadd.f32 0.0, %v810
    %v812 = vpop.f32.mrf.mxu0
    %813 = vmatprep.mubr.f32.mxu0 0.0
    %814 = vmatmul.mubr.f32.gmra.mxu0 %v738
    %v815 = vpop.f32.mrf.mxu0
    %v816 = vadd.f32 0.0, %v815
    %v817 = vpop.f32.mrf.mxu0
    %818 = vdwg.mxu0
    %vm819 = vcmask 64512
    %v821 = vsel %vm819, %v728, 0
    %v824 = vsel %vm819, %v729, 0
    %826 = vmatprep.subr.mxu0 0.0
    %827 = vmatpush1.msra.mxu0 0.0
    %828 = vmatprep.subr.mxu0 0.0
    %829 = vmatpush1.msra.mxu0 0.0
    %830 = vmatprep.subr.mxu0 0.0
    %831 = vmatpush1.msra.mxu0 0.0
    %832 = vmatprep.subr.mxu0 0.0
    %833 = vmatpush1.msra.mxu0 0.0
    %834 = vmatprep.subr.mxu0 0.0
    %835 = vmatpush1.msra.mxu0 0.0
    %836 = vmatprep.subr.mxu0 0.0
    %837 = vmatpush1.msra.mxu0 0.0
    %838 = vmatprep.subr.mxu0 0.0
    %839 = vmatpush1.msra.mxu0 0.0
    %840 = vmatprep.subr.mxu0 0.0
    %841 = vmatpush1.msra.mxu0 0.0
    %842 = vmatprep.subr.mxu0 0.0
    %843 = vmatpush1.msra.mxu0 0.0
    %844 = vmatprep.subr.mxu0 0.0
    %845 = vmatpush1.msra.mxu0 0.0
    %846 = vmatprep.subr.mxu0 0.0
    %847 = vmatpush1.msra.mxu0 0.0
    %848 = vmatprep.subr.mxu0 0.0
    %849 = vmatpush1.msra.mxu0 0.0
    %850 = vmatprep.subr.mxu0 0.0
    %851 = vmatpush1.msra.mxu0 0.0
    %852 = vmatprep.subr.mxu0 0.0
    %853 = vmatpush1.msra.mxu0 0.0
    %854 = vmatprep.subr.mxu0 0.0
    %855 = vmatpush1.msra.mxu0 0.0
    %856 = vmatprep.subr.mxu0 0.0
    %857 = vmatpush1.msra.mxu0 %v725
    %858 = vmatprep.subr.mxu0 0.0
    %859 = vmatpush2.msra.mxu0 0.0
    %860 = vmatprep.subr.mxu0 0.0
    %861 = vmatpush2.msra.mxu0 0.0
    %862 = vmatprep.subr.mxu0 0.0
    %863 = vmatpush2.msra.mxu0 0.0
    %864 = vmatprep.subr.mxu0 0.0
    %865 = vmatpush2.msra.mxu0 0.0
    %866 = vmatprep.subr.mxu0 0.0
    %867 = vmatpush2.msra.mxu0 0.0
    %868 = vmatprep.subr.mxu0 0.0
    %869 = vmatpush2.msra.mxu0 0.0
    %870 = vmatprep.subr.mxu0 0.0
    %871 = vmatpush2.msra.mxu0 0.0
    %872 = vmatprep.subr.mxu0 0.0
    %873 = vmatpush2.msra.mxu0 0.0
    %874 = vmatprep.subr.mxu0 0.0
    %875 = vmatpush2.msra.mxu0 0.0
    %876 = vmatprep.subr.mxu0 0.0
    %877 = vmatpush2.msra.mxu0 0.0
    %878 = vmatprep.subr.mxu0 0.0
    %879 = vmatpush2.msra.mxu0 0.0
    %880 = vmatprep.subr.mxu0 0.0
    %881 = vmatpush2.msra.mxu0 0.0
    %882 = vmatprep.subr.mxu0 0.0
    %883 = vmatpush2.msra.mxu0 0.0
    %884 = vmatprep.subr.mxu0 0.0
    %885 = vmatpush2.msra.mxu0 0.0
    %886 = vmatprep.subr.mxu0 0.0
    %887 = vmatpush2.msra.mxu0 0.0
    %888 = vmatprep.subr.mxu0 0.0
    %889 = vmatpush2.msra.mxu0 0.0
    %890 = vmatprep.mubr.f32.mxu0 0.0
    %891 = vmatmul.mubr.f32.gmra.mxu0 %v821
    %v892 = vpop.f32.mrf.mxu0
    %v893 = vadd.f32 %v811, %v892
    %v894 = vpop.f32.mrf.mxu0
    %895 = vmatprep.mubr.f32.mxu0 0.0
    %896 = vmatmul.mubr.f32.gmra.mxu0 %v824
    %v897 = vpop.f32.mrf.mxu0
    %v898 = vadd.f32 %v816, %v897
    %v899 = vpop.f32.mrf.mxu0
    %900 = vdwg.mxu0
    %v901 = vld [vmem:[%s1 + $0x110] sm:$0xff]
    %v902 = vld [vmem:[%s1 + $0x118] sm:$0xff]
    %v903 = vld [vmem:[%s1 + $0x120] sm:$0xff]
    %v904 = vld [vmem:[%s1 + $0x128] sm:$0xff]
    %v905 = vld [vmem:[%s1 + $0x130] sm:$0xff]
    %v906 = vld [vmem:[%s1 + $0x138] sm:$0xff]
    %v907 = vld [vmem:[%s1 + $0x140] sm:$0x3]
    %v908 = vld [vmem:[%s1 + $0xc0] sm:$0xff]
    %v909 = vld [vmem:[%s1 + $0xc8] sm:$0xff]
    %v910 = vld [vmem:[%s1 + $0xd0] sm:$0xff]
    %v911 = vld [vmem:[%s1 + $0xd8] sm:$0xff]
    %v912 = vld [vmem:[%s1 + $0xe0] sm:$0xff]
    %v913 = vld [vmem:[%s1 + $0xe8] sm:$0xff]
    %v914 = vld [vmem:[%s1 + $0xf0] sm:$0xff]
    %v915 = vld [vmem:[%s1 + $0xf8] sm:$0xff]
    %v916 = vld [vmem:[%s1 + $0x100] sm:$0xff]
    %v917 = vld [vmem:[%s1 + $0x108] sm:$0xff]
    %s918 = smul.u32 1040, 1
    %s919 = sshll.u32 %s918, 4
    %920 = dma.done [#allocation3], %s919
    %v921 = vld [vmem:[#allocation2 + $0x400] sm:$0x1]
    %v922 = vld [vmem:[#allocation2 + $0x401] sm:$0x1]
    %v923 = vmul.f32 %v893, %v622
    %v924 = vmul.f32 %v898, %v622
    %925 = vadd.xlane.f32.xlu0 %v923
    %v926 = vpop.xlane.xlu0 %925
    %vm927 = vcmask 1041408
    %v928 = vsel %vm927, %v924, 0.0
    %929 = vadd.xlane.f32.xlu0 %v928
    %v930 = vpop.xlane.xlu0 %929
    %v931 = vmul.f32 %v926, 0.015625
    %v932 = vmul.f32 %v930, 0.015625
    %v933 = vsub.f32 %v893, %v931
    %v934 = vsub.f32 %v898, %v932
    %v935 = vmul.f32 %v933, %v622
    %v936 = vmul.f32 %v934, %v622
    %v937 = vmul.f32 %v935, %v935
    %v938 = vmul.f32 %v936, %v936
    %939 = vadd.xlane.f32.xlu0 %v937
    %v940 = vpop.xlane.xlu0 %939
    %v941 = vsel %vm927, %v938, 0.0
    %942 = vadd.xlane.f32.xlu0 %v941
    %v943 = vpop.xlane.xlu0 %942
    %v944 = vmul.f32 %v940, 0.015625
    %v945 = vmul.f32 %v943, 0.015625
    %v946 = vadd.f32 %v944, 1e-06
    %v947 = vadd.f32 %v945, 1e-06
    %v948 = vrsqrt.pop %v946
    %v949 = vrsqrt.pop %v947
    %v950 = vmul.f32 %v935, %v948
    %v951 = vmul.f32 %v936, %v949
    %v952 = vlaneseq
    %v953 = vshrl.u32 %v952, 7
    %v954 = vsub.s32 0, %v953
    %v955 = vrot.slane %v921, %v954
    %v956 = vmul.f32 %v950, %v955
    %v957 = vmul.f32 %v951, %v955
    %v958 = vlaneseq
    %v959 = vshrl.u32 %v958, 7
    %v960 = vsub.s32 0, %v959
    %v961 = vrot.slane %v922, %v960
    %v962 = vadd.f32 %v956, %v961
    %v963 = vadd.f32 %v957, %v961
    %v964 = vld [vmem:[#allocation2] sm:$0xff]
    %v965 = vld [vmem:[#allocation2 + $0x8] sm:$0xff]
    %v966 = vld [vmem:[#allocation2 + $0x10] sm:$0xff]
    %v967 = vld [vmem:[#allocation2 + $0x18] sm:$0xff]
    %v968 = vld [vmem:[#allocation2 + $0x20] sm:$0xff]
    %v969 = vld [vmem:[#allocation2 + $0x28] sm:$0xff]
    %v970 = vld [vmem:[#allocation2 + $0x30] sm:$0xff]
    %v971 = vld [vmem:[#allocation2 + $0x38] sm:$0xff]
    %v972 = vld [vmem:[#allocation2 + $0x40] sm:$0xff]
    %v973 = vld [vmem:[#allocation2 + $0x48] sm:$0xff]
    %v974 = vld [vmem:[#allocation2 + $0x50] sm:$0xff]
    %v975 = vld [vmem:[#allocation2 + $0x58] sm:$0xff]
    %v976 = vld [vmem:[#allocation2 + $0x60] sm:$0xff]
    %v977 = vld [vmem:[#allocation2 + $0x68] sm:$0xff]
    %v978 = vld [vmem:[#allocation2 + $0x70] sm:$0xff]
    %v979 = vld [vmem:[#allocation2 + $0x78] sm:$0xff]
    %v980 = vld [vmem:[#allocation2 + $0x402] sm:$0x1]
    %v981 = vlaneseq
    %v982 = vshrl.u32 %v981, 7
    %v983 = vsub.s32 0, %v982
    %v984 = vrot.slane %v980, %v983
    %985 = vmatprep.subr.mxu0 0.0
    %986 = vmatpush1.msra.mxu0 %v979
    %987 = vmatprep.subr.mxu0 0.0
    %988 = vmatpush1.msra.mxu0 %v978
    %989 = vmatprep.subr.mxu0 0.0
    %990 = vmatpush1.msra.mxu0 %v977
    %991 = vmatprep.subr.mxu0 0.0
    %992 = vmatpush1.msra.mxu0 %v976
    %993 = vmatprep.subr.mxu0 0.0
    %994 = vmatpush1.msra.mxu0 %v975
    %995 = vmatprep.subr.mxu0 0.0
    %996 = vmatpush1.msra.mxu0 %v974
    %997 = vmatprep.subr.mxu0 0.0
    %998 = vmatpush1.msra.mxu0 %v973
    %999 = vmatprep.subr.mxu0 0.0
    %1000 = vmatpush1.msra.mxu0 %v972
    %1001 = vmatprep.subr.mxu0 0.0
    %1002 = vmatpush1.msra.mxu0 %v971
    %1003 = vmatprep.subr.mxu0 0.0
    %1004 = vmatpush1.msra.mxu0 %v970
    %1005 = vmatprep.subr.mxu0 0.0
    %1006 = vmatpush1.msra.mxu0 %v969
    %1007 = vmatprep.subr.mxu0 0.0
    %1008 = vmatpush1.msra.mxu0 %v968
    %1009 = vmatprep.subr.mxu0 0.0
    %1010 = vmatpush1.msra.mxu0 %v967
    %1011 = vmatprep.subr.mxu0 0.0
    %1012 = vmatpush1.msra.mxu0 %v966
    %1013 = vmatprep.subr.mxu0 0.0
    %1014 = vmatpush1.msra.mxu0 %v965
    %1015 = vmatprep.subr.mxu0 0.0
    %1016 = vmatpush1.msra.mxu0 %v964
    %1017 = vmatprep.subr.mxu0 0.0
    %1018 = vmatpush2.msra.mxu0 0.0
    %1019 = vmatprep.subr.mxu0 0.0
    %1020 = vmatpush2.msra.mxu0 0.0
    %1021 = vmatprep.subr.mxu0 0.0
    %1022 = vmatpush2.msra.mxu0 0.0
    %1023 = vmatprep.subr.mxu0 0.0
    %1024 = vmatpush2.msra.mxu0 0.0
    %1025 = vmatprep.subr.mxu0 0.0
    %1026 = vmatpush2.msra.mxu0 0.0
    %1027 = vmatprep.subr.mxu0 0.0
    %1028 = vmatpush2.msra.mxu0 0.0
    %1029 = vmatprep.subr.mxu0 0.0
    %1030 = vmatpush2.msra.mxu0 0.0
    %1031 = vmatprep.subr.mxu0 0.0
    %1032 = vmatpush2.msra.mxu0 0.0
    %1033 = vmatprep.subr.mxu0 0.0
    %1034 = vmatpush2.msra.mxu0 0.0
    %1035 = vmatprep.subr.mxu0 0.0
    %1036 = vmatpush2.msra.mxu0 0.0
    %1037 = vmatprep.subr.mxu0 0.0
    %1038 = vmatpush2.msra.mxu0 0.0
    %1039 = vmatprep.subr.mxu0 0.0
    %1040 = vmatpush2.msra.mxu0 0.0
    %1041 = vmatprep.subr.mxu0 0.0
    %1042 = vmatpush2.msra.mxu0 0.0
    %1043 = vmatprep.subr.mxu0 0.0
    %1044 = vmatpush2.msra.mxu0 0.0
    %1045 = vmatprep.subr.mxu0 0.0
    %1046 = vmatpush2.msra.mxu0 0.0
    %1047 = vmatprep.subr.mxu0 0.0
    %1048 = vmatpush2.msra.mxu0 0.0
    %1049 = vmatprep.mubr.f32.mxu0 0.0
    %1050 = vmatmul.mubr.f32.gmra.mxu0 %v962
    %v1051 = vpop.f32.mrf.mxu0
    %v1052 = vadd.f32 %v984, %v1051
    %v1053 = vpop.f32.mrf.mxu0
    %1054 = vmatprep.mubr.f32.mxu0 0.0
    %1055 = vmatmul.mubr.f32.gmra.mxu0 %v963
    %v1056 = vpop.f32.mrf.mxu0
    %v1057 = vadd.f32 %v984, %v1056
    %v1058 = vpop.f32.mrf.mxu0
    %1059 = vdwg.mxu0
    %v1060 = vld [vmem:[#allocation2 + $0x80] sm:$0xff]
    %v1061 = vld [vmem:[#allocation2 + $0x88] sm:$0xff]
    %v1062 = vld [vmem:[#allocation2 + $0x90] sm:$0xff]
    %v1063 = vld [vmem:[#allocation2 + $0x98] sm:$0xff]
    %v1064 = vld [vmem:[#allocation2 + $0xa0] sm:$0xff]
    %v1065 = vld [vmem:[#allocation2 + $0xa8] sm:$0xff]
    %v1066 = vld [vmem:[#allocation2 + $0xb0] sm:$0xff]
    %v1067 = vld [vmem:[#allocation2 + $0xb8] sm:$0xff]
    %v1068 = vld [vmem:[#allocation2 + $0xc0] sm:$0xff]
    %v1069 = vld [vmem:[#allocation2 + $0xc8] sm:$0xff]
    %v1070 = vld [vmem:[#allocation2 + $0xd0] sm:$0xff]
    %v1071 = vld [vmem:[#allocation2 + $0xd8] sm:$0xff]
    %v1072 = vld [vmem:[#allocation2 + $0xe0] sm:$0xff]
    %v1073 = vld [vmem:[#allocation2 + $0xe8] sm:$0xff]
    %v1074 = vld [vmem:[#allocation2 + $0xf0] sm:$0xff]
    %v1075 = vld [vmem:[#allocation2 + $0xf8] sm:$0xff]
    %v1076 = vld [vmem:[#allocation2 + $0x403] sm:$0x1]
    %v1077 = vlaneseq
    %v1078 = vshrl.u32 %v1077, 7
    %v1079 = vsub.s32 0, %v1078
    %v1080 = vrot.slane %v1076, %v1079
    %1081 = vmatprep.subr.mxu0 0.0
    %1082 = vmatpush1.msra.mxu0 %v1075
    %1083 = vmatprep.subr.mxu0 0.0
    %1084 = vmatpush1.msra.mxu0 %v1074
    %1085 = vmatprep.subr.mxu0 0.0
    %1086 = vmatpush1.msra.mxu0 %v1073
    %1087 = vmatprep.subr.mxu0 0.0
    %1088 = vmatpush1.msra.mxu0 %v1072
    %1089 = vmatprep.subr.mxu0 0.0
    %1090 = vmatpush1.msra.mxu0 %v1071
    %1091 = vmatprep.subr.mxu0 0.0
    %1092 = vmatpush1.msra.mxu0 %v1070
    %1093 = vmatprep.subr.mxu0 0.0
    %1094 = vmatpush1.msra.mxu0 %v1069
    %1095 = vmatprep.subr.mxu0 0.0
    %1096 = vmatpush1.msra.mxu0 %v1068
    %1097 = vmatprep.subr.mxu0 0.0
    %1098 = vmatpush1.msra.mxu0 %v1067
    %1099 = vmatprep.subr.mxu0 0.0
    %1100 = vmatpush1.msra.mxu0 %v1066
    %1101 = vmatprep.subr.mxu0 0.0
    %1102 = vmatpush1.msra.mxu0 %v1065
    %1103 = vmatprep.subr.mxu0 0.0
    %1104 = vmatpush1.msra.mxu0 %v1064
    %1105 = vmatprep.subr.mxu0 0.0
    %1106 = vmatpush1.msra.mxu0 %v1063
    %1107 = vmatprep.subr.mxu0 0.0
    %1108 = vmatpush1.msra.mxu0 %v1062
    %1109 = vmatprep.subr.mxu0 0.0
    %1110 = vmatpush1.msra.mxu0 %v1061
    %1111 = vmatprep.subr.mxu0 0.0
    %1112 = vmatpush1.msra.mxu0 %v1060
    %1113 = vmatprep.subr.mxu0 0.0
    %1114 = vmatpush2.msra.mxu0 0.0
    %1115 = vmatprep.subr.mxu0 0.0
    %1116 = vmatpush2.msra.mxu0 0.0
    %1117 = vmatprep.subr.mxu0 0.0
    %1118 = vmatpush2.msra.mxu0 0.0
    %1119 = vmatprep.subr.mxu0 0.0
    %1120 = vmatpush2.msra.mxu0 0.0
    %1121 = vmatprep.subr.mxu0 0.0
    %1122 = vmatpush2.msra.mxu0 0.0
    %1123 = vmatprep.subr.mxu0 0.0
    %1124 = vmatpush2.msra.mxu0 0.0
    %1125 = vmatprep.subr.mxu0 0.0
    %1126 = vmatpush2.msra.mxu0 0.0
    %1127 = vmatprep.subr.mxu0 0.0
    %1128 = vmatpush2.msra.mxu0 0.0
    %1129 = vmatprep.subr.mxu0 0.0
    %1130 = vmatpush2.msra.mxu0 0.0
    %1131 = vmatprep.subr.mxu0 0.0
    %1132 = vmatpush2.msra.mxu0 0.0
    %1133 = vmatprep.subr.mxu0 0.0
    %1134 = vmatpush2.msra.mxu0 0.0
    %1135 = vmatprep.subr.mxu0 0.0
    %1136 = vmatpush2.msra.mxu0 0.0
    %1137 = vmatprep.subr.mxu0 0.0
    %1138 = vmatpush2.msra.mxu0 0.0
    %1139 = vmatprep.subr.mxu0 0.0
    %1140 = vmatpush2.msra.mxu0 0.0
    %1141 = vmatprep.subr.mxu0 0.0
    %1142 = vmatpush2.msra.mxu0 0.0
    %1143 = vmatprep.subr.mxu0 0.0
    %1144 = vmatpush2.msra.mxu0 0.0
    %1145 = vmatprep.mubr.f32.mxu0 0.0
    %1146 = vmatmul.mubr.f32.gmra.mxu0 %v962
    %v1147 = vpop.f32.mrf.mxu0
    %v1148 = vadd.f32 %v1080, %v1147
    %v1149 = vpop.f32.mrf.mxu0
    %1150 = vmatprep.mubr.f32.mxu0 0.0
    %1151 = vmatmul.mubr.f32.gmra.mxu0 %v963
    %v1152 = vpop.f32.mrf.mxu0
    %v1153 = vadd.f32 %v1080, %v1152
    %v1154 = vpop.f32.mrf.mxu0
    %1155 = vdwg.mxu0
    %v1156 = vld [vmem:[#allocation2 + $0x100] sm:$0xff]
    %v1157 = vld [vmem:[#allocation2 + $0x108] sm:$0xff]
    %v1158 = vld [vmem:[#allocation2 + $0x110] sm:$0xff]
    %v1159 = vld [vmem:[#allocation2 + $0x118] sm:$0xff]
    %v1160 = vld [vmem:[#allocation2 + $0x120] sm:$0xff]
    %v1161 = vld [vmem:[#allocation2 + $0x128] sm:$0xff]
    %v1162 = vld [vmem:[#allocation2 + $0x130] sm:$0xff]
    %v1163 = vld [vmem:[#allocation2 + $0x138] sm:$0xff]
    %v1164 = vld [vmem:[#allocation2 + $0x140] sm:$0xff]
    %v1165 = vld [vmem:[#allocation2 + $0x148] sm:$0xff]
    %v1166 = vld [vmem:[#allocation2 + $0x150] sm:$0xff]
    %v1167 = vld [vmem:[#allocation2 + $0x158] sm:$0xff]
    %v1168 = vld [vmem:[#allocation2 + $0x160] sm:$0xff]
    %v1169 = vld [vmem:[#allocation2 + $0x168] sm:$0xff]
    %v1170 = vld [vmem:[#allocation2 + $0x170] sm:$0xff]
    %v1171 = vld [vmem:[#allocation2 + $0x178] sm:$0xff]
    %v1172 = vld [vmem:[#allocation2 + $0x404] sm:$0x1]
    %v1173 = vlaneseq
    %v1174 = vshrl.u32 %v1173, 7
    %v1175 = vsub.s32 0, %v1174
    %v1176 = vrot.slane %v1172, %v1175
    %1177 = vmatprep.subr.mxu0 0.0
    %1178 = vmatpush1.msra.mxu0 %v1171
    %1179 = vmatprep.subr.mxu0 0.0
    %1180 = vmatpush1.msra.mxu0 %v1170
    %1181 = vmatprep.subr.mxu0 0.0
    %1182 = vmatpush1.msra.mxu0 %v1169
    %1183 = vmatprep.subr.mxu0 0.0
    %1184 = vmatpush1.msra.mxu0 %v1168
    %1185 = vmatprep.subr.mxu0 0.0
    %1186 = vmatpush1.msra.mxu0 %v1167
    %1187 = vmatprep.subr.mxu0 0.0
    %1188 = vmatpush1.msra.mxu0 %v1166
    %1189 = vmatprep.subr.mxu0 0.0
    %1190 = vmatpush1.msra.mxu0 %v1165
    %1191 = vmatprep.subr.mxu0 0.0
    %1192 = vmatpush1.msra.mxu0 %v1164
    %1193 = vmatprep.subr.mxu0 0.0
    %1194 = vmatpush1.msra.mxu0 %v1163
    %1195 = vmatprep.subr.mxu0 0.0
    %1196 = vmatpush1.msra.mxu0 %v1162
    %1197 = vmatprep.subr.mxu0 0.0
    %1198 = vmatpush1.msra.mxu0 %v1161
    %1199 = vmatprep.subr.mxu0 0.0
    %1200 = vmatpush1.msra.mxu0 %v1160
    %1201 = vmatprep.subr.mxu0 0.0
    %1202 = vmatpush1.msra.mxu0 %v1159
    %1203 = vmatprep.subr.mxu0 0.0
    %1204 = vmatpush1.msra.mxu0 %v1158
    %1205 = vmatprep.subr.mxu0 0.0
    %1206 = vmatpush1.msra.mxu0 %v1157
    %1207 = vmatprep.subr.mxu0 0.0
    %1208 = vmatpush1.msra.mxu0 %v1156
    %1209 = vmatprep.subr.mxu0 0.0
    %1210 = vmatpush2.msra.mxu0 0.0
    %1211 = vmatprep.subr.mxu0 0.0
    %1212 = vmatpush2.msra.mxu0 0.0
    %1213 = vmatprep.subr.mxu0 0.0
    %1214 = vmatpush2.msra.mxu0 0.0
    %1215 = vmatprep.subr.mxu0 0.0
    %1216 = vmatpush2.msra.mxu0 0.0
    %1217 = vmatprep.subr.mxu0 0.0
    %1218 = vmatpush2.msra.mxu0 0.0
    %1219 = vmatprep.subr.mxu0 0.0
    %1220 = vmatpush2.msra.mxu0 0.0
    %1221 = vmatprep.subr.mxu0 0.0
    %1222 = vmatpush2.msra.mxu0 0.0
    %1223 = vmatprep.subr.mxu0 0.0
    %1224 = vmatpush2.msra.mxu0 0.0
    %1225 = vmatprep.subr.mxu0 0.0
    %1226 = vmatpush2.msra.mxu0 0.0
    %1227 = vmatprep.subr.mxu0 0.0
    %1228 = vmatpush2.msra.mxu0 0.0
    %1229 = vmatprep.subr.mxu0 0.0
    %1230 = vmatpush2.msra.mxu0 0.0
    %1231 = vmatprep.subr.mxu0 0.0
    %1232 = vmatpush2.msra.mxu0 0.0
    %1233 = vmatprep.subr.mxu0 0.0
    %1234 = vmatpush2.msra.mxu0 0.0
    %1235 = vmatprep.subr.mxu0 0.0
    %1236 = vmatpush2.msra.mxu0 0.0
    %1237 = vmatprep.subr.mxu0 0.0
    %1238 = vmatpush2.msra.mxu0 0.0
    %1239 = vmatprep.subr.mxu0 0.0
    %1240 = vmatpush2.msra.mxu0 0.0
    %1241 = vmatprep.mubr.f32.mxu0 0.0
    %1242 = vmatmul.mubr.f32.gmra.mxu0 %v962
    %v1243 = vpop.f32.mrf.mxu0
    %v1244 = vadd.f32 %v1176, %v1243
    %v1245 = vpop.f32.mrf.mxu0
    %1246 = vmatprep.mubr.f32.mxu0 0.0
    %1247 = vmatmul.mubr.f32.gmra.mxu0 %v963
    %v1248 = vpop.f32.mrf.mxu0
    %v1249 = vadd.f32 %v1176, %v1248
    %v1250 = vpop.f32.mrf.mxu0
    %1251 = vdwg.mxu0
    %vm1252 = vcmask 80896
    %v1254 = vsel %vm1252, %v901, 0
    %v1257 = vsel %vm1252, %v902, 0
    %v1260 = vsel %vm1252, %v903, 0
    %v1263 = vsel %vm1252, %v904, 0
    %v1266 = vsel %vm1252, %v905, 0
    %v1269 = vsel %vm927, %v1057, 0
    %1271 = vmatprep.subr.mxu0 0.0
    %1272 = vmatpush1.msra.mxu0 0.0
    %1273 = vmatprep.subr.mxu0 0.0
    %1274 = vmatpush1.msra.mxu0 0.0
    %1275 = vmatprep.subr.mxu0 0.0
    %1276 = vmatpush1.msra.mxu0 0.0
    %1277 = vmatprep.subr.mxu0 0.0
    %1278 = vmatpush1.msra.mxu0 0.0
    %1279 = vmatprep.subr.mxu0 0.0
    %1280 = vmatpush1.msra.mxu0 0.0
    %1281 = vmatprep.subr.mxu0 0.0
    %1282 = vmatpush1.msra.mxu0 0.0
    %1283 = vmatprep.subr.mxu0 0.0
    %1284 = vmatpush1.msra.mxu0 0.0
    %1285 = vmatprep.subr.mxu0 0.0
    %1286 = vmatpush1.msra.mxu0 0.0
    %1287 = vmatprep.subr.mxu0 0.0
    %1288 = vmatpush1.msra.mxu0 0.0
    %1289 = vmatprep.subr.mxu0 0.0
    %1290 = vmatpush1.msra.mxu0 0.0
    %1291 = vmatprep.subr.mxu0 0.0
    %1292 = vmatpush1.msra.mxu0 0.0
    %1293 = vmatprep.subr.mxu0 0.0
    %1294 = vmatpush1.msra.mxu0 0.0
    %1295 = vmatprep.subr.mxu0 0.0
    %1296 = vmatpush1.msra.mxu0 0.0
    %1297 = vmatprep.subr.mxu0 0.0
    %1298 = vmatpush1.msra.mxu0 0.0
    %1299 = vmatprep.subr.mxu0 0.0
    %1300 = vmatpush1.msra.mxu0 %v1269
    %1301 = vmatprep.subr.mxu0 0.0
    %1302 = vmatpush1.msra.mxu0 %v1052
    %1303 = vmatprep.subr.mxu0 0.0
    %1304 = vmatpush2.msra.mxu0 0.0
    %1305 = vmatprep.subr.mxu0 0.0
    %1306 = vmatpush2.msra.mxu0 0.0
    %1307 = vmatprep.subr.mxu0 0.0
    %1308 = vmatpush2.msra.mxu0 0.0
    %1309 = vmatprep.subr.mxu0 0.0
    %1310 = vmatpush2.msra.mxu0 0.0
    %1311 = vmatprep.subr.mxu0 0.0
    %1312 = vmatpush2.msra.mxu0 0.0
    %1313 = vmatprep.subr.mxu0 0.0
    %1314 = vmatpush2.msra.mxu0 0.0
    %1315 = vmatprep.subr.mxu0 0.0
    %1316 = vmatpush2.msra.mxu0 0.0
    %1317 = vmatprep.subr.mxu0 0.0
    %1318 = vmatpush2.msra.mxu0 0.0
    %1319 = vmatprep.subr.mxu0 0.0
    %1320 = vmatpush2.msra.mxu0 0.0
    %1321 = vmatprep.subr.mxu0 0.0
    %1322 = vmatpush2.msra.mxu0 0.0
    %1323 = vmatprep.subr.mxu0 0.0
    %1324 = vmatpush2.msra.mxu0 0.0
    %1325 = vmatprep.subr.mxu0 0.0
    %1326 = vmatpush2.msra.mxu0 0.0
    %1327 = vmatprep.subr.mxu0 0.0
    %1328 = vmatpush2.msra.mxu0 0.0
    %1329 = vmatprep.subr.mxu0 0.0
    %1330 = vmatpush2.msra.mxu0 0.0
    %1331 = vmatprep.subr.mxu0 0.0
    %1332 = vmatpush2.msra.mxu0 0.0
    %1333 = vmatprep.subr.mxu0 0.0
    %1334 = vmatpush2.msra.mxu0 0.0
    %1335 = vmatprep.mubr.f32.mxu0 0.0
    %1336 = vmatmul.mubr.f32.gmra.mxu0 %v1254
    %v1337 = vpop.f32.mrf.mxu0
    %v1338 = vadd.f32 0.0, %v1337
    %v1339 = vpop.f32.mrf.mxu0
    %1340 = vmatprep.mubr.f32.mxu0 0.0
    %1341 = vmatmul.mubr.f32.gmra.mxu0 %v1257
    %v1342 = vpop.f32.mrf.mxu0
    %v1343 = vadd.f32 0.0, %v1342
    %v1344 = vpop.f32.mrf.mxu0
    %1345 = vmatprep.mubr.f32.mxu0 0.0
    %1346 = vmatmul.mubr.f32.gmra.mxu0 %v1260
    %v1347 = vpop.f32.mrf.mxu0
    %v1348 = vadd.f32 0.0, %v1347
    %v1349 = vpop.f32.mrf.mxu0
    %1350 = vmatprep.mubr.f32.mxu0 0.0
    %1351 = vmatmul.mubr.f32.gmra.mxu0 %v1263
    %v1352 = vpop.f32.mrf.mxu0
    %v1353 = vadd.f32 0.0, %v1352
    %v1354 = vpop.f32.mrf.mxu0
    %1355 = vmatprep.mubr.f32.mxu0 0.0
    %1356 = vmatmul.mubr.f32.gmra.mxu0 %v1266
    %v1357 = vpop.f32.mrf.mxu0
    %v1358 = vadd.f32 0.0, %v1357
    %v1359 = vpop.f32.mrf.mxu0
    %1360 = vdwg.mxu0
    %v1361 = vmul.f32 %v1338, %v908
    %v1362 = vmul.f32 %v1343, %v909
    %v1363 = vmul.f32 %v1348, %v910
    %v1364 = vmul.f32 %v1353, %v911
    %v1365 = vmul.f32 %v1358, %v912
    %v1367 = vsel %vm927, %v1153, 0
    %1369 = vmatprep.subr.mxu0 0.0
    %1370 = vmatpush1.msra.mxu0 0.0
    %1371 = vmatprep.subr.mxu0 0.0
    %1372 = vmatpush1.msra.mxu0 0.0
    %1373 = vmatprep.subr.mxu0 0.0
    %1374 = vmatpush1.msra.mxu0 0.0
    %1375 = vmatprep.subr.mxu0 0.0
    %1376 = vmatpush1.msra.mxu0 0.0
    %1377 = vmatprep.subr.mxu0 0.0
    %1378 = vmatpush1.msra.mxu0 0.0
    %1379 = vmatprep.subr.mxu0 0.0
    %1380 = vmatpush1.msra.mxu0 0.0
    %1381 = vmatprep.subr.mxu0 0.0
    %1382 = vmatpush1.msra.mxu0 0.0
    %1383 = vmatprep.subr.mxu0 0.0
    %1384 = vmatpush1.msra.mxu0 0.0
    %1385 = vmatprep.subr.mxu0 0.0
    %1386 = vmatpush1.msra.mxu0 0.0
    %1387 = vmatprep.subr.mxu0 0.0
    %1388 = vmatpush1.msra.mxu0 0.0
    %1389 = vmatprep.subr.mxu0 0.0
    %1390 = vmatpush1.msra.mxu0 0.0
    %1391 = vmatprep.subr.mxu0 0.0
    %1392 = vmatpush1.msra.mxu0 0.0
    %1393 = vmatprep.subr.mxu0 0.0
    %1394 = vmatpush1.msra.mxu0 0.0
    %1395 = vmatprep.subr.mxu0 0.0
    %1396 = vmatpush1.msra.mxu0 0.0
    %1397 = vmatprep.subr.mxu0 0.0
    %1398 = vmatpush1.msra.mxu0 %v1367
    %1399 = vmatprep.subr.mxu0 0.0
    %1400 = vmatpush1.msra.mxu0 %v1148
    %1401 = vmatprep.subr.mxu0 0.0
    %1402 = vmatpush2.msra.mxu0 0.0
    %1403 = vmatprep.subr.mxu0 0.0
    %1404 = vmatpush2.msra.mxu0 0.0
    %1405 = vmatprep.subr.mxu0 0.0
    %1406 = vmatpush2.msra.mxu0 0.0
    %1407 = vmatprep.subr.mxu0 0.0
    %1408 = vmatpush2.msra.mxu0 0.0
    %1409 = vmatprep.subr.mxu0 0.0
    %1410 = vmatpush2.msra.mxu0 0.0
    %1411 = vmatprep.subr.mxu0 0.0
    %1412 = vmatpush2.msra.mxu0 0.0
    %1413 = vmatprep.subr.mxu0 0.0
    %1414 = vmatpush2.msra.mxu0 0.0
    %1415 = vmatprep.subr.mxu0 0.0
    %1416 = vmatpush2.msra.mxu0 0.0
    %1417 = vmatprep.subr.mxu0 0.0
    %1418 = vmatpush2.msra.mxu0 0.0
    %1419 = vmatprep.subr.mxu0 0.0
    %1420 = vmatpush2.msra.mxu0 0.0
    %1421 = vmatprep.subr.mxu0 0.0
    %1422 = vmatpush2.msra.mxu0 0.0
    %1423 = vmatprep.subr.mxu0 0.0
    %1424 = vmatpush2.msra.mxu0 0.0
    %1425 = vmatprep.subr.mxu0 0.0
    %1426 = vmatpush2.msra.mxu0 0.0
    %1427 = vmatprep.subr.mxu0 0.0
    %1428 = vmatpush2.msra.mxu0 0.0
    %1429 = vmatprep.subr.mxu0 0.0
    %1430 = vmatpush2.msra.mxu0 0.0
    %1431 = vmatprep.subr.mxu0 0.0
    %1432 = vmatpush2.msra.mxu0 0.0
    %1433 = vmatprep.mubr.f32.mxu0 0.0
    %1434 = vmatmul.mubr.f32.gmra.mxu0 %v1254
    %v1435 = vpop.f32.mrf.mxu0
    %v1436 = vadd.f32 0.0, %v1435
    %v1437 = vpop.f32.mrf.mxu0
    %1438 = vmatprep.mubr.f32.mxu0 0.0
    %1439 = vmatmul.mubr.f32.gmra.mxu0 %v1257
    %v1440 = vpop.f32.mrf.mxu0
    %v1441 = vadd.f32 0.0, %v1440
    %v1442 = vpop.f32.mrf.mxu0
    %1443 = vmatprep.mubr.f32.mxu0 0.0
    %1444 = vmatmul.mubr.f32.gmra.mxu0 %v1260
    %v1445 = vpop.f32.mrf.mxu0
    %v1446 = vadd.f32 0.0, %v1445
    %v1447 = vpop.f32.mrf.mxu0
    %1448 = vmatprep.mubr.f32.mxu0 0.0
    %1449 = vmatmul.mubr.f32.gmra.mxu0 %v1263
    %v1450 = vpop.f32.mrf.mxu0
    %v1451 = vadd.f32 0.0, %v1450
    %v1452 = vpop.f32.mrf.mxu0
    %1453 = vmatprep.mubr.f32.mxu0 0.0
    %1454 = vmatmul.mubr.f32.gmra.mxu0 %v1266
    %v1455 = vpop.f32.mrf.mxu0
    %v1456 = vadd.f32 0.0, %v1455
    %v1457 = vpop.f32.mrf.mxu0
    %1458 = vdwg.mxu0
    %v1460 = vsel %vm927, %v1249, 0
    %1462 = vmatprep.subr.mxu0 0.0
    %1463 = vmatpush1.msra.mxu0 0.0
    %1464 = vmatprep.subr.mxu0 0.0
    %1465 = vmatpush1.msra.mxu0 0.0
    %1466 = vmatprep.subr.mxu0 0.0
    %1467 = vmatpush1.msra.mxu0 0.0
    %1468 = vmatprep.subr.mxu0 0.0
    %1469 = vmatpush1.msra.mxu0 0.0
    %1470 = vmatprep.subr.mxu0 0.0
    %1471 = vmatpush1.msra.mxu0 0.0
    %1472 = vmatprep.subr.mxu0 0.0
    %1473 = vmatpush1.msra.mxu0 0.0
    %1474 = vmatprep.subr.mxu0 0.0
    %1475 = vmatpush1.msra.mxu0 0.0
    %1476 = vmatprep.subr.mxu0 0.0
    %1477 = vmatpush1.msra.mxu0 0.0
    %1478 = vmatprep.subr.mxu0 0.0
    %1479 = vmatpush1.msra.mxu0 0.0
    %1480 = vmatprep.subr.mxu0 0.0
    %1481 = vmatpush1.msra.mxu0 0.0
    %1482 = vmatprep.subr.mxu0 0.0
    %1483 = vmatpush1.msra.mxu0 0.0
    %1484 = vmatprep.subr.mxu0 0.0
    %1485 = vmatpush1.msra.mxu0 0.0
    %1486 = vmatprep.subr.mxu0 0.0
    %1487 = vmatpush1.msra.mxu0 0.0
    %1488 = vmatprep.subr.mxu0 0.0
    %1489 = vmatpush1.msra.mxu0 0.0
    %1490 = vmatprep.subr.mxu0 0.0
    %1491 = vmatpush1.msra.mxu0 %v1460
    %1492 = vmatprep.subr.mxu0 0.0
    %1493 = vmatpush1.msra.mxu0 %v1244
    %1494 = vmatprep.subr.mxu0 0.0
    %1495 = vmatpush2.msra.mxu0 0.0
    %1496 = vmatprep.subr.mxu0 0.0
    %1497 = vmatpush2.msra.mxu0 0.0
    %1498 = vmatprep.subr.mxu0 0.0
    %1499 = vmatpush2.msra.mxu0 0.0
    %1500 = vmatprep.subr.mxu0 0.0
    %1501 = vmatpush2.msra.mxu0 0.0
    %1502 = vmatprep.subr.mxu0 0.0
    %1503 = vmatpush2.msra.mxu0 0.0
    %1504 = vmatprep.subr.mxu0 0.0
    %1505 = vmatpush2.msra.mxu0 0.0
    %1506 = vmatprep.subr.mxu0 0.0
    %1507 = vmatpush2.msra.mxu0 0.0
    %1508 = vmatprep.subr.mxu0 0.0
    %1509 = vmatpush2.msra.mxu0 0.0
    %1510 = vmatprep.subr.mxu0 0.0
    %1511 = vmatpush2.msra.mxu0 0.0
    %1512 = vmatprep.subr.mxu0 0.0
    %1513 = vmatpush2.msra.mxu0 0.0
    %1514 = vmatprep.subr.mxu0 0.0
    %1515 = vmatpush2.msra.mxu0 0.0
    %1516 = vmatprep.subr.mxu0 0.0
    %1517 = vmatpush2.msra.mxu0 0.0
    %1518 = vmatprep.subr.mxu0 0.0
    %1519 = vmatpush2.msra.mxu0 0.0
    %1520 = vmatprep.subr.mxu0 0.0
    %1521 = vmatpush2.msra.mxu0 0.0
    %1522 = vmatprep.subr.mxu0 0.0
    %1523 = vmatpush2.msra.mxu0 0.0
    %1524 = vmatprep.subr.mxu0 0.0
    %1525 = vmatpush2.msra.mxu0 0.0
    %1526 = vmatprep.mubr.f32.mxu0 0.0
    %1527 = vmatmul.mubr.f32.gmra.mxu0 %v1254
    %v1528 = vpop.f32.mrf.mxu0
    %v1529 = vadd.f32 0.0, %v1528
    %v1530 = vpop.f32.mrf.mxu0
    %1531 = vmatprep.mubr.f32.mxu0 0.0
    %1532 = vmatmul.mubr.f32.gmra.mxu0 %v1257
    %v1533 = vpop.f32.mrf.mxu0
    %v1534 = vadd.f32 0.0, %v1533
    %v1535 = vpop.f32.mrf.mxu0
    %1536 = vmatprep.mubr.f32.mxu0 0.0
    %1537 = vmatmul.mubr.f32.gmra.mxu0 %v1260
    %v1538 = vpop.f32.mrf.mxu0
    %v1539 = vadd.f32 0.0, %v1538
    %v1540 = vpop.f32.mrf.mxu0
    %1541 = vmatprep.mubr.f32.mxu0 0.0
    %1542 = vmatmul.mubr.f32.gmra.mxu0 %v1263
    %v1543 = vpop.f32.mrf.mxu0
    %v1544 = vadd.f32 0.0, %v1543
    %v1545 = vpop.f32.mrf.mxu0
    %1546 = vmatprep.mubr.f32.mxu0 0.0
    %1547 = vmatmul.mubr.f32.gmra.mxu0 %v1266
    %v1548 = vpop.f32.mrf.mxu0
    %v1549 = vadd.f32 0.0, %v1548
    %v1550 = vpop.f32.mrf.mxu0
    %1551 = vdwg.mxu0
    %v1552 = vmul.f32 %v1529, %v908
    %v1553 = vmul.f32 %v1534, %v909
    %v1554 = vmul.f32 %v1539, %v910
    %v1555 = vmul.f32 %v1544, %v911
    %v1556 = vmul.f32 %v1549, %v912
    %1557 = vmatprep.subr.mxu0 0.0
    %1558 = vmatpush1.xpose.msra.mxu0 0.0
    %1559 = vmatprep.subr.mxu0 0.0
    %1560 = vmatpush1.xpose.msra.mxu0 0.0
    %1561 = vmatprep.subr.mxu0 0.0
    %1562 = vmatpush1.xpose.msra.mxu0 0.0
    %1563 = vmatprep.subr.mxu0 0.0
    %1564 = vmatpush1.xpose.msra.mxu0 0.0
    %1565 = vmatprep.subr.mxu0 0.0
    %1566 = vmatpush1.xpose.msra.mxu0 0.0
    %1567 = vmatprep.subr.mxu0 0.0
    %1568 = vmatpush1.xpose.msra.mxu0 0.0
    %1569 = vmatprep.subr.mxu0 0.0
    %1570 = vmatpush1.xpose.msra.mxu0 0.0
    %1571 = vmatprep.subr.mxu0 0.0
    %1572 = vmatpush1.xpose.msra.mxu0 0.0
    %1573 = vmatprep.subr.mxu0 0.0
    %1574 = vmatpush1.xpose.msra.mxu0 0.0
    %1575 = vmatprep.subr.mxu0 0.0
    %1576 = vmatpush1.xpose.msra.mxu0 0.0
    %1577 = vmatprep.subr.mxu0 0.0
    %1578 = vmatpush1.xpose.msra.mxu0 0.0
    %1579 = vmatprep.subr.mxu0 0.0
    %1580 = vmatpush1.xpose.msra.mxu0 %v1456
    %1581 = vmatprep.subr.mxu0 0.0
    %1582 = vmatpush1.xpose.msra.mxu0 %v1451
    %1583 = vmatprep.subr.mxu0 0.0
    %1584 = vmatpush1.xpose.msra.mxu0 %v1446
    %1585 = vmatprep.subr.mxu0 0.0
    %1586 = vmatpush1.xpose.msra.mxu0 %v1441
    %1587 = vmatprep.subr.mxu0 0.0
    %1588 = vmatpush1.xpose.msra.mxu0 %v1436
    %1589 = vmatprep.subr.mxu0 0.0
    %1590 = vmatpush2.xpose.msra.mxu0 0.0
    %1591 = vmatprep.subr.mxu0 0.0
    %1592 = vmatpush2.xpose.msra.mxu0 0.0
    %1593 = vmatprep.subr.mxu0 0.0
    %1594 = vmatpush2.xpose.msra.mxu0 0.0
    %1595 = vmatprep.subr.mxu0 0.0
    %1596 = vmatpush2.xpose.msra.mxu0 0.0
    %1597 = vmatprep.subr.mxu0 0.0
    %1598 = vmatpush2.xpose.msra.mxu0 0.0
    %1599 = vmatprep.subr.mxu0 0.0
    %1600 = vmatpush2.xpose.msra.mxu0 0.0
    %1601 = vmatprep.subr.mxu0 0.0
    %1602 = vmatpush2.xpose.msra.mxu0 0.0
    %1603 = vmatprep.subr.mxu0 0.0
    %1604 = vmatpush2.xpose.msra.mxu0 0.0
    %1605 = vmatprep.subr.mxu0 0.0
    %1606 = vmatpush2.xpose.msra.mxu0 0.0
    %1607 = vmatprep.subr.mxu0 0.0
    %1608 = vmatpush2.xpose.msra.mxu0 0.0
    %1609 = vmatprep.subr.mxu0 0.0
    %1610 = vmatpush2.xpose.msra.mxu0 0.0
    %1611 = vmatprep.subr.mxu0 0.0
    %1612 = vmatpush2.xpose.msra.mxu0 0.0
    %1613 = vmatprep.subr.mxu0 0.0
    %1614 = vmatpush2.xpose.msra.mxu0 0.0
    %1615 = vmatprep.subr.mxu0 0.0
    %1616 = vmatpush2.xpose.msra.mxu0 0.0
    %1617 = vmatprep.subr.mxu0 0.0
    %1618 = vmatpush2.xpose.msra.mxu0 0.0
    %1619 = vmatprep.subr.mxu0 0.0
    %1620 = vmatpush2.xpose.msra.mxu0 0.0
    %1621 = vmatprep.mubr.f32.mxu0 0.0
    %1622 = vmatmul.mubr.f32.gmra.mxu0 %v1361
    %v1623 = vpop.f32.mrf.mxu0
    %v1624 = vadd.f32 %v913, %v1623
    %v1625 = vpop.f32.mrf.mxu0
    %1626 = vmatprep.mubr.f32.mxu0 0.0
    %1627 = vmatmul.mubr.f32.gmra.mxu0 %v1362
    %v1628 = vpop.f32.mrf.mxu0
    %v1629 = vadd.f32 %v914, %v1628
    %v1630 = vpop.f32.mrf.mxu0
    %1631 = vmatprep.mubr.f32.mxu0 0.0
    %1632 = vmatmul.mubr.f32.gmra.mxu0 %v1363
    %v1633 = vpop.f32.mrf.mxu0
    %v1634 = vadd.f32 %v915, %v1633
    %v1635 = vpop.f32.mrf.mxu0
    %1636 = vmatprep.mubr.f32.mxu0 0.0
    %1637 = vmatmul.mubr.f32.gmra.mxu0 %v1364
    %v1638 = vpop.f32.mrf.mxu0
    %v1639 = vadd.f32 %v916, %v1638
    %v1640 = vpop.f32.mrf.mxu0
    %1641 = vmatprep.mubr.f32.mxu0 0.0
    %1642 = vmatmul.mubr.f32.gmra.mxu0 %v1365
    %v1643 = vpop.f32.mrf.mxu0
    %v1644 = vadd.f32 %v917, %v1643
    %v1645 = vpop.f32.mrf.mxu0
    %1646 = vdwg.mxu0
    %vm1647 = vcmask 326656
    %v1648 = vsel %vm1647, %v1624, -inf
    %1649 = vmax.xlane.f32.xlu0 %v1648
    %v1650 = vpop.xlane.xlu0 %1649
    %v1651 = vsel %vm1647, %v1629, -inf
    %1652 = vmax.xlane.f32.xlu0 %v1651
    %v1653 = vpop.xlane.xlu0 %1652
    %v1654 = vsel %vm1647, %v1634, -inf
    %1655 = vmax.xlane.f32.xlu0 %v1654
    %v1656 = vpop.xlane.xlu0 %1655
    %v1657 = vsel %vm1647, %v1639, -inf
    %1658 = vmax.xlane.f32.xlu0 %v1657
    %v1659 = vpop.xlane.xlu0 %1658
    %v1660 = vsel %vm1647, %v1644, -inf
    %1661 = vmax.xlane.f32.xlu0 %v1660
    %v1662 = vpop.xlane.xlu0 %1661
    %v1663 = vsub.f32 %v1624, %v1650
    %v1664 = vsub.f32 %v1629, %v1653
    %v1665 = vsub.f32 %v1634, %v1656
    %v1666 = vsub.f32 %v1639, %v1659
    %v1667 = vsub.f32 %v1644, %v1662
    %v1668 = vmul.f32 %v1663, 1.442695
    %v1669 = vpow.pop %v1668
    %v1670 = vmul.f32 %v1664, 1.442695
    %v1671 = vpow.pop %v1670
    %v1672 = vmul.f32 %v1665, 1.442695
    %v1673 = vpow.pop %v1672
    %v1674 = vmul.f32 %v1666, 1.442695
    %v1675 = vpow.pop %v1674
    %v1676 = vmul.f32 %v1667, 1.442695
    %v1677 = vpow.pop %v1676
    %v1678 = vsel %vm1647, %v1669, 0.0
    %1679 = vadd.xlane.f32.xlu0 %v1678
    %v1680 = vpop.xlane.xlu0 %1679
    %v1681 = vsel %vm1647, %v1671, 0.0
    %1682 = vadd.xlane.f32.xlu0 %v1681
    %v1683 = vpop.xlane.xlu0 %1682
    %v1684 = vsel %vm1647, %v1673, 0.0
    %1685 = vadd.xlane.f32.xlu0 %v1684
    %v1686 = vpop.xlane.xlu0 %1685
    %v1687 = vsel %vm1647, %v1675, 0.0
    %1688 = vadd.xlane.f32.xlu0 %v1687
    %v1689 = vpop.xlane.xlu0 %1688
    %v1690 = vsel %vm1647, %v1677, 0.0
    %1691 = vadd.xlane.f32.xlu0 %v1690
    %v1692 = vpop.xlane.xlu0 %1691
    %v1693 = vrcp.pop %v1680
    %v1694 = vrcp.pop %v1683
    %v1695 = vrcp.pop %v1686
    %v1696 = vrcp.pop %v1689
    %v1697 = vrcp.pop %v1692
    %v1698 = vmul.f32 %v1669, %v1693
    %v1699 = vmul.f32 %v1671, %v1694
    %v1700 = vmul.f32 %v1673, %v1695
    %v1701 = vmul.f32 %v1675, %v1696
    %v1702 = vmul.f32 %v1677, %v1697
    %v1704 = vsel %vm1647, %v1698, 0
    %v1707 = vsel %vm1647, %v1699, 0
    %v1710 = vsel %vm1647, %v1700, 0
    %v1713 = vsel %vm1647, %v1701, 0
    %v1716 = vsel %vm1647, %v1702, 0
    %1718 = vmatprep.subr.mxu0 0.0
    %1719 = vmatpush1.msra.mxu0 0.0
    %1720 = vmatprep.subr.mxu0 0.0
    %1721 = vmatpush1.msra.mxu0 0.0
    %1722 = vmatprep.subr.mxu0 0.0
    %1723 = vmatpush1.msra.mxu0 0.0
    %1724 = vmatprep.subr.mxu0 0.0
    %1725 = vmatpush1.msra.mxu0 0.0
    %1726 = vmatprep.subr.mxu0 0.0
    %1727 = vmatpush1.msra.mxu0 0.0
    %1728 = vmatprep.subr.mxu0 0.0
    %1729 = vmatpush1.msra.mxu0 0.0
    %1730 = vmatprep.subr.mxu0 0.0
    %1731 = vmatpush1.msra.mxu0 0.0
    %1732 = vmatprep.subr.mxu0 0.0
    %1733 = vmatpush1.msra.mxu0 0.0
    %1734 = vmatprep.subr.mxu0 0.0
    %1735 = vmatpush1.msra.mxu0 0.0
    %1736 = vmatprep.subr.mxu0 0.0
    %1737 = vmatpush1.msra.mxu0 0.0
    %1738 = vmatprep.subr.mxu0 0.0
    %1739 = vmatpush1.msra.mxu0 0.0
    %1740 = vmatprep.subr.mxu0 0.0
    %1741 = vmatpush1.msra.mxu0 %v1556
    %1742 = vmatprep.subr.mxu0 0.0
    %1743 = vmatpush1.msra.mxu0 %v1555
    %1744 = vmatprep.subr.mxu0 0.0
    %1745 = vmatpush1.msra.mxu0 %v1554
    %1746 = vmatprep.subr.mxu0 0.0
    %1747 = vmatpush1.msra.mxu0 %v1553
    %1748 = vmatprep.subr.mxu0 0.0
    %1749 = vmatpush1.msra.mxu0 %v1552
    %1750 = vmatprep.subr.mxu0 0.0
    %1751 = vmatpush2.msra.mxu0 0.0
    %1752 = vmatprep.subr.mxu0 0.0
    %1753 = vmatpush2.msra.mxu0 0.0
    %1754 = vmatprep.subr.mxu0 0.0
    %1755 = vmatpush2.msra.mxu0 0.0
    %1756 = vmatprep.subr.mxu0 0.0
    %1757 = vmatpush2.msra.mxu0 0.0
    %1758 = vmatprep.subr.mxu0 0.0
    %1759 = vmatpush2.msra.mxu0 0.0
    %1760 = vmatprep.subr.mxu0 0.0
    %1761 = vmatpush2.msra.mxu0 0.0
    %1762 = vmatprep.subr.mxu0 0.0
    %1763 = vmatpush2.msra.mxu0 0.0
    %1764 = vmatprep.subr.mxu0 0.0
    %1765 = vmatpush2.msra.mxu0 0.0
    %1766 = vmatprep.subr.mxu0 0.0
    %1767 = vmatpush2.msra.mxu0 0.0
    %1768 = vmatprep.subr.mxu0 0.0
    %1769 = vmatpush2.msra.mxu0 0.0
    %1770 = vmatprep.subr.mxu0 0.0
    %1771 = vmatpush2.msra.mxu0 0.0
    %1772 = vmatprep.subr.mxu0 0.0
    %1773 = vmatpush2.msra.mxu0 0.0
    %1774 = vmatprep.subr.mxu0 0.0
    %1775 = vmatpush2.msra.mxu0 0.0
    %1776 = vmatprep.subr.mxu0 0.0
    %1777 = vmatpush2.msra.mxu0 0.0
    %1778 = vmatprep.subr.mxu0 0.0
    %1779 = vmatpush2.msra.mxu0 0.0
    %1780 = vmatprep.subr.mxu0 0.0
    %1781 = vmatpush2.msra.mxu0 0.0
    %1782 = vmatprep.mubr.f32.mxu0 0.0
    %1783 = vmatmul.mubr.f32.gmra.mxu0 %v1704
    %v1784 = vpop.f32.mrf.mxu0
    %v1785 = vadd.f32 0.0, %v1784
    %v1786 = vpop.f32.mrf.mxu0
    %1787 = vmatprep.mubr.f32.mxu0 0.0
    %1788 = vmatmul.mubr.f32.gmra.mxu0 %v1707
    %v1789 = vpop.f32.mrf.mxu0
    %v1790 = vadd.f32 0.0, %v1789
    %v1791 = vpop.f32.mrf.mxu0
    %1792 = vmatprep.mubr.f32.mxu0 0.0
    %1793 = vmatmul.mubr.f32.gmra.mxu0 %v1710
    %v1794 = vpop.f32.mrf.mxu0
    %v1795 = vadd.f32 0.0, %v1794
    %v1796 = vpop.f32.mrf.mxu0
    %1797 = vmatprep.mubr.f32.mxu0 0.0
    %1798 = vmatmul.mubr.f32.gmra.mxu0 %v1713
    %v1799 = vpop.f32.mrf.mxu0
    %v1800 = vadd.f32 0.0, %v1799
    %v1801 = vpop.f32.mrf.mxu0
    %1802 = vmatprep.mubr.f32.mxu0 0.0
    %1803 = vmatmul.mubr.f32.gmra.mxu0 %v1716
    %v1804 = vpop.f32.mrf.mxu0
    %v1805 = vadd.f32 0.0, %v1804
    %v1806 = vpop.f32.mrf.mxu0
    %1807 = vdwg.mxu0
    %v1809 = vsel %vm1647, %v906, 0
    %v1812 = vsel %vm1647, %v907, 0
    %1814 = vmatprep.subr.mxu0 0.0
    %1815 = vmatpush1.msra.mxu0 0.0
    %1816 = vmatprep.subr.mxu0 0.0
    %1817 = vmatpush1.msra.mxu0 0.0
    %1818 = vmatprep.subr.mxu0 0.0
    %1819 = vmatpush1.msra.mxu0 0.0
    %1820 = vmatprep.subr.mxu0 0.0
    %1821 = vmatpush1.msra.mxu0 0.0
    %1822 = vmatprep.subr.mxu0 0.0
    %1823 = vmatpush1.msra.mxu0 0.0
    %1824 = vmatprep.subr.mxu0 0.0
    %1825 = vmatpush1.msra.mxu0 0.0
    %1826 = vmatprep.subr.mxu0 0.0
    %1827 = vmatpush1.msra.mxu0 0.0
    %1828 = vmatprep.subr.mxu0 0.0
    %1829 = vmatpush1.msra.mxu0 0.0
    %1830 = vmatprep.subr.mxu0 0.0
    %1831 = vmatpush1.msra.mxu0 0.0
    %1832 = vmatprep.subr.mxu0 0.0
    %1833 = vmatpush1.msra.mxu0 0.0
    %1834 = vmatprep.subr.mxu0 0.0
    %1835 = vmatpush1.msra.mxu0 0.0
    %1836 = vmatprep.subr.mxu0 0.0
    %1837 = vmatpush1.msra.mxu0 %v1805
    %1838 = vmatprep.subr.mxu0 0.0
    %1839 = vmatpush1.msra.mxu0 %v1800
    %1840 = vmatprep.subr.mxu0 0.0
    %1841 = vmatpush1.msra.mxu0 %v1795
    %1842 = vmatprep.subr.mxu0 0.0
    %1843 = vmatpush1.msra.mxu0 %v1790
    %1844 = vmatprep.subr.mxu0 0.0
    %1845 = vmatpush1.msra.mxu0 %v1785
    %1846 = vmatprep.subr.mxu0 0.0
    %1847 = vmatpush2.msra.mxu0 0.0
    %1848 = vmatprep.subr.mxu0 0.0
    %1849 = vmatpush2.msra.mxu0 0.0
    %1850 = vmatprep.subr.mxu0 0.0
    %1851 = vmatpush2.msra.mxu0 0.0
    %1852 = vmatprep.subr.mxu0 0.0
    %1853 = vmatpush2.msra.mxu0 0.0
    %1854 = vmatprep.subr.mxu0 0.0
    %1855 = vmatpush2.msra.mxu0 0.0
    %1856 = vmatprep.subr.mxu0 0.0
    %1857 = vmatpush2.msra.mxu0 0.0
    %1858 = vmatprep.subr.mxu0 0.0
    %1859 = vmatpush2.msra.mxu0 0.0
    %1860 = vmatprep.subr.mxu0 0.0
    %1861 = vmatpush2.msra.mxu0 0.0
    %1862 = vmatprep.subr.mxu0 0.0
    %1863 = vmatpush2.msra.mxu0 0.0
    %1864 = vmatprep.subr.mxu0 0.0
    %1865 = vmatpush2.msra.mxu0 0.0
    %1866 = vmatprep.subr.mxu0 0.0
    %1867 = vmatpush2.msra.mxu0 0.0
    %1868 = vmatprep.subr.mxu0 0.0
    %1869 = vmatpush2.msra.mxu0 0.0
    %1870 = vmatprep.subr.mxu0 0.0
    %1871 = vmatpush2.msra.mxu0 0.0
    %1872 = vmatprep.subr.mxu0 0.0
    %1873 = vmatpush2.msra.mxu0 0.0
    %1874 = vmatprep.subr.mxu0 0.0
    %1875 = vmatpush2.msra.mxu0 0.0
    %1876 = vmatprep.subr.mxu0 0.0
    %1877 = vmatpush2.msra.mxu0 0.0
    %1878 = vmatprep.mubr.f32.mxu0 0.0
    %1879 = vmatmul.mubr.f32.gmra.mxu0 %v1809
    %v1880 = vpop.f32.mrf.mxu0
    %v1881 = vadd.f32 0.0, %v1880
    %v1882 = vpop.f32.mrf.mxu0
    %1883 = vmatprep.mubr.f32.mxu0 0.0
    %1884 = vmatmul.mubr.f32.gmra.mxu0 %v1812
    %v1885 = vpop.f32.mrf.mxu0
    %v1886 = vadd.f32 0.0, %v1885
    %v1887 = vpop.f32.mrf.mxu0
    %1888 = vdwg.mxu0
    %v1889 = vld [vmem:[#allocation2 + $0x180] sm:$0xff]
    %v1890 = vld [vmem:[#allocation2 + $0x188] sm:$0xff]
    %v1891 = vld [vmem:[#allocation2 + $0x190] sm:$0xff]
    %v1892 = vld [vmem:[#allocation2 + $0x198] sm:$0xff]
    %v1893 = vld [vmem:[#allocation2 + $0x1a0] sm:$0xff]
    %v1894 = vld [vmem:[#allocation2 + $0x1a8] sm:$0xff]
    %v1895 = vld [vmem:[#allocation2 + $0x1b0] sm:$0xff]
    %v1896 = vld [vmem:[#allocation2 + $0x1b8] sm:$0xff]
    %v1897 = vld [vmem:[#allocation2 + $0x1c0] sm:$0xff]
    %v1898 = vld [vmem:[#allocation2 + $0x1c8] sm:$0xff]
    %v1899 = vld [vmem:[#allocation2 + $0x1d0] sm:$0xff]
    %v1900 = vld [vmem:[#allocation2 + $0x1d8] sm:$0xff]
    %v1901 = vld [vmem:[#allocation2 + $0x1e0] sm:$0xff]
    %v1902 = vld [vmem:[#allocation2 + $0x1e8] sm:$0xff]
    %v1903 = vld [vmem:[#allocation2 + $0x1f0] sm:$0xff]
    %v1904 = vld [vmem:[#allocation2 + $0x1f8] sm:$0xff]
    %v1905 = vld [vmem:[#allocation2 + $0x405] sm:$0x1]
    %v1906 = vlaneseq
    %v1907 = vshrl.u32 %v1906, 7
    %v1908 = vsub.s32 0, %v1907
    %v1909 = vrot.slane %v1905, %v1908
    %1910 = vmatprep.subr.mxu0 0.0
    %1911 = vmatpush1.msra.mxu0 %v1904
    %1912 = vmatprep.subr.mxu0 0.0
    %1913 = vmatpush1.msra.mxu0 %v1903
    %1914 = vmatprep.subr.mxu0 0.0
    %1915 = vmatpush1.msra.mxu0 %v1902
    %1916 = vmatprep.subr.mxu0 0.0
    %1917 = vmatpush1.msra.mxu0 %v1901
    %1918 = vmatprep.subr.mxu0 0.0
    %1919 = vmatpush1.msra.mxu0 %v1900
    %1920 = vmatprep.subr.mxu0 0.0
    %1921 = vmatpush1.msra.mxu0 %v1899
    %1922 = vmatprep.subr.mxu0 0.0
    %1923 = vmatpush1.msra.mxu0 %v1898
    %1924 = vmatprep.subr.mxu0 0.0
    %1925 = vmatpush1.msra.mxu0 %v1897
    %1926 = vmatprep.subr.mxu0 0.0
    %1927 = vmatpush1.msra.mxu0 %v1896
    %1928 = vmatprep.subr.mxu0 0.0
    %1929 = vmatpush1.msra.mxu0 %v1895
    %1930 = vmatprep.subr.mxu0 0.0
    %1931 = vmatpush1.msra.mxu0 %v1894
    %1932 = vmatprep.subr.mxu0 0.0
    %1933 = vmatpush1.msra.mxu0 %v1893
    %1934 = vmatprep.subr.mxu0 0.0
    %1935 = vmatpush1.msra.mxu0 %v1892
    %1936 = vmatprep.subr.mxu0 0.0
    %1937 = vmatpush1.msra.mxu0 %v1891
    %1938 = vmatprep.subr.mxu0 0.0
    %1939 = vmatpush1.msra.mxu0 %v1890
    %1940 = vmatprep.subr.mxu0 0.0
    %1941 = vmatpush1.msra.mxu0 %v1889
    %1942 = vmatprep.subr.mxu0 0.0
    %1943 = vmatpush2.msra.mxu0 0.0
    %1944 = vmatprep.subr.mxu0 0.0
    %1945 = vmatpush2.msra.mxu0 0.0
    %1946 = vmatprep.subr.mxu0 0.0
    %1947 = vmatpush2.msra.mxu0 0.0
    %1948 = vmatprep.subr.mxu0 0.0
    %1949 = vmatpush2.msra.mxu0 0.0
    %1950 = vmatprep.subr.mxu0 0.0
    %1951 = vmatpush2.msra.mxu0 0.0
    %1952 = vmatprep.subr.mxu0 0.0
    %1953 = vmatpush2.msra.mxu0 0.0
    %1954 = vmatprep.subr.mxu0 0.0
    %1955 = vmatpush2.msra.mxu0 0.0
    %1956 = vmatprep.subr.mxu0 0.0
    %1957 = vmatpush2.msra.mxu0 0.0
    %1958 = vmatprep.subr.mxu0 0.0
    %1959 = vmatpush2.msra.mxu0 0.0
    %1960 = vmatprep.subr.mxu0 0.0
    %1961 = vmatpush2.msra.mxu0 0.0
    %1962 = vmatprep.subr.mxu0 0.0
    %1963 = vmatpush2.msra.mxu0 0.0
    %1964 = vmatprep.subr.mxu0 0.0
    %1965 = vmatpush2.msra.mxu0 0.0
    %1966 = vmatprep.subr.mxu0 0.0
    %1967 = vmatpush2.msra.mxu0 0.0
    %1968 = vmatprep.subr.mxu0 0.0
    %1969 = vmatpush2.msra.mxu0 0.0
    %1970 = vmatprep.subr.mxu0 0.0
    %1971 = vmatpush2.msra.mxu0 0.0
    %1972 = vmatprep.subr.mxu0 0.0
    %1973 = vmatpush2.msra.mxu0 0.0
    %1974 = vmatprep.mubr.f32.mxu0 0.0
    %1975 = vmatmul.mubr.f32.gmra.mxu0 %v1881
    %v1976 = vpop.f32.mrf.mxu0
    %v1977 = vadd.f32 %v1909, %v1976
    %v1978 = vpop.f32.mrf.mxu0
    %1979 = vmatprep.mubr.f32.mxu0 0.0
    %1980 = vmatmul.mubr.f32.gmra.mxu0 %v1886
    %v1981 = vpop.f32.mrf.mxu0
    %v1982 = vadd.f32 %v1909, %v1981
    %v1983 = vpop.f32.mrf.mxu0
    %1984 = vdwg.mxu0
    %v1985 = vld [vmem:[#allocation2 + $0x406] sm:$0x1]
    %v1986 = vlaneseq
    %v1987 = vshrl.u32 %v1986, 7
    %v1988 = vsub.s32 0, %v1987
    %v1989 = vrot.slane %v1985, %v1988
    %v1990 = vmul.f32 %v1989, %v1977
    %v1991 = vmul.f32 %v1989, %v1982
    %v1992 = vadd.f32 %v893, %v1990
    %v1993 = vadd.f32 %v898, %v1991
    %v1994 = vld [vmem:[#allocation2 + $0x407] sm:$0x1]
    %v1995 = vld [vmem:[#allocation2 + $0x408] sm:$0x1]
    %v1996 = vmul.f32 %v1992, %v622
    %v1997 = vmul.f32 %v1993, %v622
    %1998 = vadd.xlane.f32.xlu0 %v1996
    %v1999 = vpop.xlane.xlu0 %1998
    %v2000 = vsel %vm927, %v1997, 0.0
    %2001 = vadd.xlane.f32.xlu0 %v2000
    %v2002 = vpop.xlane.xlu0 %2001
    %v2003 = vmul.f32 %v1999, 0.015625
    %v2004 = vmul.f32 %v2002, 0.015625
    %v2005 = vsub.f32 %v1992, %v2003
    %v2006 = vsub.f32 %v1993, %v2004
    %v2007 = vmul.f32 %v2005, %v622
    %v2008 = vmul.f32 %v2006, %v622
    %v2009 = vmul.f32 %v2007, %v2007
    %v2010 = vmul.f32 %v2008, %v2008
    %2011 = vadd.xlane.f32.xlu0 %v2009
    %v2012 = vpop.xlane.xlu0 %2011
    %v2013 = vsel %vm927, %v2010, 0.0
    %2014 = vadd.xlane.f32.xlu0 %v2013
    %v2015 = vpop.xlane.xlu0 %2014
    %v2016 = vmul.f32 %v2012, 0.015625
    %v2017 = vmul.f32 %v2015, 0.015625
    %v2018 = vadd.f32 %v2016, 1e-06
    %v2019 = vadd.f32 %v2017, 1e-06
    %v2020 = vrsqrt.pop %v2018
    %v2021 = vrsqrt.pop %v2019
    %v2022 = vmul.f32 %v2007, %v2020
    %v2023 = vmul.f32 %v2008, %v2021
    %v2024 = vlaneseq
    %v2025 = vshrl.u32 %v2024, 7
    %v2026 = vsub.s32 0, %v2025
    %v2027 = vrot.slane %v1994, %v2026
    %v2028 = vmul.f32 %v2022, %v2027
    %v2029 = vmul.f32 %v2023, %v2027
    %v2030 = vlaneseq
    %v2031 = vshrl.u32 %v2030, 7
    %v2032 = vsub.s32 0, %v2031
    %v2033 = vrot.slane %v1995, %v2032
    %v2034 = vadd.f32 %v2028, %v2033
    %v2035 = vadd.f32 %v2029, %v2033
    %v2036 = vld [vmem:[#allocation2 + $0x200] sm:$0xff]
    %v2037 = vld [vmem:[#allocation2 + $0x208] sm:$0xff]
    %v2038 = vld [vmem:[#allocation2 + $0x210] sm:$0xff]
    %v2039 = vld [vmem:[#allocation2 + $0x218] sm:$0xff]
    %v2040 = vld [vmem:[#allocation2 + $0x220] sm:$0xff]
    %v2041 = vld [vmem:[#allocation2 + $0x228] sm:$0xff]
    %v2042 = vld [vmem:[#allocation2 + $0x230] sm:$0xff]
    %v2043 = vld [vmem:[#allocation2 + $0x238] sm:$0xff]
    %v2044 = vld [vmem:[#allocation2 + $0x240] sm:$0xff]
    %v2045 = vld [vmem:[#allocation2 + $0x248] sm:$0xff]
    %v2046 = vld [vmem:[#allocation2 + $0x250] sm:$0xff]
    %v2047 = vld [vmem:[#allocation2 + $0x258] sm:$0xff]
    %v2048 = vld [vmem:[#allocation2 + $0x260] sm:$0xff]
    %v2049 = vld [vmem:[#allocation2 + $0x268] sm:$0xff]
    %v2050 = vld [vmem:[#allocation2 + $0x270] sm:$0xff]
    %v2051 = vld [vmem:[#allocation2 + $0x278] sm:$0xff]
    %v2052 = vld [vmem:[#allocation2 + $0x409] sm:$0x1]
    %v2053 = vlaneseq
    %v2054 = vshrl.u32 %v2053, 7
    %v2055 = vsub.s32 0, %v2054
    %v2056 = vrot.slane %v2052, %v2055
    %2057 = vmatprep.subr.mxu0 0.0
    %2058 = vmatpush1.msra.mxu0 %v2051
    %2059 = vmatprep.subr.mxu0 0.0
    %2060 = vmatpush1.msra.mxu0 %v2050
    %2061 = vmatprep.subr.mxu0 0.0
    %2062 = vmatpush1.msra.mxu0 %v2049
    %2063 = vmatprep.subr.mxu0 0.0
    %2064 = vmatpush1.msra.mxu0 %v2048
    %2065 = vmatprep.subr.mxu0 0.0
    %2066 = vmatpush1.msra.mxu0 %v2047
    %2067 = vmatprep.subr.mxu0 0.0
    %2068 = vmatpush1.msra.mxu0 %v2046
    %2069 = vmatprep.subr.mxu0 0.0
    %2070 = vmatpush1.msra.mxu0 %v2045
    %2071 = vmatprep.subr.mxu0 0.0
    %2072 = vmatpush1.msra.mxu0 %v2044
    %2073 = vmatprep.subr.mxu0 0.0
    %2074 = vmatpush1.msra.mxu0 %v2043
    %2075 = vmatprep.subr.mxu0 0.0
    %2076 = vmatpush1.msra.mxu0 %v2042
    %2077 = vmatprep.subr.mxu0 0.0
    %2078 = vmatpush1.msra.mxu0 %v2041
    %2079 = vmatprep.subr.mxu0 0.0
    %2080 = vmatpush1.msra.mxu0 %v2040
    %2081 = vmatprep.subr.mxu0 0.0
    %2082 = vmatpush1.msra.mxu0 %v2039
    %2083 = vmatprep.subr.mxu0 0.0
    %2084 = vmatpush1.msra.mxu0 %v2038
    %2085 = vmatprep.subr.mxu0 0.0
    %2086 = vmatpush1.msra.mxu0 %v2037
    %2087 = vmatprep.subr.mxu0 0.0
    %2088 = vmatpush1.msra.mxu0 %v2036
    %2089 = vmatprep.subr.mxu0 0.0
    %2090 = vmatpush2.msra.mxu0 0.0
    %2091 = vmatprep.subr.mxu0 0.0
    %2092 = vmatpush2.msra.mxu0 0.0
    %2093 = vmatprep.subr.mxu0 0.0
    %2094 = vmatpush2.msra.mxu0 0.0
    %2095 = vmatprep.subr.mxu0 0.0
    %2096 = vmatpush2.msra.mxu0 0.0
    %2097 = vmatprep.subr.mxu0 0.0
    %2098 = vmatpush2.msra.mxu0 0.0
    %2099 = vmatprep.subr.mxu0 0.0
    %2100 = vmatpush2.msra.mxu0 0.0
    %2101 = vmatprep.subr.mxu0 0.0
    %2102 = vmatpush2.msra.mxu0 0.0
    %2103 = vmatprep.subr.mxu0 0.0
    %2104 = vmatpush2.msra.mxu0 0.0
    %2105 = vmatprep.subr.mxu0 0.0
    %2106 = vmatpush2.msra.mxu0 0.0
    %2107 = vmatprep.subr.mxu0 0.0
    %2108 = vmatpush2.msra.mxu0 0.0
    %2109 = vmatprep.subr.mxu0 0.0
    %2110 = vmatpush2.msra.mxu0 0.0
    %2111 = vmatprep.subr.mxu0 0.0
    %2112 = vmatpush2.msra.mxu0 0.0
    %2113 = vmatprep.subr.mxu0 0.0
    %2114 = vmatpush2.msra.mxu0 0.0
    %2115 = vmatprep.subr.mxu0 0.0
    %2116 = vmatpush2.msra.mxu0 0.0
    %2117 = vmatprep.subr.mxu0 0.0
    %2118 = vmatpush2.msra.mxu0 0.0
    %2119 = vmatprep.subr.mxu0 0.0
    %2120 = vmatpush2.msra.mxu0 0.0
    %2121 = vmatprep.mubr.f32.mxu0 0.0
    %2122 = vmatmul.mubr.f32.gmra.mxu0 %v2034
    %v2123 = vpop.f32.mrf.mxu0
    %v2124 = vadd.f32 %v2056, %v2123
    %v2125 = vpop.f32.mrf.mxu0
    %2126 = vmatprep.mubr.f32.mxu0 0.0
    %2127 = vmatmul.mubr.f32.gmra.mxu0 %v2035
    %v2128 = vpop.f32.mrf.mxu0
    %v2129 = vadd.f32 %v2056, %v2128
    %v2130 = vpop.f32.mrf.mxu0
    %2131 = vdwg.mxu0
    %v2132 = vmul.f32 %v2124, 0.5
    %v2133 = vmul.f32 %v2129, 0.5
    %v2134 = vmul.f32 %v2124, %v2124
    %v2135 = vmul.f32 %v2129, %v2129
    %v2136 = vmul.f32 %v2134, %v2124
    %v2137 = vmul.f32 %v2135, %v2129
    %v2138 = vmul.f32 %v2136, 0.044715
    %v2139 = vmul.f32 %v2137, 0.044715
    %v2140 = vadd.f32 %v2124, %v2138
    %v2141 = vadd.f32 %v2129, %v2139
    %v2142 = vmul.f32 %v2140, 0.7978846
    %v2143 = vmul.f32 %v2141, 0.7978846
    %v2144 = vtanh.pop %v2142
    %v2145 = vtanh.pop %v2143
    %v2146 = vadd.f32 %v2144, 1.0
    %v2147 = vadd.f32 %v2145, 1.0
    %v2148 = vmul.f32 %v2132, %v2146
    %v2149 = vmul.f32 %v2133, %v2147
    %v2150 = vld [vmem:[#allocation2 + $0x280] sm:$0xff]
    %v2151 = vld [vmem:[#allocation2 + $0x288] sm:$0xff]
    %v2152 = vld [vmem:[#allocation2 + $0x290] sm:$0xff]
    %v2153 = vld [vmem:[#allocation2 + $0x298] sm:$0xff]
    %v2154 = vld [vmem:[#allocation2 + $0x2a0] sm:$0xff]
    %v2155 = vld [vmem:[#allocation2 + $0x2a8] sm:$0xff]
    %v2156 = vld [vmem:[#allocation2 + $0x2b0] sm:$0xff]
    %v2157 = vld [vmem:[#allocation2 + $0x2b8] sm:$0xff]
    %v2158 = vld [vmem:[#allocation2 + $0x2c0] sm:$0xff]
    %v2159 = vld [vmem:[#allocation2 + $0x2c8] sm:$0xff]
    %v2160 = vld [vmem:[#allocation2 + $0x2d0] sm:$0xff]
    %v2161 = vld [vmem:[#allocation2 + $0x2d8] sm:$0xff]
    %v2162 = vld [vmem:[#allocation2 + $0x2e0] sm:$0xff]
    %v2163 = vld [vmem:[#allocation2 + $0x2e8] sm:$0xff]
    %v2164 = vld [vmem:[#allocation2 + $0x2f0] sm:$0xff]
    %v2165 = vld [vmem:[#allocation2 + $0x2f8] sm:$0xff]
    %v2166 = vld [vmem:[#allocation2 + $0x40a] sm:$0x1]
    %v2167 = vlaneseq
    %v2168 = vshrl.u32 %v2167, 7
    %v2169 = vsub.s32 0, %v2168
    %v2170 = vrot.slane %v2166, %v2169
    %2171 = vmatprep.subr.mxu0 0.0
    %2172 = vmatpush1.msra.mxu0 %v2165
    %2173 = vmatprep.subr.mxu0 0.0
    %2174 = vmatpush1.msra.mxu0 %v2164
    %2175 = vmatprep.subr.mxu0 0.0
    %2176 = vmatpush1.msra.mxu0 %v2163
    %2177 = vmatprep.subr.mxu0 0.0
    %2178 = vmatpush1.msra.mxu0 %v2162
    %2179 = vmatprep.subr.mxu0 0.0
    %2180 = vmatpush1.msra.mxu0 %v2161
    %2181 = vmatprep.subr.mxu0 0.0
    %2182 = vmatpush1.msra.mxu0 %v2160
    %2183 = vmatprep.subr.mxu0 0.0
    %2184 = vmatpush1.msra.mxu0 %v2159
    %2185 = vmatprep.subr.mxu0 0.0
    %2186 = vmatpush1.msra.mxu0 %v2158
    %2187 = vmatprep.subr.mxu0 0.0
    %2188 = vmatpush1.msra.mxu0 %v2157
    %2189 = vmatprep.subr.mxu0 0.0
    %2190 = vmatpush1.msra.mxu0 %v2156
    %2191 = vmatprep.subr.mxu0 0.0
    %2192 = vmatpush1.msra.mxu0 %v2155
    %2193 = vmatprep.subr.mxu0 0.0
    %2194 = vmatpush1.msra.mxu0 %v2154
    %2195 = vmatprep.subr.mxu0 0.0
    %2196 = vmatpush1.msra.mxu0 %v2153
    %2197 = vmatprep.subr.mxu0 0.0
    %2198 = vmatpush1.msra.mxu0 %v2152
    %2199 = vmatprep.subr.mxu0 0.0
    %2200 = vmatpush1.msra.mxu0 %v2151
    %2201 = vmatprep.subr.mxu0 0.0
    %2202 = vmatpush1.msra.mxu0 %v2150
    %2203 = vmatprep.subr.mxu0 0.0
    %2204 = vmatpush2.msra.mxu0 0.0
    %2205 = vmatprep.subr.mxu0 0.0
    %2206 = vmatpush2.msra.mxu0 0.0
    %2207 = vmatprep.subr.mxu0 0.0
    %2208 = vmatpush2.msra.mxu0 0.0
    %2209 = vmatprep.subr.mxu0 0.0
    %2210 = vmatpush2.msra.mxu0 0.0
    %2211 = vmatprep.subr.mxu0 0.0
    %2212 = vmatpush2.msra.mxu0 0.0
    %2213 = vmatprep.subr.mxu0 0.0
    %2214 = vmatpush2.msra.mxu0 0.0
    %2215 = vmatprep.subr.mxu0 0.0
    %2216 = vmatpush2.msra.mxu0 0.0
    %2217 = vmatprep.subr.mxu0 0.0
    %2218 = vmatpush2.msra.mxu0 0.0
    %2219 = vmatprep.subr.mxu0 0.0
    %2220 = vmatpush2.msra.mxu0 0.0
    %2221 = vmatprep.subr.mxu0 0.0
    %2222 = vmatpush2.msra.mxu0 0.0
    %2223 = vmatprep.subr.mxu0 0.0
    %2224 = vmatpush2.msra.mxu0 0.0
    %2225 = vmatprep.subr.mxu0 0.0
    %2226 = vmatpush2.msra.mxu0 0.0
    %2227 = vmatprep.subr.mxu0 0.0
    %2228 = vmatpush2.msra.mxu0 0.0
    %2229 = vmatprep.subr.mxu0 0.0
    %2230 = vmatpush2.msra.mxu0 0.0
    %2231 = vmatprep.subr.mxu0 0.0
    %2232 = vmatpush2.msra.mxu0 0.0
    %2233 = vmatprep.subr.mxu0 0.0
    %2234 = vmatpush2.msra.mxu0 0.0
    %2235 = vmatprep.mubr.f32.mxu0 0.0
    %2236 = vmatmul.mubr.f32.gmra.mxu0 %v2034
    %v2237 = vpop.f32.mrf.mxu0
    %v2238 = vadd.f32 %v2170, %v2237
    %v2239 = vpop.f32.mrf.mxu0
    %2240 = vmatprep.mubr.f32.mxu0 0.0
    %2241 = vmatmul.mubr.f32.gmra.mxu0 %v2035
    %v2242 = vpop.f32.mrf.mxu0
    %v2243 = vadd.f32 %v2170, %v2242
    %v2244 = vpop.f32.mrf.mxu0
    %2245 = vdwg.mxu0
    %v2246 = vmul.f32 %v2238, 0.5
    %v2247 = vmul.f32 %v2243, 0.5
    %v2248 = vmul.f32 %v2238, %v2238
    %v2249 = vmul.f32 %v2243, %v2243
    %v2250 = vmul.f32 %v2248, %v2238
    %v2251 = vmul.f32 %v2249, %v2243
    %v2252 = vmul.f32 %v2250, 0.044715
    %v2253 = vmul.f32 %v2251, 0.044715
    %v2254 = vadd.f32 %v2238, %v2252
    %v2255 = vadd.f32 %v2243, %v2253
    %v2256 = vmul.f32 %v2254, 0.7978846
    %v2257 = vmul.f32 %v2255, 0.7978846
    %v2258 = vtanh.pop %v2256
    %v2259 = vtanh.pop %v2257
    %v2260 = vadd.f32 %v2258, 1.0
    %v2261 = vadd.f32 %v2259, 1.0
    %v2262 = vmul.f32 %v2246, %v2260
    %v2263 = vmul.f32 %v2247, %v2261
    %v2264 = vld [vmem:[#allocation2 + $0x300] sm:$0xff]
    %v2265 = vld [vmem:[#allocation2 + $0x308] sm:$0xff]
    %v2266 = vld [vmem:[#allocation2 + $0x310] sm:$0xff]
    %v2267 = vld [vmem:[#allocation2 + $0x318] sm:$0xff]
    %v2268 = vld [vmem:[#allocation2 + $0x320] sm:$0xff]
    %v2269 = vld [vmem:[#allocation2 + $0x328] sm:$0xff]
    %v2270 = vld [vmem:[#allocation2 + $0x330] sm:$0xff]
    %v2271 = vld [vmem:[#allocation2 + $0x338] sm:$0xff]
    %v2272 = vld [vmem:[#allocation2 + $0x340] sm:$0xff]
    %v2273 = vld [vmem:[#allocation2 + $0x348] sm:$0xff]
    %v2274 = vld [vmem:[#allocation2 + $0x350] sm:$0xff]
    %v2275 = vld [vmem:[#allocation2 + $0x358] sm:$0xff]
    %v2276 = vld [vmem:[#allocation2 + $0x360] sm:$0xff]
    %v2277 = vld [vmem:[#allocation2 + $0x368] sm:$0xff]
    %v2278 = vld [vmem:[#allocation2 + $0x370] sm:$0xff]
    %v2279 = vld [vmem:[#allocation2 + $0x378] sm:$0xff]
    %v2280 = vld [vmem:[#allocation2 + $0x380] sm:$0xff]
    %v2281 = vld [vmem:[#allocation2 + $0x388] sm:$0xff]
    %v2282 = vld [vmem:[#allocation2 + $0x390] sm:$0xff]
    %v2283 = vld [vmem:[#allocation2 + $0x398] sm:$0xff]
    %v2284 = vld [vmem:[#allocation2 + $0x3a0] sm:$0xff]
    %v2285 = vld [vmem:[#allocation2 + $0x3a8] sm:$0xff]
    %v2286 = vld [vmem:[#allocation2 + $0x3b0] sm:$0xff]
    %v2287 = vld [vmem:[#allocation2 + $0x3b8] sm:$0xff]
    %v2288 = vld [vmem:[#allocation2 + $0x3c0] sm:$0xff]
    %v2289 = vld [vmem:[#allocation2 + $0x3c8] sm:$0xff]
    %v2290 = vld [vmem:[#allocation2 + $0x3d0] sm:$0xff]
    %v2291 = vld [vmem:[#allocation2 + $0x3d8] sm:$0xff]
    %v2292 = vld [vmem:[#allocation2 + $0x3e0] sm:$0xff]
    %v2293 = vld [vmem:[#allocation2 + $0x3e8] sm:$0xff]
    %v2294 = vld [vmem:[#allocation2 + $0x3f0] sm:$0xff]
    %v2295 = vld [vmem:[#allocation2 + $0x3f8] sm:$0xff]
    %2296 = vmatprep.subr.mxu0 0.0
    %2297 = vmatpush1.msra.mxu0 %v2295
    %2298 = vmatprep.subr.mxu0 0.0
    %2299 = vmatpush1.msra.mxu0 %v2294
    %2300 = vmatprep.subr.mxu0 0.0
    %2301 = vmatpush1.msra.mxu0 %v2293
    %2302 = vmatprep.subr.mxu0 0.0
    %2303 = vmatpush1.msra.mxu0 %v2292
    %2304 = vmatprep.subr.mxu0 0.0
    %2305 = vmatpush1.msra.mxu0 %v2291
    %2306 = vmatprep.subr.mxu0 0.0
    %2307 = vmatpush1.msra.mxu0 %v2290
    %2308 = vmatprep.subr.mxu0 0.0
    %2309 = vmatpush1.msra.mxu0 %v2289
    %2310 = vmatprep.subr.mxu0 0.0
    %2311 = vmatpush1.msra.mxu0 %v2288
    %2312 = vmatprep.subr.mxu0 0.0
    %2313 = vmatpush1.msra.mxu0 %v2287
    %2314 = vmatprep.subr.mxu0 0.0
    %2315 = vmatpush1.msra.mxu0 %v2286
    %2316 = vmatprep.subr.mxu0 0.0
    %2317 = vmatpush1.msra.mxu0 %v2285
    %2318 = vmatprep.subr.mxu0 0.0
    %2319 = vmatpush1.msra.mxu0 %v2284
    %2320 = vmatprep.subr.mxu0 0.0
    %2321 = vmatpush1.msra.mxu0 %v2283
    %2322 = vmatprep.subr.mxu0 0.0
    %2323 = vmatpush1.msra.mxu0 %v2282
    %2324 = vmatprep.subr.mxu0 0.0
    %2325 = vmatpush1.msra.mxu0 %v2281
    %2326 = vmatprep.subr.mxu0 0.0
    %2327 = vmatpush1.msra.mxu0 %v2280
    %2328 = vmatprep.subr.mxu0 0.0
    %2329 = vmatpush2.msra.mxu0 0.0
    %2330 = vmatprep.subr.mxu0 0.0
    %2331 = vmatpush2.msra.mxu0 0.0
    %2332 = vmatprep.subr.mxu0 0.0
    %2333 = vmatpush2.msra.mxu0 0.0
    %2334 = vmatprep.subr.mxu0 0.0
    %2335 = vmatpush2.msra.mxu0 0.0
    %2336 = vmatprep.subr.mxu0 0.0
    %2337 = vmatpush2.msra.mxu0 0.0
    %2338 = vmatprep.subr.mxu0 0.0
    %2339 = vmatpush2.msra.mxu0 0.0
    %2340 = vmatprep.subr.mxu0 0.0
    %2341 = vmatpush2.msra.mxu0 0.0
    %2342 = vmatprep.subr.mxu0 0.0
    %2343 = vmatpush2.msra.mxu0 0.0
    %2344 = vmatprep.subr.mxu0 0.0
    %2345 = vmatpush2.msra.mxu0 0.0
    %2346 = vmatprep.subr.mxu0 0.0
    %2347 = vmatpush2.msra.mxu0 0.0
    %2348 = vmatprep.subr.mxu0 0.0
    %2349 = vmatpush2.msra.mxu0 0.0
    %2350 = vmatprep.subr.mxu0 0.0
    %2351 = vmatpush2.msra.mxu0 0.0
    %2352 = vmatprep.subr.mxu0 0.0
    %2353 = vmatpush2.msra.mxu0 0.0
    %2354 = vmatprep.subr.mxu0 0.0
    %2355 = vmatpush2.msra.mxu0 0.0
    %2356 = vmatprep.subr.mxu0 0.0
    %2357 = vmatpush2.msra.mxu0 0.0
    %2358 = vmatprep.subr.mxu0 0.0
    %2359 = vmatpush2.msra.mxu0 0.0
    %2360 = vmatprep.mubr.f32.mxu0 0.0
    %2361 = vmatmul.mubr.f32.gmra.mxu0 %v2262
    %v2362 = vpop.f32.mrf.mxu0
    %v2363 = vadd.f32 0.0, %v2362
    %v2364 = vpop.f32.mrf.mxu0
    %2365 = vmatprep.mubr.f32.mxu0 0.0
    %2366 = vmatmul.mubr.f32.gmra.mxu0 %v2263
    %v2367 = vpop.f32.mrf.mxu0
    %v2368 = vadd.f32 0.0, %v2367
    %v2369 = vpop.f32.mrf.mxu0
    %2370 = vdwg.mxu0
    %2371 = vmatprep.subr.mxu0 0.0
    %2372 = vmatpush1.msra.mxu0 %v2279
    %2373 = vmatprep.subr.mxu0 0.0
    %2374 = vmatpush1.msra.mxu0 %v2278
    %2375 = vmatprep.subr.mxu0 0.0
    %2376 = vmatpush1.msra.mxu0 %v2277
    %2377 = vmatprep.subr.mxu0 0.0
    %2378 = vmatpush1.msra.mxu0 %v2276
    %2379 = vmatprep.subr.mxu0 0.0
    %2380 = vmatpush1.msra.mxu0 %v2275
    %2381 = vmatprep.subr.mxu0 0.0
    %2382 = vmatpush1.msra.mxu0 %v2274
    %2383 = vmatprep.subr.mxu0 0.0
    %2384 = vmatpush1.msra.mxu0 %v2273
    %2385 = vmatprep.subr.mxu0 0.0
    %2386 = vmatpush1.msra.mxu0 %v2272
    %2387 = vmatprep.subr.mxu0 0.0
    %2388 = vmatpush1.msra.mxu0 %v2271
    %2389 = vmatprep.subr.mxu0 0.0
    %2390 = vmatpush1.msra.mxu0 %v2270
    %2391 = vmatprep.subr.mxu0 0.0
    %2392 = vmatpush1.msra.mxu0 %v2269
    %2393 = vmatprep.subr.mxu0 0.0
    %2394 = vmatpush1.msra.mxu0 %v2268
    %2395 = vmatprep.subr.mxu0 0.0
    %2396 = vmatpush1.msra.mxu0 %v2267
    %2397 = vmatprep.subr.mxu0 0.0
    %2398 = vmatpush1.msra.mxu0 %v2266
    %2399 = vmatprep.subr.mxu0 0.0
    %2400 = vmatpush1.msra.mxu0 %v2265
    %2401 = vmatprep.subr.mxu0 0.0
    %2402 = vmatpush1.msra.mxu0 %v2264
    %2403 = vmatprep.subr.mxu0 0.0
    %2404 = vmatpush2.msra.mxu0 0.0
    %2405 = vmatprep.subr.mxu0 0.0
    %2406 = vmatpush2.msra.mxu0 0.0
    %2407 = vmatprep.subr.mxu0 0.0
    %2408 = vmatpush2.msra.mxu0 0.0
    %2409 = vmatprep.subr.mxu0 0.0
    %2410 = vmatpush2.msra.mxu0 0.0
    %2411 = vmatprep.subr.mxu0 0.0
    %2412 = vmatpush2.msra.mxu0 0.0
    %2413 = vmatprep.subr.mxu0 0.0
    %2414 = vmatpush2.msra.mxu0 0.0
    %2415 = vmatprep.subr.mxu0 0.0
    %2416 = vmatpush2.msra.mxu0 0.0
    %2417 = vmatprep.subr.mxu0 0.0
    %2418 = vmatpush2.msra.mxu0 0.0
    %2419 = vmatprep.subr.mxu0 0.0
    %2420 = vmatpush2.msra.mxu0 0.0
    %2421 = vmatprep.subr.mxu0 0.0
    %2422 = vmatpush2.msra.mxu0 0.0
    %2423 = vmatprep.subr.mxu0 0.0
    %2424 = vmatpush2.msra.mxu0 0.0
    %2425 = vmatprep.subr.mxu0 0.0
    %2426 = vmatpush2.msra.mxu0 0.0
    %2427 = vmatprep.subr.mxu0 0.0
    %2428 = vmatpush2.msra.mxu0 0.0
    %2429 = vmatprep.subr.mxu0 0.0
    %2430 = vmatpush2.msra.mxu0 0.0
    %2431 = vmatprep.subr.mxu0 0.0
    %2432 = vmatpush2.msra.mxu0 0.0
    %2433 = vmatprep.subr.mxu0 0.0
    %2434 = vmatpush2.msra.mxu0 0.0
    %2435 = vmatprep.mubr.f32.mxu0 0.0
    %2436 = vmatmul.mubr.f32.gmra.mxu0 %v2148
    %v2437 = vpop.f32.mrf.mxu0
    %v2438 = vadd.f32 %v2363, %v2437
    %v2439 = vpop.f32.mrf.mxu0
    %2440 = vmatprep.mubr.f32.mxu0 0.0
    %2441 = vmatmul.mubr.f32.gmra.mxu0 %v2149
    %v2442 = vpop.f32.mrf.mxu0
    %v2443 = vadd.f32 %v2368, %v2442
    %v2444 = vpop.f32.mrf.mxu0
    %2445 = vdwg.mxu0
    %v2446 = vld [vmem:[#allocation2 + $0x40b] sm:$0x1]
    %v2447 = vlaneseq
    %v2448 = vshrl.u32 %v2447, 7
    %v2449 = vsub.s32 0, %v2448
    %v2450 = vrot.slane %v2446, %v2449
    %v2451 = vadd.f32 %v2438, %v2450
    %v2452 = vadd.f32 %v2443, %v2450
    %v2453 = vld [vmem:[#allocation2 + $0x40c] sm:$0x1]
    %v2454 = vlaneseq
    %v2455 = vshrl.u32 %v2454, 7
    %v2456 = vsub.s32 0, %v2455
    %v2457 = vrot.slane %v2453, %v2456
    %v2458 = vmul.f32 %v2457, %v2451
    %v2459 = vmul.f32 %v2457, %v2452
    %v2460 = vadd.f32 %v1992, %v2458
    %v2461 = vadd.f32 %v1993, %v2459
    %s2462 = sshll.u32 %s918, 4
    %2463 = dma.done %s316, %s2462
    %v2464 = vld [vmem:[%s315 + $0x400] sm:$0x1]
    %v2465 = vld [vmem:[%s315 + $0x401] sm:$0x1]
    %v2466 = vmul.f32 %v2460, %v622
    %v2467 = vmul.f32 %v2461, %v622
    %2468 = vadd.xlane.f32.xlu0 %v2466
    %v2469 = vpop.xlane.xlu0 %2468
    %v2470 = vsel %vm927, %v2467, 0.0
    %2471 = vadd.xlane.f32.xlu0 %v2470
    %v2472 = vpop.xlane.xlu0 %2471
    %v2473 = vmul.f32 %v2469, 0.015625
    %v2474 = vmul.f32 %v2472, 0.015625
    %v2475 = vsub.f32 %v2460, %v2473
    %v2476 = vsub.f32 %v2461, %v2474
    %v2477 = vmul.f32 %v2475, %v622
    %v2478 = vmul.f32 %v2476, %v622
    %v2479 = vmul.f32 %v2477, %v2477
    %v2480 = vmul.f32 %v2478, %v2478
    %2481 = vadd.xlane.f32.xlu0 %v2479
    %v2482 = vpop.xlane.xlu0 %2481
    %v2483 = vsel %vm927, %v2480, 0.0
    %2484 = vadd.xlane.f32.xlu0 %v2483
    %v2485 = vpop.xlane.xlu0 %2484
    %v2486 = vmul.f32 %v2482, 0.015625
    %v2487 = vmul.f32 %v2485, 0.015625
    %v2488 = vadd.f32 %v2486, 1e-06
    %v2489 = vadd.f32 %v2487, 1e-06
    %v2490 = vrsqrt.pop %v2488
    %v2491 = vrsqrt.pop %v2489
    %v2492 = vmul.f32 %v2477, %v2490
    %v2493 = vmul.f32 %v2478, %v2491
    %v2494 = vlaneseq
    %v2495 = vshrl.u32 %v2494, 7
    %v2496 = vsub.s32 0, %v2495
    %v2497 = vrot.slane %v2464, %v2496
    %v2498 = vmul.f32 %v2492, %v2497
    %v2499 = vmul.f32 %v2493, %v2497
    %v2500 = vlaneseq
    %v2501 = vshrl.u32 %v2500, 7
    %v2502 = vsub.s32 0, %v2501
    %v2503 = vrot.slane %v2465, %v2502
    %v2504 = vadd.f32 %v2498, %v2503
    %v2505 = vadd.f32 %v2499, %v2503
    %v2506 = vld [vmem:[%s315] sm:$0xff]
    %v2507 = vld [vmem:[%s315 + $0x8] sm:$0xff]
    %v2508 = vld [vmem:[%s315 + $0x10] sm:$0xff]
    %v2509 = vld [vmem:[%s315 + $0x18] sm:$0xff]
    %v2510 = vld [vmem:[%s315 + $0x20] sm:$0xff]
    %v2511 = vld [vmem:[%s315 + $0x28] sm:$0xff]
    %v2512 = vld [vmem:[%s315 + $0x30] sm:$0xff]
    %v2513 = vld [vmem:[%s315 + $0x38] sm:$0xff]
    %v2514 = vld [vmem:[%s315 + $0x40] sm:$0xff]
    %v2515 = vld [vmem:[%s315 + $0x48] sm:$0xff]
    %v2516 = vld [vmem:[%s315 + $0x50] sm:$0xff]
    %v2517 = vld [vmem:[%s315 + $0x58] sm:$0xff]
    %v2518 = vld [vmem:[%s315 + $0x60] sm:$0xff]
    %v2519 = vld [vmem:[%s315 + $0x68] sm:$0xff]
    %v2520 = vld [vmem:[%s315 + $0x70] sm:$0xff]
    %v2521 = vld [vmem:[%s315 + $0x78] sm:$0xff]
    %v2522 = vld [vmem:[%s315 + $0x402] sm:$0x1]
    %v2523 = vlaneseq
    %v2524 = vshrl.u32 %v2523, 7
    %v2525 = vsub.s32 0, %v2524
    %v2526 = vrot.slane %v2522, %v2525
    %2527 = vmatprep.subr.mxu0 0.0
    %2528 = vmatpush1.msra.mxu0 %v2521
    %2529 = vmatprep.subr.mxu0 0.0
    %2530 = vmatpush1.msra.mxu0 %v2520
    %2531 = vmatprep.subr.mxu0 0.0
    %2532 = vmatpush1.msra.mxu0 %v2519
    %2533 = vmatprep.subr.mxu0 0.0
    %2534 = vmatpush1.msra.mxu0 %v2518
    %2535 = vmatprep.subr.mxu0 0.0
    %2536 = vmatpush1.msra.mxu0 %v2517
    %2537 = vmatprep.subr.mxu0 0.0
    %2538 = vmatpush1.msra.mxu0 %v2516
    %2539 = vmatprep.subr.mxu0 0.0
    %2540 = vmatpush1.msra.mxu0 %v2515
    %2541 = vmatprep.subr.mxu0 0.0
    %2542 = vmatpush1.msra.mxu0 %v2514
    %2543 = vmatprep.subr.mxu0 0.0
    %2544 = vmatpush1.msra.mxu0 %v2513
    %2545 = vmatprep.subr.mxu0 0.0
    %2546 = vmatpush1.msra.mxu0 %v2512
    %2547 = vmatprep.subr.mxu0 0.0
    %2548 = vmatpush1.msra.mxu0 %v2511
    %2549 = vmatprep.subr.mxu0 0.0
    %2550 = vmatpush1.msra.mxu0 %v2510
    %2551 = vmatprep.subr.mxu0 0.0
    %2552 = vmatpush1.msra.mxu0 %v2509
    %2553 = vmatprep.subr.mxu0 0.0
    %2554 = vmatpush1.msra.mxu0 %v2508
    %2555 = vmatprep.subr.mxu0 0.0
    %2556 = vmatpush1.msra.mxu0 %v2507
    %2557 = vmatprep.subr.mxu0 0.0
    %2558 = vmatpush1.msra.mxu0 %v2506
    %2559 = vmatprep.subr.mxu0 0.0
    %2560 = vmatpush2.msra.mxu0 0.0
    %2561 = vmatprep.subr.mxu0 0.0
    %2562 = vmatpush2.msra.mxu0 0.0
    %2563 = vmatprep.subr.mxu0 0.0
    %2564 = vmatpush2.msra.mxu0 0.0
    %2565 = vmatprep.subr.mxu0 0.0
    %2566 = vmatpush2.msra.mxu0 0.0
    %2567 = vmatprep.subr.mxu0 0.0
    %2568 = vmatpush2.msra.mxu0 0.0
    %2569 = vmatprep.subr.mxu0 0.0
    %2570 = vmatpush2.msra.mxu0 0.0
    %2571 = vmatprep.subr.mxu0 0.0
    %2572 = vmatpush2.msra.mxu0 0.0
    %2573 = vmatprep.subr.mxu0 0.0
    %2574 = vmatpush2.msra.mxu0 0.0
    %2575 = vmatprep.subr.mxu0 0.0
    %2576 = vmatpush2.msra.mxu0 0.0
    %2577 = vmatprep.subr.mxu0 0.0
    %2578 = vmatpush2.msra.mxu0 0.0
    %2579 = vmatprep.subr.mxu0 0.0
    %2580 = vmatpush2.msra.mxu0 0.0
    %2581 = vmatprep.subr.mxu0 0.0
    %2582 = vmatpush2.msra.mxu0 0.0
    %2583 = vmatprep.subr.mxu0 0.0
    %2584 = vmatpush2.msra.mxu0 0.0
    %2585 = vmatprep.subr.mxu0 0.0
    %2586 = vmatpush2.msra.mxu0 0.0
    %2587 = vmatprep.subr.mxu0 0.0
    %2588 = vmatpush2.msra.mxu0 0.0
    %2589 = vmatprep.subr.mxu0 0.0
    %2590 = vmatpush2.msra.mxu0 0.0
    %2591 = vmatprep.mubr.f32.mxu0 0.0
    %2592 = vmatmul.mubr.f32.gmra.mxu0 %v2504
    %v2593 = vpop.f32.mrf.mxu0
    %v2594 = vadd.f32 %v2526, %v2593
    %v2595 = vpop.f32.mrf.mxu0
    %2596 = vmatprep.mubr.f32.mxu0 0.0
    %2597 = vmatmul.mubr.f32.gmra.mxu0 %v2505
    %v2598 = vpop.f32.mrf.mxu0
    %v2599 = vadd.f32 %v2526, %v2598
    %v2600 = vpop.f32.mrf.mxu0
    %2601 = vdwg.mxu0
    %v2602 = vld [vmem:[%s315 + $0x80] sm:$0xff]
    %v2603 = vld [vmem:[%s315 + $0x88] sm:$0xff]
    %v2604 = vld [vmem:[%s315 + $0x90] sm:$0xff]
    %v2605 = vld [vmem:[%s315 + $0x98] sm:$0xff]
    %v2606 = vld [vmem:[%s315 + $0xa0] sm:$0xff]
    %v2607 = vld [vmem:[%s315 + $0xa8] sm:$0xff]
    %v2608 = vld [vmem:[%s315 + $0xb0] sm:$0xff]
    %v2609 = vld [vmem:[%s315 + $0xb8] sm:$0xff]
    %v2610 = vld [vmem:[%s315 + $0xc0] sm:$0xff]
    %v2611 = vld [vmem:[%s315 + $0xc8] sm:$0xff]
    %v2612 = vld [vmem:[%s315 + $0xd0] sm:$0xff]
    %v2613 = vld [vmem:[%s315 + $0xd8] sm:$0xff]
    %v2614 = vld [vmem:[%s315 + $0xe0] sm:$0xff]
    %v2615 = vld [vmem:[%s315 + $0xe8] sm:$0xff]
    %v2616 = vld [vmem:[%s315 + $0xf0] sm:$0xff]
    %v2617 = vld [vmem:[%s315 + $0xf8] sm:$0xff]
    %v2618 = vld [vmem:[%s315 + $0x403] sm:$0x1]
    %v2619 = vlaneseq
    %v2620 = vshrl.u32 %v2619, 7
    %v2621 = vsub.s32 0, %v2620
    %v2622 = vrot.slane %v2618, %v2621
    %2623 = vmatprep.subr.mxu0 0.0
    %2624 = vmatpush1.msra.mxu0 %v2617
    %2625 = vmatprep.subr.mxu0 0.0
    %2626 = vmatpush1.msra.mxu0 %v2616
    %2627 = vmatprep.subr.mxu0 0.0
    %2628 = vmatpush1.msra.mxu0 %v2615
    %2629 = vmatprep.subr.mxu0 0.0
    %2630 = vmatpush1.msra.mxu0 %v2614
    %2631 = vmatprep.subr.mxu0 0.0
    %2632 = vmatpush1.msra.mxu0 %v2613
    %2633 = vmatprep.subr.mxu0 0.0
    %2634 = vmatpush1.msra.mxu0 %v2612
    %2635 = vmatprep.subr.mxu0 0.0
    %2636 = vmatpush1.msra.mxu0 %v2611
    %2637 = vmatprep.subr.mxu0 0.0
    %2638 = vmatpush1.msra.mxu0 %v2610
    %2639 = vmatprep.subr.mxu0 0.0
    %2640 = vmatpush1.msra.mxu0 %v2609
    %2641 = vmatprep.subr.mxu0 0.0
    %2642 = vmatpush1.msra.mxu0 %v2608
    %2643 = vmatprep.subr.mxu0 0.0
    %2644 = vmatpush1.msra.mxu0 %v2607
    %2645 = vmatprep.subr.mxu0 0.0
    %2646 = vmatpush1.msra.mxu0 %v2606
    %2647 = vmatprep.subr.mxu0 0.0
    %2648 = vmatpush1.msra.mxu0 %v2605
    %2649 = vmatprep.subr.mxu0 0.0
    %2650 = vmatpush1.msra.mxu0 %v2604
    %2651 = vmatprep.subr.mxu0 0.0
    %2652 = vmatpush1.msra.mxu0 %v2603
    %2653 = vmatprep.subr.mxu0 0.0
    %2654 = vmatpush1.msra.mxu0 %v2602
    %2655 = vmatprep.subr.mxu0 0.0
    %2656 = vmatpush2.msra.mxu0 0.0
    %2657 = vmatprep.subr.mxu0 0.0
    %2658 = vmatpush2.msra.mxu0 0.0
    %2659 = vmatprep.subr.mxu0 0.0
    %2660 = vmatpush2.msra.mxu0 0.0
    %2661 = vmatprep.subr.mxu0 0.0
    %2662 = vmatpush2.msra.mxu0 0.0
    %2663 = vmatprep.subr.mxu0 0.0
    %2664 = vmatpush2.msra.mxu0 0.0
    %2665 = vmatprep.subr.mxu0 0.0
    %2666 = vmatpush2.msra.mxu0 0.0
    %2667 = vmatprep.subr.mxu0 0.0
    %2668 = vmatpush2.msra.mxu0 0.0
    %2669 = vmatprep.subr.mxu0 0.0
    %2670 = vmatpush2.msra.mxu0 0.0
    %2671 = vmatprep.subr.mxu0 0.0
    %2672 = vmatpush2.msra.mxu0 0.0
    %2673 = vmatprep.subr.mxu0 0.0
    %2674 = vmatpush2.msra.mxu0 0.0
    %2675 = vmatprep.subr.mxu0 0.0
    %2676 = vmatpush2.msra.mxu0 0.0
    %2677 = vmatprep.subr.mxu0 0.0
    %2678 = vmatpush2.msra.mxu0 0.0
    %2679 = vmatprep.subr.mxu0 0.0
    %2680 = vmatpush2.msra.mxu0 0.0
    %2681 = vmatprep.subr.mxu0 0.0
    %2682 = vmatpush2.msra.mxu0 0.0
    %2683 = vmatprep.subr.mxu0 0.0
    %2684 = vmatpush2.msra.mxu0 0.0
    %2685 = vmatprep.subr.mxu0 0.0
    %2686 = vmatpush2.msra.mxu0 0.0
    %2687 = vmatprep.mubr.f32.mxu0 0.0
    %2688 = vmatmul.mubr.f32.gmra.mxu0 %v2504
    %v2689 = vpop.f32.mrf.mxu0
    %v2690 = vadd.f32 %v2622, %v2689
    %v2691 = vpop.f32.mrf.mxu0
    %2692 = vmatprep.mubr.f32.mxu0 0.0
    %2693 = vmatmul.mubr.f32.gmra.mxu0 %v2505
    %v2694 = vpop.f32.mrf.mxu0
    %v2695 = vadd.f32 %v2622, %v2694
    %v2696 = vpop.f32.mrf.mxu0
    %2697 = vdwg.mxu0
    %v2698 = vld [vmem:[%s315 + $0x100] sm:$0xff]
    %v2699 = vld [vmem:[%s315 + $0x108] sm:$0xff]
    %v2700 = vld [vmem:[%s315 + $0x110] sm:$0xff]
    %v2701 = vld [vmem:[%s315 + $0x118] sm:$0xff]
    %v2702 = vld [vmem:[%s315 + $0x120] sm:$0xff]
    %v2703 = vld [vmem:[%s315 + $0x128] sm:$0xff]
    %v2704 = vld [vmem:[%s315 + $0x130] sm:$0xff]
    %v2705 = vld [vmem:[%s315 + $0x138] sm:$0xff]
    %v2706 = vld [vmem:[%s315 + $0x140] sm:$0xff]
    %v2707 = vld [vmem:[%s315 + $0x148] sm:$0xff]
    %v2708 = vld [vmem:[%s315 + $0x150] sm:$0xff]
    %v2709 = vld [vmem:[%s315 + $0x158] sm:$0xff]
    %v2710 = vld [vmem:[%s315 + $0x160] sm:$0xff]
    %v2711 = vld [vmem:[%s315 + $0x168] sm:$0xff]
    %v2712 = vld [vmem:[%s315 + $0x170] sm:$0xff]
    %v2713 = vld [vmem:[%s315 + $0x178] sm:$0xff]
    %v2714 = vld [vmem:[%s315 + $0x404] sm:$0x1]
    %v2715 = vlaneseq
    %v2716 = vshrl.u32 %v2715, 7
    %v2717 = vsub.s32 0, %v2716
    %v2718 = vrot.slane %v2714, %v2717
    %2719 = vmatprep.subr.mxu0 0.0
    %2720 = vmatpush1.msra.mxu0 %v2713
    %2721 = vmatprep.subr.mxu0 0.0
    %2722 = vmatpush1.msra.mxu0 %v2712
    %2723 = vmatprep.subr.mxu0 0.0
    %2724 = vmatpush1.msra.mxu0 %v2711
    %2725 = vmatprep.subr.mxu0 0.0
    %2726 = vmatpush1.msra.mxu0 %v2710
    %2727 = vmatprep.subr.mxu0 0.0
    %2728 = vmatpush1.msra.mxu0 %v2709
    %2729 = vmatprep.subr.mxu0 0.0
    %2730 = vmatpush1.msra.mxu0 %v2708
    %2731 = vmatprep.subr.mxu0 0.0
    %2732 = vmatpush1.msra.mxu0 %v2707
    %2733 = vmatprep.subr.mxu0 0.0
    %2734 = vmatpush1.msra.mxu0 %v2706
    %2735 = vmatprep.subr.mxu0 0.0
    %2736 = vmatpush1.msra.mxu0 %v2705
    %2737 = vmatprep.subr.mxu0 0.0
    %2738 = vmatpush1.msra.mxu0 %v2704
    %2739 = vmatprep.subr.mxu0 0.0
    %2740 = vmatpush1.msra.mxu0 %v2703
    %2741 = vmatprep.subr.mxu0 0.0
    %2742 = vmatpush1.msra.mxu0 %v2702
    %2743 = vmatprep.subr.mxu0 0.0
    %2744 = vmatpush1.msra.mxu0 %v2701
    %2745 = vmatprep.subr.mxu0 0.0
    %2746 = vmatpush1.msra.mxu0 %v2700
    %2747 = vmatprep.subr.mxu0 0.0
    %2748 = vmatpush1.msra.mxu0 %v2699
    %2749 = vmatprep.subr.mxu0 0.0
    %2750 = vmatpush1.msra.mxu0 %v2698
    %2751 = vmatprep.subr.mxu0 0.0
    %2752 = vmatpush2.msra.mxu0 0.0
    %2753 = vmatprep.subr.mxu0 0.0
    %2754 = vmatpush2.msra.mxu0 0.0
    %2755 = vmatprep.subr.mxu0 0.0
    %2756 = vmatpush2.msra.mxu0 0.0
    %2757 = vmatprep.subr.mxu0 0.0
    %2758 = vmatpush2.msra.mxu0 0.0
    %2759 = vmatprep.subr.mxu0 0.0
    %2760 = vmatpush2.msra.mxu0 0.0
    %2761 = vmatprep.subr.mxu0 0.0
    %2762 = vmatpush2.msra.mxu0 0.0
    %2763 = vmatprep.subr.mxu0 0.0
    %2764 = vmatpush2.msra.mxu0 0.0
    %2765 = vmatprep.subr.mxu0 0.0
    %2766 = vmatpush2.msra.mxu0 0.0
    %2767 = vmatprep.subr.mxu0 0.0
    %2768 = vmatpush2.msra.mxu0 0.0
    %2769 = vmatprep.subr.mxu0 0.0
    %2770 = vmatpush2.msra.mxu0 0.0
    %2771 = vmatprep.subr.mxu0 0.0
    %2772 = vmatpush2.msra.mxu0 0.0
    %2773 = vmatprep.subr.mxu0 0.0
    %2774 = vmatpush2.msra.mxu0 0.0
    %2775 = vmatprep.subr.mxu0 0.0
    %2776 = vmatpush2.msra.mxu0 0.0
    %2777 = vmatprep.subr.mxu0 0.0
    %2778 = vmatpush2.msra.mxu0 0.0
    %2779 = vmatprep.subr.mxu0 0.0
    %2780 = vmatpush2.msra.mxu0 0.0
    %2781 = vmatprep.subr.mxu0 0.0
    %2782 = vmatpush2.msra.mxu0 0.0
    %2783 = vmatprep.mubr.f32.mxu0 0.0
    %2784 = vmatmul.mubr.f32.gmra.mxu0 %v2504
    %v2785 = vpop.f32.mrf.mxu0
    %v2786 = vadd.f32 %v2718, %v2785
    %v2787 = vpop.f32.mrf.mxu0
    %2788 = vmatprep.mubr.f32.mxu0 0.0
    %2789 = vmatmul.mubr.f32.gmra.mxu0 %v2505
    %v2790 = vpop.f32.mrf.mxu0
    %v2791 = vadd.f32 %v2718, %v2790
    %v2792 = vpop.f32.mrf.mxu0
    %2793 = vdwg.mxu0
    %v2795 = vsel %vm927, %v2599, 0
    %2797 = vmatprep.subr.mxu0 0.0
    %2798 = vmatpush1.msra.mxu0 0.0
    %2799 = vmatprep.subr.mxu0 0.0
    %2800 = vmatpush1.msra.mxu0 0.0
    %2801 = vmatprep.subr.mxu0 0.0
    %2802 = vmatpush1.msra.mxu0 0.0
    %2803 = vmatprep.subr.mxu0 0.0
    %2804 = vmatpush1.msra.mxu0 0.0
    %2805 = vmatprep.subr.mxu0 0.0
    %2806 = vmatpush1.msra.mxu0 0.0
    %2807 = vmatprep.subr.mxu0 0.0
    %2808 = vmatpush1.msra.mxu0 0.0
    %2809 = vmatprep.subr.mxu0 0.0
    %2810 = vmatpush1.msra.mxu0 0.0
    %2811 = vmatprep.subr.mxu0 0.0
    %2812 = vmatpush1.msra.mxu0 0.0
    %2813 = vmatprep.subr.mxu0 0.0
    %2814 = vmatpush1.msra.mxu0 0.0
    %2815 = vmatprep.subr.mxu0 0.0
    %2816 = vmatpush1.msra.mxu0 0.0
    %2817 = vmatprep.subr.mxu0 0.0
    %2818 = vmatpush1.msra.mxu0 0.0
    %2819 = vmatprep.subr.mxu0 0.0
    %2820 = vmatpush1.msra.mxu0 0.0
    %2821 = vmatprep.subr.mxu0 0.0
    %2822 = vmatpush1.msra.mxu0 0.0
    %2823 = vmatprep.subr.mxu0 0.0
    %2824 = vmatpush1.msra.mxu0 0.0
    %2825 = vmatprep.subr.mxu0 0.0
    %2826 = vmatpush1.msra.mxu0 %v2795
    %2827 = vmatprep.subr.mxu0 0.0
    %2828 = vmatpush1.msra.mxu0 %v2594
    %2829 = vmatprep.subr.mxu0 0.0
    %2830 = vmatpush2.msra.mxu0 0.0
    %2831 = vmatprep.subr.mxu0 0.0
    %2832 = vmatpush2.msra.mxu0 0.0
    %2833 = vmatprep.subr.mxu0 0.0
    %2834 = vmatpush2.msra.mxu0 0.0
    %2835 = vmatprep.subr.mxu0 0.0
    %2836 = vmatpush2.msra.mxu0 0.0
    %2837 = vmatprep.subr.mxu0 0.0
    %2838 = vmatpush2.msra.mxu0 0.0
    %2839 = vmatprep.subr.mxu0 0.0
    %2840 = vmatpush2.msra.mxu0 0.0
    %2841 = vmatprep.subr.mxu0 0.0
    %2842 = vmatpush2.msra.mxu0 0.0
    %2843 = vmatprep.subr.mxu0 0.0
    %2844 = vmatpush2.msra.mxu0 0.0
    %2845 = vmatprep.subr.mxu0 0.0
    %2846 = vmatpush2.msra.mxu0 0.0
    %2847 = vmatprep.subr.mxu0 0.0
    %2848 = vmatpush2.msra.mxu0 0.0
    %2849 = vmatprep.subr.mxu0 0.0
    %2850 = vmatpush2.msra.mxu0 0.0
    %2851 = vmatprep.subr.mxu0 0.0
    %2852 = vmatpush2.msra.mxu0 0.0
    %2853 = vmatprep.subr.mxu0 0.0
    %2854 = vmatpush2.msra.mxu0 0.0
    %2855 = vmatprep.subr.mxu0 0.0
    %2856 = vmatpush2.msra.mxu0 0.0
    %2857 = vmatprep.subr.mxu0 0.0
    %2858 = vmatpush2.msra.mxu0 0.0
    %2859 = vmatprep.subr.mxu0 0.0
    %2860 = vmatpush2.msra.mxu0 0.0
    %2861 = vmatprep.mubr.f32.mxu0 0.0
    %2862 = vmatmul.mubr.f32.gmra.mxu0 %v1254
    %v2863 = vpop.f32.mrf.mxu0
    %v2864 = vadd.f32 0.0, %v2863
    %v2865 = vpop.f32.mrf.mxu0
    %2866 = vmatprep.mubr.f32.mxu0 0.0
    %2867 = vmatmul.mubr.f32.gmra.mxu0 %v1257
    %v2868 = vpop.f32.mrf.mxu0
    %v2869 = vadd.f32 0.0, %v2868
    %v2870 = vpop.f32.mrf.mxu0
    %2871 = vmatprep.mubr.f32.mxu0 0.0
    %2872 = vmatmul.mubr.f32.gmra.mxu0 %v1260
    %v2873 = vpop.f32.mrf.mxu0
    %v2874 = vadd.f32 0.0, %v2873
    %v2875 = vpop.f32.mrf.mxu0
    %2876 = vmatprep.mubr.f32.mxu0 0.0
    %2877 = vmatmul.mubr.f32.gmra.mxu0 %v1263
    %v2878 = vpop.f32.mrf.mxu0
    %v2879 = vadd.f32 0.0, %v2878
    %v2880 = vpop.f32.mrf.mxu0
    %2881 = vmatprep.mubr.f32.mxu0 0.0
    %2882 = vmatmul.mubr.f32.gmra.mxu0 %v1266
    %v2883 = vpop.f32.mrf.mxu0
    %v2884 = vadd.f32 0.0, %v2883
    %v2885 = vpop.f32.mrf.mxu0
    %2886 = vdwg.mxu0
    %v2887 = vmul.f32 %v2864, %v908
    %v2888 = vmul.f32 %v2869, %v909
    %v2889 = vmul.f32 %v2874, %v910
    %v2890 = vmul.f32 %v2879, %v911
    %v2891 = vmul.f32 %v2884, %v912
    %v2893 = vsel %vm927, %v2695, 0
    %2895 = vmatprep.subr.mxu0 0.0
    %2896 = vmatpush1.msra.mxu0 0.0
    %2897 = vmatprep.subr.mxu0 0.0
    %2898 = vmatpush1.msra.mxu0 0.0
    %2899 = vmatprep.subr.mxu0 0.0
    %2900 = vmatpush1.msra.mxu0 0.0
    %2901 = vmatprep.subr.mxu0 0.0
    %2902 = vmatpush1.msra.mxu0 0.0
    %2903 = vmatprep.subr.mxu0 0.0
    %2904 = vmatpush1.msra.mxu0 0.0
    %2905 = vmatprep.subr.mxu0 0.0
    %2906 = vmatpush1.msra.mxu0 0.0
    %2907 = vmatprep.subr.mxu0 0.0
    %2908 = vmatpush1.msra.mxu0 0.0
    %2909 = vmatprep.subr.mxu0 0.0
    %2910 = vmatpush1.msra.mxu0 0.0
    %2911 = vmatprep.subr.mxu0 0.0
    %2912 = vmatpush1.msra.mxu0 0.0
    %2913 = vmatprep.subr.mxu0 0.0
    %2914 = vmatpush1.msra.mxu0 0.0
    %2915 = vmatprep.subr.mxu0 0.0
    %2916 = vmatpush1.msra.mxu0 0.0
    %2917 = vmatprep.subr.mxu0 0.0
    %2918 = vmatpush1.msra.mxu0 0.0
    %2919 = vmatprep.subr.mxu0 0.0
    %2920 = vmatpush1.msra.mxu0 0.0
    %2921 = vmatprep.subr.mxu0 0.0
    %2922 = vmatpush1.msra.mxu0 0.0
    %2923 = vmatprep.subr.mxu0 0.0
    %2924 = vmatpush1.msra.mxu0 %v2893
    %2925 = vmatprep.subr.mxu0 0.0
    %2926 = vmatpush1.msra.mxu0 %v2690
    %2927 = vmatprep.subr.mxu0 0.0
    %2928 = vmatpush2.msra.mxu0 0.0
    %2929 = vmatprep.subr.mxu0 0.0
    %2930 = vmatpush2.msra.mxu0 0.0
    %2931 = vmatprep.subr.mxu0 0.0
    %2932 = vmatpush2.msra.mxu0 0.0
    %2933 = vmatprep.subr.mxu0 0.0
    %2934 = vmatpush2.msra.mxu0 0.0
    %2935 = vmatprep.subr.mxu0 0.0
    %2936 = vmatpush2.msra.mxu0 0.0
    %2937 = vmatprep.subr.mxu0 0.0
    %2938 = vmatpush2.msra.mxu0 0.0
    %2939 = vmatprep.subr.mxu0 0.0
    %2940 = vmatpush2.msra.mxu0 0.0
    %2941 = vmatprep.subr.mxu0 0.0
    %2942 = vmatpush2.msra.mxu0 0.0
    %2943 = vmatprep.subr.mxu0 0.0
    %2944 = vmatpush2.msra.mxu0 0.0
    %2945 = vmatprep.subr.mxu0 0.0
    %2946 = vmatpush2.msra.mxu0 0.0
    %2947 = vmatprep.subr.mxu0 0.0
    %2948 = vmatpush2.msra.mxu0 0.0
    %2949 = vmatprep.subr.mxu0 0.0
    %2950 = vmatpush2.msra.mxu0 0.0
    %2951 = vmatprep.subr.mxu0 0.0
    %2952 = vmatpush2.msra.mxu0 0.0
    %2953 = vmatprep.subr.mxu0 0.0
    %2954 = vmatpush2.msra.mxu0 0.0
    %2955 = vmatprep.subr.mxu0 0.0
    %2956 = vmatpush2.msra.mxu0 0.0
    %2957 = vmatprep.subr.mxu0 0.0
    %2958 = vmatpush2.msra.mxu0 0.0
    %2959 = vmatprep.mubr.f32.mxu0 0.0
    %2960 = vmatmul.mubr.f32.gmra.mxu0 %v1254
    %v2961 = vpop.f32.mrf.mxu0
    %v2962 = vadd.f32 0.0, %v2961
    %v2963 = vpop.f32.mrf.mxu0
    %2964 = vmatprep.mubr.f32.mxu0 0.0
    %2965 = vmatmul.mubr.f32.gmra.mxu0 %v1257
    %v2966 = vpop.f32.mrf.mxu0
    %v2967 = vadd.f32 0.0, %v2966
    %v2968 = vpop.f32.mrf.mxu0
    %2969 = vmatprep.mubr.f32.mxu0 0.0
    %2970 = vmatmul.mubr.f32.gmra.mxu0 %v1260
    %v2971 = vpop.f32.mrf.mxu0
    %v2972 = vadd.f32 0.0, %v2971
    %v2973 = vpop.f32.mrf.mxu0
    %2974 = vmatprep.mubr.f32.mxu0 0.0
    %2975 = vmatmul.mubr.f32.gmra.mxu0 %v1263
    %v2976 = vpop.f32.mrf.mxu0
    %v2977 = vadd.f32 0.0, %v2976
    %v2978 = vpop.f32.mrf.mxu0
    %2979 = vmatprep.mubr.f32.mxu0 0.0
    %2980 = vmatmul.mubr.f32.gmra.mxu0 %v1266
    %v2981 = vpop.f32.mrf.mxu0
    %v2982 = vadd.f32 0.0, %v2981
    %v2983 = vpop.f32.mrf.mxu0
    %2984 = vdwg.mxu0
    %v2986 = vsel %vm927, %v2791, 0
    %2988 = vmatprep.subr.mxu0 0.0
    %2989 = vmatpush1.msra.mxu0 0.0
    %2990 = vmatprep.subr.mxu0 0.0
    %2991 = vmatpush1.msra.mxu0 0.0
    %2992 = vmatprep.subr.mxu0 0.0
    %2993 = vmatpush1.msra.mxu0 0.0
    %2994 = vmatprep.subr.mxu0 0.0
    %2995 = vmatpush1.msra.mxu0 0.0
    %2996 = vmatprep.subr.mxu0 0.0
    %2997 = vmatpush1.msra.mxu0 0.0
    %2998 = vmatprep.subr.mxu0 0.0
    %2999 = vmatpush1.msra.mxu0 0.0
    %3000 = vmatprep.subr.mxu0 0.0
    %3001 = vmatpush1.msra.mxu0 0.0
    %3002 = vmatprep.subr.mxu0 0.0
    %3003 = vmatpush1.msra.mxu0 0.0
    %3004 = vmatprep.subr.mxu0 0.0
    %3005 = vmatpush1.msra.mxu0 0.0
    %3006 = vmatprep.subr.mxu0 0.0
    %3007 = vmatpush1.msra.mxu0 0.0
    %3008 = vmatprep.subr.mxu0 0.0
    %3009 = vmatpush1.msra.mxu0 0.0
    %3010 = vmatprep.subr.mxu0 0.0
    %3011 = vmatpush1.msra.mxu0 0.0
    %3012 = vmatprep.subr.mxu0 0.0
    %3013 = vmatpush1.msra.mxu0 0.0
    %3014 = vmatprep.subr.mxu0 0.0
    %3015 = vmatpush1.msra.mxu0 0.0
    %3016 = vmatprep.subr.mxu0 0.0
    %3017 = vmatpush1.msra.mxu0 %v2986
    %3018 = vmatprep.subr.mxu0 0.0
    %3019 = vmatpush1.msra.mxu0 %v2786
    %3020 = vmatprep.subr.mxu0 0.0
    %3021 = vmatpush2.msra.mxu0 0.0
    %3022 = vmatprep.subr.mxu0 0.0
    %3023 = vmatpush2.msra.mxu0 0.0
    %3024 = vmatprep.subr.mxu0 0.0
    %3025 = vmatpush2.msra.mxu0 0.0
    %3026 = vmatprep.subr.mxu0 0.0
    %3027 = vmatpush2.msra.mxu0 0.0
    %3028 = vmatprep.subr.mxu0 0.0
    %3029 = vmatpush2.msra.mxu0 0.0
    %3030 = vmatprep.subr.mxu0 0.0
    %3031 = vmatpush2.msra.mxu0 0.0
    %3032 = vmatprep.subr.mxu0 0.0
    %3033 = vmatpush2.msra.mxu0 0.0
    %3034 = vmatprep.subr.mxu0 0.0
    %3035 = vmatpush2.msra.mxu0 0.0
    %3036 = vmatprep.subr.mxu0 0.0
    %3037 = vmatpush2.msra.mxu0 0.0
    %3038 = vmatprep.subr.mxu0 0.0
    %3039 = vmatpush2.msra.mxu0 0.0
    %3040 = vmatprep.subr.mxu0 0.0
    %3041 = vmatpush2.msra.mxu0 0.0
    %3042 = vmatprep.subr.mxu0 0.0
    %3043 = vmatpush2.msra.mxu0 0.0
    %3044 = vmatprep.subr.mxu0 0.0
    %3045 = vmatpush2.msra.mxu0 0.0
    %3046 = vmatprep.subr.mxu0 0.0
    %3047 = vmatpush2.msra.mxu0 0.0
    %3048 = vmatprep.subr.mxu0 0.0
    %3049 = vmatpush2.msra.mxu0 0.0
    %3050 = vmatprep.subr.mxu0 0.0
    %3051 = vmatpush2.msra.mxu0 0.0
    %3052 = vmatprep.mubr.f32.mxu0 0.0
    %3053 = vmatmul.mubr.f32.gmra.mxu0 %v1254
    %v3054 = vpop.f32.mrf.mxu0
    %v3055 = vadd.f32 0.0, %v3054
    %v3056 = vpop.f32.mrf.mxu0
    %3057 = vmatprep.mubr.f32.mxu0 0.0
    %3058 = vmatmul.mubr.f32.gmra.mxu0 %v1257
    %v3059 = vpop.f32.mrf.mxu0
    %v3060 = vadd.f32 0.0, %v3059
    %v3061 = vpop.f32.mrf.mxu0
    %3062 = vmatprep.mubr.f32.mxu0 0.0
    %3063 = vmatmul.mubr.f32.gmra.mxu0 %v1260
    %v3064 = vpop.f32.mrf.mxu0
    %v3065 = vadd.f32 0.0, %v3064
    %v3066 = vpop.f32.mrf.mxu0
    %3067 = vmatprep.mubr.f32.mxu0 0.0
    %3068 = vmatmul.mubr.f32.gmra.mxu0 %v1263
    %v3069 = vpop.f32.mrf.mxu0
    %v3070 = vadd.f32 0.0, %v3069
    %v3071 = vpop.f32.mrf.mxu0
    %3072 = vmatprep.mubr.f32.mxu0 0.0
    %3073 = vmatmul.mubr.f32.gmra.mxu0 %v1266
    %v3074 = vpop.f32.mrf.mxu0
    %v3075 = vadd.f32 0.0, %v3074
    %v3076 = vpop.f32.mrf.mxu0
    %3077 = vdwg.mxu0
    %v3078 = vmul.f32 %v3055, %v908
    %v3079 = vmul.f32 %v3060, %v909
    %v3080 = vmul.f32 %v3065, %v910
    %v3081 = vmul.f32 %v3070, %v911
    %v3082 = vmul.f32 %v3075, %v912
    %3083 = vmatprep.subr.mxu0 0.0
    %3084 = vmatpush1.xpose.msra.mxu0 0.0
    %3085 = vmatprep.subr.mxu0 0.0
    %3086 = vmatpush1.xpose.msra.mxu0 0.0
    %3087 = vmatprep.subr.mxu0 0.0
    %3088 = vmatpush1.xpose.msra.mxu0 0.0
    %3089 = vmatprep.subr.mxu0 0.0
    %3090 = vmatpush1.xpose.msra.mxu0 0.0
    %3091 = vmatprep.subr.mxu0 0.0
    %3092 = vmatpush1.xpose.msra.mxu0 0.0
    %3093 = vmatprep.subr.mxu0 0.0
    %3094 = vmatpush1.xpose.msra.mxu0 0.0
    %3095 = vmatprep.subr.mxu0 0.0
    %3096 = vmatpush1.xpose.msra.mxu0 0.0
    %3097 = vmatprep.subr.mxu0 0.0
    %3098 = vmatpush1.xpose.msra.mxu0 0.0
    %3099 = vmatprep.subr.mxu0 0.0
    %3100 = vmatpush1.xpose.msra.mxu0 0.0
    %3101 = vmatprep.subr.mxu0 0.0
    %3102 = vmatpush1.xpose.msra.mxu0 0.0
    %3103 = vmatprep.subr.mxu0 0.0
    %3104 = vmatpush1.xpose.msra.mxu0 0.0
    %3105 = vmatprep.subr.mxu0 0.0
    %3106 = vmatpush1.xpose.msra.mxu0 %v2982
    %3107 = vmatprep.subr.mxu0 0.0
    %3108 = vmatpush1.xpose.msra.mxu0 %v2977
    %3109 = vmatprep.subr.mxu0 0.0
    %3110 = vmatpush1.xpose.msra.mxu0 %v2972
    %3111 = vmatprep.subr.mxu0 0.0
    %3112 = vmatpush1.xpose.msra.mxu0 %v2967
    %3113 = vmatprep.subr.mxu0 0.0
    %3114 = vmatpush1.xpose.msra.mxu0 %v2962
    %3115 = vmatprep.subr.mxu0 0.0
    %3116 = vmatpush2.xpose.msra.mxu0 0.0
    %3117 = vmatprep.subr.mxu0 0.0
    %3118 = vmatpush2.xpose.msra.mxu0 0.0
    %3119 = vmatprep.subr.mxu0 0.0
    %3120 = vmatpush2.xpose.msra.mxu0 0.0
    %3121 = vmatprep.subr.mxu0 0.0
    %3122 = vmatpush2.xpose.msra.mxu0 0.0
    %3123 = vmatprep.subr.mxu0 0.0
    %3124 = vmatpush2.xpose.msra.mxu0 0.0
    %3125 = vmatprep.subr.mxu0 0.0
    %3126 = vmatpush2.xpose.msra.mxu0 0.0
    %3127 = vmatprep.subr.mxu0 0.0
    %3128 = vmatpush2.xpose.msra.mxu0 0.0
    %3129 = vmatprep.subr.mxu0 0.0
    %3130 = vmatpush2.xpose.msra.mxu0 0.0
    %3131 = vmatprep.subr.mxu0 0.0
    %3132 = vmatpush2.xpose.msra.mxu0 0.0
    %3133 = vmatprep.subr.mxu0 0.0
    %3134 = vmatpush2.xpose.msra.mxu0 0.0
    %3135 = vmatprep.subr.mxu0 0.0
    %3136 = vmatpush2.xpose.msra.mxu0 0.0
    %3137 = vmatprep.subr.mxu0 0.0
    %3138 = vmatpush2.xpose.msra.mxu0 0.0
    %3139 = vmatprep.subr.mxu0 0.0
    %3140 = vmatpush2.xpose.msra.mxu0 0.0
    %3141 = vmatprep.subr.mxu0 0.0
    %3142 = vmatpush2.xpose.msra.mxu0 0.0
    %3143 = vmatprep.subr.mxu0 0.0
    %3144 = vmatpush2.xpose.msra.mxu0 0.0
    %3145 = vmatprep.subr.mxu0 0.0
    %3146 = vmatpush2.xpose.msra.mxu0 0.0
    %3147 = vmatprep.mubr.f32.mxu0 0.0
    %3148 = vmatmul.mubr.f32.gmra.mxu0 %v2887
    %v3149 = vpop.f32.mrf.mxu0
    %v3150 = vadd.f32 %v913, %v3149
    %v3151 = vpop.f32.mrf.mxu0
    %3152 = vmatprep.mubr.f32.mxu0 0.0
    %3153 = vmatmul.mubr.f32.gmra.mxu0 %v2888
    %v3154 = vpop.f32.mrf.mxu0
    %v3155 = vadd.f32 %v914, %v3154
    %v3156 = vpop.f32.mrf.mxu0
    %3157 = vmatprep.mubr.f32.mxu0 0.0
    %3158 = vmatmul.mubr.f32.gmra.mxu0 %v2889
    %v3159 = vpop.f32.mrf.mxu0
    %v3160 = vadd.f32 %v915, %v3159
    %v3161 = vpop.f32.mrf.mxu0
    %3162 = vmatprep.mubr.f32.mxu0 0.0
    %3163 = vmatmul.mubr.f32.gmra.mxu0 %v2890
    %v3164 = vpop.f32.mrf.mxu0
    %v3165 = vadd.f32 %v916, %v3164
    %v3166 = vpop.f32.mrf.mxu0
    %3167 = vmatprep.mubr.f32.mxu0 0.0
    %3168 = vmatmul.mubr.f32.gmra.mxu0 %v2891
    %v3169 = vpop.f32.mrf.mxu0
    %v3170 = vadd.f32 %v917, %v3169
    %v3171 = vpop.f32.mrf.mxu0
    %3172 = vdwg.mxu0
    %v3173 = vsel %vm1647, %v3150, -inf
    %3174 = vmax.xlane.f32.xlu0 %v3173
    %v3175 = vpop.xlane.xlu0 %3174
    %v3176 = vsel %vm1647, %v3155, -inf
    %3177 = vmax.xlane.f32.xlu0 %v3176
    %v3178 = vpop.xlane.xlu0 %3177
    %v3179 = vsel %vm1647, %v3160, -inf
    %3180 = vmax.xlane.f32.xlu0 %v3179
    %v3181 = vpop.xlane.xlu0 %3180
    %v3182 = vsel %vm1647, %v3165, -inf
    %3183 = vmax.xlane.f32.xlu0 %v3182
    %v3184 = vpop.xlane.xlu0 %3183
    %v3185 = vsel %vm1647, %v3170, -inf
    %3186 = vmax.xlane.f32.xlu0 %v3185
    %v3187 = vpop.xlane.xlu0 %3186
    %v3188 = vsub.f32 %v3150, %v3175
    %v3189 = vsub.f32 %v3155, %v3178
    %v3190 = vsub.f32 %v3160, %v3181
    %v3191 = vsub.f32 %v3165, %v3184
    %v3192 = vsub.f32 %v3170, %v3187
    %v3193 = vmul.f32 %v3188, 1.442695
    %v3194 = vpow.pop %v3193
    %v3195 = vmul.f32 %v3189, 1.442695
    %v3196 = vpow.pop %v3195
    %v3197 = vmul.f32 %v3190, 1.442695
    %v3198 = vpow.pop %v3197
    %v3199 = vmul.f32 %v3191, 1.442695
    %v3200 = vpow.pop %v3199
    %v3201 = vmul.f32 %v3192, 1.442695
    %v3202 = vpow.pop %v3201
    %v3203 = vsel %vm1647, %v3194, 0.0
    %3204 = vadd.xlane.f32.xlu0 %v3203
    %v3205 = vpop.xlane.xlu0 %3204
    %v3206 = vsel %vm1647, %v3196, 0.0
    %3207 = vadd.xlane.f32.xlu0 %v3206
    %v3208 = vpop.xlane.xlu0 %3207
    %v3209 = vsel %vm1647, %v3198, 0.0
    %3210 = vadd.xlane.f32.xlu0 %v3209
    %v3211 = vpop.xlane.xlu0 %3210
    %v3212 = vsel %vm1647, %v3200, 0.0
    %3213 = vadd.xlane.f32.xlu0 %v3212
    %v3214 = vpop.xlane.xlu0 %3213
    %v3215 = vsel %vm1647, %v3202, 0.0
    %3216 = vadd.xlane.f32.xlu0 %v3215
    %v3217 = vpop.xlane.xlu0 %3216
    %v3218 = vrcp.pop %v3205
    %v3219 = vrcp.pop %v3208
    %v3220 = vrcp.pop %v3211
    %v3221 = vrcp.pop %v3214
    %v3222 = vrcp.pop %v3217
    %v3223 = vmul.f32 %v3194, %v3218
    %v3224 = vmul.f32 %v3196, %v3219
    %v3225 = vmul.f32 %v3198, %v3220
    %v3226 = vmul.f32 %v3200, %v3221
    %v3227 = vmul.f32 %v3202, %v3222
    %v3229 = vsel %vm1647, %v3223, 0
    %v3232 = vsel %vm1647, %v3224, 0
    %v3235 = vsel %vm1647, %v3225, 0
    %v3238 = vsel %vm1647, %v3226, 0
    %v3241 = vsel %vm1647, %v3227, 0
    %3243 = vmatprep.subr.mxu0 0.0
    %3244 = vmatpush1.msra.mxu0 0.0
    %3245 = vmatprep.subr.mxu0 0.0
    %3246 = vmatpush1.msra.mxu0 0.0
    %3247 = vmatprep.subr.mxu0 0.0
    %3248 = vmatpush1.msra.mxu0 0.0
    %3249 = vmatprep.subr.mxu0 0.0
    %3250 = vmatpush1.msra.mxu0 0.0
    %3251 = vmatprep.subr.mxu0 0.0
    %3252 = vmatpush1.msra.mxu0 0.0
    %3253 = vmatprep.subr.mxu0 0.0
    %3254 = vmatpush1.msra.mxu0 0.0
    %3255 = vmatprep.subr.mxu0 0.0
    %3256 = vmatpush1.msra.mxu0 0.0
    %3257 = vmatprep.subr.mxu0 0.0
    %3258 = vmatpush1.msra.mxu0 0.0
    %3259 = vmatprep.subr.mxu0 0.0
    %3260 = vmatpush1.msra.mxu0 0.0
    %3261 = vmatprep.subr.mxu0 0.0
    %3262 = vmatpush1.msra.mxu0 0.0
    %3263 = vmatprep.subr.mxu0 0.0
    %3264 = vmatpush1.msra.mxu0 0.0
    %3265 = vmatprep.subr.mxu0 0.0
    %3266 = vmatpush1.msra.mxu0 %v3082
    %3267 = vmatprep.subr.mxu0 0.0
    %3268 = vmatpush1.msra.mxu0 %v3081
    %3269 = vmatprep.subr.mxu0 0.0
    %3270 = vmatpush1.msra.mxu0 %v3080
    %3271 = vmatprep.subr.mxu0 0.0
    %3272 = vmatpush1.msra.mxu0 %v3079
    %3273 = vmatprep.subr.mxu0 0.0
    %3274 = vmatpush1.msra.mxu0 %v3078
    %3275 = vmatprep.subr.mxu0 0.0
    %3276 = vmatpush2.msra.mxu0 0.0
    %3277 = vmatprep.subr.mxu0 0.0
    %3278 = vmatpush2.msra.mxu0 0.0
    %3279 = vmatprep.subr.mxu0 0.0
    %3280 = vmatpush2.msra.mxu0 0.0
    %3281 = vmatprep.subr.mxu0 0.0
    %3282 = vmatpush2.msra.mxu0 0.0
    %3283 = vmatprep.subr.mxu0 0.0
    %3284 = vmatpush2.msra.mxu0 0.0
    %3285 = vmatprep.subr.mxu0 0.0
    %3286 = vmatpush2.msra.mxu0 0.0
    %3287 = vmatprep.subr.mxu0 0.0
    %3288 = vmatpush2.msra.mxu0 0.0
    %3289 = vmatprep.subr.mxu0 0.0
    %3290 = vmatpush2.msra.mxu0 0.0
    %3291 = vmatprep.subr.mxu0 0.0
    %3292 = vmatpush2.msra.mxu0 0.0
    %3293 = vmatprep.subr.mxu0 0.0
    %3294 = vmatpush2.msra.mxu0 0.0
    %3295 = vmatprep.subr.mxu0 0.0
    %3296 = vmatpush2.msra.mxu0 0.0
    %3297 = vmatprep.subr.mxu0 0.0
    %3298 = vmatpush2.msra.mxu0 0.0
    %3299 = vmatprep.subr.mxu0 0.0
    %3300 = vmatpush2.msra.mxu0 0.0
    %3301 = vmatprep.subr.mxu0 0.0
    %3302 = vmatpush2.msra.mxu0 0.0
    %3303 = vmatprep.subr.mxu0 0.0
    %3304 = vmatpush2.msra.mxu0 0.0
    %3305 = vmatprep.subr.mxu0 0.0
    %3306 = vmatpush2.msra.mxu0 0.0
    %3307 = vmatprep.mubr.f32.mxu0 0.0
    %3308 = vmatmul.mubr.f32.gmra.mxu0 %v3229
    %v3309 = vpop.f32.mrf.mxu0
    %v3310 = vadd.f32 0.0, %v3309
    %v3311 = vpop.f32.mrf.mxu0
    %3312 = vmatprep.mubr.f32.mxu0 0.0
    %3313 = vmatmul.mubr.f32.gmra.mxu0 %v3232
    %v3314 = vpop.f32.mrf.mxu0
    %v3315 = vadd.f32 0.0, %v3314
    %v3316 = vpop.f32.mrf.mxu0
    %3317 = vmatprep.mubr.f32.mxu0 0.0
    %3318 = vmatmul.mubr.f32.gmra.mxu0 %v3235
    %v3319 = vpop.f32.mrf.mxu0
    %v3320 = vadd.f32 0.0, %v3319
    %v3321 = vpop.f32.mrf.mxu0
    %3322 = vmatprep.mubr.f32.mxu0 0.0
    %3323 = vmatmul.mubr.f32.gmra.mxu0 %v3238
    %v3324 = vpop.f32.mrf.mxu0
    %v3325 = vadd.f32 0.0, %v3324
    %v3326 = vpop.f32.mrf.mxu0
    %3327 = vmatprep.mubr.f32.mxu0 0.0
    %3328 = vmatmul.mubr.f32.gmra.mxu0 %v3241
    %v3329 = vpop.f32.mrf.mxu0
    %v3330 = vadd.f32 0.0, %v3329
    %v3331 = vpop.f32.mrf.mxu0
    %3332 = vdwg.mxu0
    %3333 = vmatprep.subr.mxu0 0.0
    %3334 = vmatpush1.msra.mxu0 0.0
    %3335 = vmatprep.subr.mxu0 0.0
    %3336 = vmatpush1.msra.mxu0 0.0
    %3337 = vmatprep.subr.mxu0 0.0
    %3338 = vmatpush1.msra.mxu0 0.0
    %3339 = vmatprep.subr.mxu0 0.0
    %3340 = vmatpush1.msra.mxu0 0.0
    %3341 = vmatprep.subr.mxu0 0.0
    %3342 = vmatpush1.msra.mxu0 0.0
    %3343 = vmatprep.subr.mxu0 0.0
    %3344 = vmatpush1.msra.mxu0 0.0
    %3345 = vmatprep.subr.mxu0 0.0
    %3346 = vmatpush1.msra.mxu0 0.0
    %3347 = vmatprep.subr.mxu0 0.0
    %3348 = vmatpush1.msra.mxu0 0.0
    %3349 = vmatprep.subr.mxu0 0.0
    %3350 = vmatpush1.msra.mxu0 0.0
    %3351 = vmatprep.subr.mxu0 0.0
    %3352 = vmatpush1.msra.mxu0 0.0
    %3353 = vmatprep.subr.mxu0 0.0
    %3354 = vmatpush1.msra.mxu0 0.0
    %3355 = vmatprep.subr.mxu0 0.0
    %3356 = vmatpush1.msra.mxu0 %v3330
    %3357 = vmatprep.subr.mxu0 0.0
    %3358 = vmatpush1.msra.mxu0 %v3325
    %3359 = vmatprep.subr.mxu0 0.0
    %3360 = vmatpush1.msra.mxu0 %v3320
    %3361 = vmatprep.subr.mxu0 0.0
    %3362 = vmatpush1.msra.mxu0 %v3315
    %3363 = vmatprep.subr.mxu0 0.0
    %3364 = vmatpush1.msra.mxu0 %v3310
    %3365 = vmatprep.subr.mxu0 0.0
    %3366 = vmatpush2.msra.mxu0 0.0
    %3367 = vmatprep.subr.mxu0 0.0
    %3368 = vmatpush2.msra.mxu0 0.0
    %3369 = vmatprep.subr.mxu0 0.0
    %3370 = vmatpush2.msra.mxu0 0.0
    %3371 = vmatprep.subr.mxu0 0.0
    %3372 = vmatpush2.msra.mxu0 0.0
    %3373 = vmatprep.subr.mxu0 0.0
    %3374 = vmatpush2.msra.mxu0 0.0
    %3375 = vmatprep.subr.mxu0 0.0
    %3376 = vmatpush2.msra.mxu0 0.0
    %3377 = vmatprep.subr.mxu0 0.0
    %3378 = vmatpush2.msra.mxu0 0.0
    %3379 = vmatprep.subr.mxu0 0.0
    %3380 = vmatpush2.msra.mxu0 0.0
    %3381 = vmatprep.subr.mxu0 0.0
    %3382 = vmatpush2.msra.mxu0 0.0
    %3383 = vmatprep.subr.mxu0 0.0
    %3384 = vmatpush2.msra.mxu0 0.0
    %3385 = vmatprep.subr.mxu0 0.0
    %3386 = vmatpush2.msra.mxu0 0.0
    %3387 = vmatprep.subr.mxu0 0.0
    %3388 = vmatpush2.msra.mxu0 0.0
    %3389 = vmatprep.subr.mxu0 0.0
    %3390 = vmatpush2.msra.mxu0 0.0
    %3391 = vmatprep.subr.mxu0 0.0
    %3392 = vmatpush2.msra.mxu0 0.0
    %3393 = vmatprep.subr.mxu0 0.0
    %3394 = vmatpush2.msra.mxu0 0.0
    %3395 = vmatprep.subr.mxu0 0.0
    %3396 = vmatpush2.msra.mxu0 0.0
    %3397 = vmatprep.mubr.f32.mxu0 0.0
    %3398 = vmatmul.mubr.f32.gmra.mxu0 %v1809
    %v3399 = vpop.f32.mrf.mxu0
    %v3400 = vadd.f32 0.0, %v3399
    %v3401 = vpop.f32.mrf.mxu0
    %3402 = vmatprep.mubr.f32.mxu0 0.0
    %3403 = vmatmul.mubr.f32.gmra.mxu0 %v1812
    %v3404 = vpop.f32.mrf.mxu0
    %v3405 = vadd.f32 0.0, %v3404
    %v3406 = vpop.f32.mrf.mxu0
    %3407 = vdwg.mxu0
    %v3408 = vld [vmem:[%s315 + $0x180] sm:$0xff]
    %v3409 = vld [vmem:[%s315 + $0x188] sm:$0xff]
    %v3410 = vld [vmem:[%s315 + $0x190] sm:$0xff]
    %v3411 = vld [vmem:[%s315 + $0x198] sm:$0xff]
    %v3412 = vld [vmem:[%s315 + $0x1a0] sm:$0xff]
    %v3413 = vld [vmem:[%s315 + $0x1a8] sm:$0xff]
    %v3414 = vld [vmem:[%s315 + $0x1b0] sm:$0xff]
    %v3415 = vld [vmem:[%s315 + $0x1b8] sm:$0xff]
    %v3416 = vld [vmem:[%s315 + $0x1c0] sm:$0xff]
    %v3417 = vld [vmem:[%s315 + $0x1c8] sm:$0xff]
    %v3418 = vld [vmem:[%s315 + $0x1d0] sm:$0xff]
    %v3419 = vld [vmem:[%s315 + $0x1d8] sm:$0xff]
    %v3420 = vld [vmem:[%s315 + $0x1e0] sm:$0xff]
    %v3421 = vld [vmem:[%s315 + $0x1e8] sm:$0xff]
    %v3422 = vld [vmem:[%s315 + $0x1f0] sm:$0xff]
    %v3423 = vld [vmem:[%s315 + $0x1f8] sm:$0xff]
    %v3424 = vld [vmem:[%s315 + $0x405] sm:$0x1]
    %v3425 = vlaneseq
    %v3426 = vshrl.u32 %v3425, 7
    %v3427 = vsub.s32 0, %v3426
    %v3428 = vrot.slane %v3424, %v3427
    %3429 = vmatprep.subr.mxu0 0.0
    %3430 = vmatpush1.msra.mxu0 %v3423
    %3431 = vmatprep.subr.mxu0 0.0
    %3432 = vmatpush1.msra.mxu0 %v3422
    %3433 = vmatprep.subr.mxu0 0.0
    %3434 = vmatpush1.msra.mxu0 %v3421
    %3435 = vmatprep.subr.mxu0 0.0
    %3436 = vmatpush1.msra.mxu0 %v3420
    %3437 = vmatprep.subr.mxu0 0.0
    %3438 = vmatpush1.msra.mxu0 %v3419
    %3439 = vmatprep.subr.mxu0 0.0
    %3440 = vmatpush1.msra.mxu0 %v3418
    %3441 = vmatprep.subr.mxu0 0.0
    %3442 = vmatpush1.msra.mxu0 %v3417
    %3443 = vmatprep.subr.mxu0 0.0
    %3444 = vmatpush1.msra.mxu0 %v3416
    %3445 = vmatprep.subr.mxu0 0.0
    %3446 = vmatpush1.msra.mxu0 %v3415
    %3447 = vmatprep.subr.mxu0 0.0
    %3448 = vmatpush1.msra.mxu0 %v3414
    %3449 = vmatprep.subr.mxu0 0.0
    %3450 = vmatpush1.msra.mxu0 %v3413
    %3451 = vmatprep.subr.mxu0 0.0
    %3452 = vmatpush1.msra.mxu0 %v3412
    %3453 = vmatprep.subr.mxu0 0.0
    %3454 = vmatpush1.msra.mxu0 %v3411
    %3455 = vmatprep.subr.mxu0 0.0
    %3456 = vmatpush1.msra.mxu0 %v3410
    %3457 = vmatprep.subr.mxu0 0.0
    %3458 = vmatpush1.msra.mxu0 %v3409
    %3459 = vmatprep.subr.mxu0 0.0
    %3460 = vmatpush1.msra.mxu0 %v3408
    %3461 = vmatprep.subr.mxu0 0.0
    %3462 = vmatpush2.msra.mxu0 0.0
    %3463 = vmatprep.subr.mxu0 0.0
    %3464 = vmatpush2.msra.mxu0 0.0
    %3465 = vmatprep.subr.mxu0 0.0
    %3466 = vmatpush2.msra.mxu0 0.0
    %3467 = vmatprep.subr.mxu0 0.0
    %3468 = vmatpush2.msra.mxu0 0.0
    %3469 = vmatprep.subr.mxu0 0.0
    %3470 = vmatpush2.msra.mxu0 0.0
    %3471 = vmatprep.subr.mxu0 0.0
    %3472 = vmatpush2.msra.mxu0 0.0
    %3473 = vmatprep.subr.mxu0 0.0
    %3474 = vmatpush2.msra.mxu0 0.0
    %3475 = vmatprep.subr.mxu0 0.0
    %3476 = vmatpush2.msra.mxu0 0.0
    %3477 = vmatprep.subr.mxu0 0.0
    %3478 = vmatpush2.msra.mxu0 0.0
    %3479 = vmatprep.subr.mxu0 0.0
    %3480 = vmatpush2.msra.mxu0 0.0
    %3481 = vmatprep.subr.mxu0 0.0
    %3482 = vmatpush2.msra.mxu0 0.0
    %3483 = vmatprep.subr.mxu0 0.0
    %3484 = vmatpush2.msra.mxu0 0.0
    %3485 = vmatprep.subr.mxu0 0.0
    %3486 = vmatpush2.msra.mxu0 0.0
    %3487 = vmatprep.subr.mxu0 0.0
    %3488 = vmatpush2.msra.mxu0 0.0
    %3489 = vmatprep.subr.mxu0 0.0
    %3490 = vmatpush2.msra.mxu0 0.0
    %3491 = vmatprep.subr.mxu0 0.0
    %3492 = vmatpush2.msra.mxu0 0.0
    %3493 = vmatprep.mubr.f32.mxu0 0.0
    %3494 = vmatmul.mubr.f32.gmra.mxu0 %v3400
    %v3495 = vpop.f32.mrf.mxu0
    %v3496 = vadd.f32 %v3428, %v3495
    %v3497 = vpop.f32.mrf.mxu0
    %3498 = vmatprep.mubr.f32.mxu0 0.0
    %3499 = vmatmul.mubr.f32.gmra.mxu0 %v3405
    %v3500 = vpop.f32.mrf.mxu0
    %v3501 = vadd.f32 %v3428, %v3500
    %v3502 = vpop.f32.mrf.mxu0
    %3503 = vdwg.mxu0
    %v3504 = vld [vmem:[%s315 + $0x406] sm:$0x1]
    %v3505 = vlaneseq
    %v3506 = vshrl.u32 %v3505, 7
    %v3507 = vsub.s32 0, %v3506
    %v3508 = vrot.slane %v3504, %v3507
    %v3509 = vmul.f32 %v3508, %v3496
    %v3510 = vmul.f32 %v3508, %v3501
    %v3511 = vadd.f32 %v2460, %v3509
    %v3512 = vadd.f32 %v2461, %v3510
    %v3513 = vld [vmem:[%s315 + $0x407] sm:$0x1]
    %v3514 = vld [vmem:[%s315 + $0x408] sm:$0x1]
    %v3515 = vmul.f32 %v3511, %v622
    %v3516 = vmul.f32 %v3512, %v622
    %3517 = vadd.xlane.f32.xlu0 %v3515
    %v3518 = vpop.xlane.xlu0 %3517
    %v3519 = vsel %vm927, %v3516, 0.0
    %3520 = vadd.xlane.f32.xlu0 %v3519
    %v3521 = vpop.xlane.xlu0 %3520
    %v3522 = vmul.f32 %v3518, 0.015625
    %v3523 = vmul.f32 %v3521, 0.015625
    %v3524 = vsub.f32 %v3511, %v3522
    %v3525 = vsub.f32 %v3512, %v3523
    %v3526 = vmul.f32 %v3524, %v622
    %v3527 = vmul.f32 %v3525, %v622
    %v3528 = vmul.f32 %v3526, %v3526
    %v3529 = vmul.f32 %v3527, %v3527
    %3530 = vadd.xlane.f32.xlu0 %v3528
    %v3531 = vpop.xlane.xlu0 %3530
    %v3532 = vsel %vm927, %v3529, 0.0
    %3533 = vadd.xlane.f32.xlu0 %v3532
    %v3534 = vpop.xlane.xlu0 %3533
    %v3535 = vmul.f32 %v3531, 0.015625
    %v3536 = vmul.f32 %v3534, 0.015625
    %v3537 = vadd.f32 %v3535, 1e-06
    %v3538 = vadd.f32 %v3536, 1e-06
    %v3539 = vrsqrt.pop %v3537
    %v3540 = vrsqrt.pop %v3538
    %v3541 = vmul.f32 %v3526, %v3539
    %v3542 = vmul.f32 %v3527, %v3540
    %v3543 = vlaneseq
    %v3544 = vshrl.u32 %v3543, 7
    %v3545 = vsub.s32 0, %v3544
    %v3546 = vrot.slane %v3513, %v3545
    %v3547 = vmul.f32 %v3541, %v3546
    %v3548 = vmul.f32 %v3542, %v3546
    %v3549 = vlaneseq
    %v3550 = vshrl.u32 %v3549, 7
    %v3551 = vsub.s32 0, %v3550
    %v3552 = vrot.slane %v3514, %v3551
    %v3553 = vadd.f32 %v3547, %v3552
    %v3554 = vadd.f32 %v3548, %v3552
    %v3555 = vld [vmem:[%s315 + $0x200] sm:$0xff]
    %v3556 = vld [vmem:[%s315 + $0x208] sm:$0xff]
    %v3557 = vld [vmem:[%s315 + $0x210] sm:$0xff]
    %v3558 = vld [vmem:[%s315 + $0x218] sm:$0xff]
    %v3559 = vld [vmem:[%s315 + $0x220] sm:$0xff]
    %v3560 = vld [vmem:[%s315 + $0x228] sm:$0xff]
    %v3561 = vld [vmem:[%s315 + $0x230] sm:$0xff]
    %v3562 = vld [vmem:[%s315 + $0x238] sm:$0xff]
    %v3563 = vld [vmem:[%s315 + $0x240] sm:$0xff]
    %v3564 = vld [vmem:[%s315 + $0x248] sm:$0xff]
    %v3565 = vld [vmem:[%s315 + $0x250] sm:$0xff]
    %v3566 = vld [vmem:[%s315 + $0x258] sm:$0xff]
    %v3567 = vld [vmem:[%s315 + $0x260] sm:$0xff]
    %v3568 = vld [vmem:[%s315 + $0x268] sm:$0xff]
    %v3569 = vld [vmem:[%s315 + $0x270] sm:$0xff]
    %v3570 = vld [vmem:[%s315 + $0x278] sm:$0xff]
    %v3571 = vld [vmem:[%s315 + $0x409] sm:$0x1]
    %v3572 = vlaneseq
    %v3573 = vshrl.u32 %v3572, 7
    %v3574 = vsub.s32 0, %v3573
    %v3575 = vrot.slane %v3571, %v3574
    %3576 = vmatprep.subr.mxu0 0.0
    %3577 = vmatpush1.msra.mxu0 %v3570
    %3578 = vmatprep.subr.mxu0 0.0
    %3579 = vmatpush1.msra.mxu0 %v3569
    %3580 = vmatprep.subr.mxu0 0.0
    %3581 = vmatpush1.msra.mxu0 %v3568
    %3582 = vmatprep.subr.mxu0 0.0
    %3583 = vmatpush1.msra.mxu0 %v3567
    %3584 = vmatprep.subr.mxu0 0.0
    %3585 = vmatpush1.msra.mxu0 %v3566
    %3586 = vmatprep.subr.mxu0 0.0
    %3587 = vmatpush1.msra.mxu0 %v3565
    %3588 = vmatprep.subr.mxu0 0.0
    %3589 = vmatpush1.msra.mxu0 %v3564
    %3590 = vmatprep.subr.mxu0 0.0
    %3591 = vmatpush1.msra.mxu0 %v3563
    %3592 = vmatprep.subr.mxu0 0.0
    %3593 = vmatpush1.msra.mxu0 %v3562
    %3594 = vmatprep.subr.mxu0 0.0
    %3595 = vmatpush1.msra.mxu0 %v3561
    %3596 = vmatprep.subr.mxu0 0.0
    %3597 = vmatpush1.msra.mxu0 %v3560
    %3598 = vmatprep.subr.mxu0 0.0
    %3599 = vmatpush1.msra.mxu0 %v3559
    %3600 = vmatprep.subr.mxu0 0.0
    %3601 = vmatpush1.msra.mxu0 %v3558
    %3602 = vmatprep.subr.mxu0 0.0
    %3603 = vmatpush1.msra.mxu0 %v3557
    %3604 = vmatprep.subr.mxu0 0.0
    %3605 = vmatpush1.msra.mxu0 %v3556
    %3606 = vmatprep.subr.mxu0 0.0
    %3607 = vmatpush1.msra.mxu0 %v3555
    %3608 = vmatprep.subr.mxu0 0.0
    %3609 = vmatpush2.msra.mxu0 0.0
    %3610 = vmatprep.subr.mxu0 0.0
    %3611 = vmatpush2.msra.mxu0 0.0
    %3612 = vmatprep.subr.mxu0 0.0
    %3613 = vmatpush2.msra.mxu0 0.0
    %3614 = vmatprep.subr.mxu0 0.0
    %3615 = vmatpush2.msra.mxu0 0.0
    %3616 = vmatprep.subr.mxu0 0.0
    %3617 = vmatpush2.msra.mxu0 0.0
    %3618 = vmatprep.subr.mxu0 0.0
    %3619 = vmatpush2.msra.mxu0 0.0
    %3620 = vmatprep.subr.mxu0 0.0
    %3621 = vmatpush2.msra.mxu0 0.0
    %3622 = vmatprep.subr.mxu0 0.0
    %3623 = vmatpush2.msra.mxu0 0.0
    %3624 = vmatprep.subr.mxu0 0.0
    %3625 = vmatpush2.msra.mxu0 0.0
    %3626 = vmatprep.subr.mxu0 0.0
    %3627 = vmatpush2.msra.mxu0 0.0
    %3628 = vmatprep.subr.mxu0 0.0
    %3629 = vmatpush2.msra.mxu0 0.0
    %3630 = vmatprep.subr.mxu0 0.0
    %3631 = vmatpush2.msra.mxu0 0.0
    %3632 = vmatprep.subr.mxu0 0.0
    %3633 = vmatpush2.msra.mxu0 0.0
    %3634 = vmatprep.subr.mxu0 0.0
    %3635 = vmatpush2.msra.mxu0 0.0
    %3636 = vmatprep.subr.mxu0 0.0
    %3637 = vmatpush2.msra.mxu0 0.0
    %3638 = vmatprep.subr.mxu0 0.0
    %3639 = vmatpush2.msra.mxu0 0.0
    %3640 = vmatprep.mubr.f32.mxu0 0.0
    %3641 = vmatmul.mubr.f32.gmra.mxu0 %v3553
    %v3642 = vpop.f32.mrf.mxu0
    %v3643 = vadd.f32 %v3575, %v3642
    %v3644 = vpop.f32.mrf.mxu0
    %3645 = vmatprep.mubr.f32.mxu0 0.0
    %3646 = vmatmul.mubr.f32.gmra.mxu0 %v3554
    %v3647 = vpop.f32.mrf.mxu0
    %v3648 = vadd.f32 %v3575, %v3647
    %v3649 = vpop.f32.mrf.mxu0
    %3650 = vdwg.mxu0
    %v3651 = vmul.f32 %v3643, 0.5
    %v3652 = vmul.f32 %v3648, 0.5
    %v3653 = vmul.f32 %v3643, %v3643
    %v3654 = vmul.f32 %v3648, %v3648
    %v3655 = vmul.f32 %v3653, %v3643
    %v3656 = vmul.f32 %v3654, %v3648
    %v3657 = vmul.f32 %v3655, 0.044715
    %v3658 = vmul.f32 %v3656, 0.044715
    %v3659 = vadd.f32 %v3643, %v3657
    %v3660 = vadd.f32 %v3648, %v3658
    %v3661 = vmul.f32 %v3659, 0.7978846
    %v3662 = vmul.f32 %v3660, 0.7978846
    %v3663 = vtanh.pop %v3661
    %v3664 = vtanh.pop %v3662
    %v3665 = vadd.f32 %v3663, 1.0
    %v3666 = vadd.f32 %v3664, 1.0
    %v3667 = vmul.f32 %v3651, %v3665
    %v3668 = vmul.f32 %v3652, %v3666
    %v3669 = vld [vmem:[%s315 + $0x280] sm:$0xff]
    %v3670 = vld [vmem:[%s315 + $0x288] sm:$0xff]
    %v3671 = vld [vmem:[%s315 + $0x290] sm:$0xff]
    %v3672 = vld [vmem:[%s315 + $0x298] sm:$0xff]
    %v3673 = vld [vmem:[%s315 + $0x2a0] sm:$0xff]
    %v3674 = vld [vmem:[%s315 + $0x2a8] sm:$0xff]
    %v3675 = vld [vmem:[%s315 + $0x2b0] sm:$0xff]
    %v3676 = vld [vmem:[%s315 + $0x2b8] sm:$0xff]
    %v3677 = vld [vmem:[%s315 + $0x2c0] sm:$0xff]
    %v3678 = vld [vmem:[%s315 + $0x2c8] sm:$0xff]
    %v3679 = vld [vmem:[%s315 + $0x2d0] sm:$0xff]
    %v3680 = vld [vmem:[%s315 + $0x2d8] sm:$0xff]
    %v3681 = vld [vmem:[%s315 + $0x2e0] sm:$0xff]
    %v3682 = vld [vmem:[%s315 + $0x2e8] sm:$0xff]
    %v3683 = vld [vmem:[%s315 + $0x2f0] sm:$0xff]
    %v3684 = vld [vmem:[%s315 + $0x2f8] sm:$0xff]
    %v3685 = vld [vmem:[%s315 + $0x40a] sm:$0x1]
    %v3686 = vlaneseq
    %v3687 = vshrl.u32 %v3686, 7
    %v3688 = vsub.s32 0, %v3687
    %v3689 = vrot.slane %v3685, %v3688
    %3690 = vmatprep.subr.mxu0 0.0
    %3691 = vmatpush1.msra.mxu0 %v3684
    %3692 = vmatprep.subr.mxu0 0.0
    %3693 = vmatpush1.msra.mxu0 %v3683
    %3694 = vmatprep.subr.mxu0 0.0
    %3695 = vmatpush1.msra.mxu0 %v3682
    %3696 = vmatprep.subr.mxu0 0.0
    %3697 = vmatpush1.msra.mxu0 %v3681
    %3698 = vmatprep.subr.mxu0 0.0
    %3699 = vmatpush1.msra.mxu0 %v3680
    %3700 = vmatprep.subr.mxu0 0.0
    %3701 = vmatpush1.msra.mxu0 %v3679
    %3702 = vmatprep.subr.mxu0 0.0
    %3703 = vmatpush1.msra.mxu0 %v3678
    %3704 = vmatprep.subr.mxu0 0.0
    %3705 = vmatpush1.msra.mxu0 %v3677
    %3706 = vmatprep.subr.mxu0 0.0
    %3707 = vmatpush1.msra.mxu0 %v3676
    %3708 = vmatprep.subr.mxu0 0.0
    %3709 = vmatpush1.msra.mxu0 %v3675
    %3710 = vmatprep.subr.mxu0 0.0
    %3711 = vmatpush1.msra.mxu0 %v3674
    %3712 = vmatprep.subr.mxu0 0.0
    %3713 = vmatpush1.msra.mxu0 %v3673
    %3714 = vmatprep.subr.mxu0 0.0
    %3715 = vmatpush1.msra.mxu0 %v3672
    %3716 = vmatprep.subr.mxu0 0.0
    %3717 = vmatpush1.msra.mxu0 %v3671
    %3718 = vmatprep.subr.mxu0 0.0
    %3719 = vmatpush1.msra.mxu0 %v3670
    %3720 = vmatprep.subr.mxu0 0.0
    %3721 = vmatpush1.msra.mxu0 %v3669
    %3722 = vmatprep.subr.mxu0 0.0
    %3723 = vmatpush2.msra.mxu0 0.0
    %3724 = vmatprep.subr.mxu0 0.0
    %3725 = vmatpush2.msra.mxu0 0.0
    %3726 = vmatprep.subr.mxu0 0.0
    %3727 = vmatpush2.msra.mxu0 0.0
    %3728 = vmatprep.subr.mxu0 0.0
    %3729 = vmatpush2.msra.mxu0 0.0
    %3730 = vmatprep.subr.mxu0 0.0
    %3731 = vmatpush2.msra.mxu0 0.0
    %3732 = vmatprep.subr.mxu0 0.0
    %3733 = vmatpush2.msra.mxu0 0.0
    %3734 = vmatprep.subr.mxu0 0.0
    %3735 = vmatpush2.msra.mxu0 0.0
    %3736 = vmatprep.subr.mxu0 0.0
    %3737 = vmatpush2.msra.mxu0 0.0
    %3738 = vmatprep.subr.mxu0 0.0
    %3739 = vmatpush2.msra.mxu0 0.0
    %3740 = vmatprep.subr.mxu0 0.0
    %3741 = vmatpush2.msra.mxu0 0.0
    %3742 = vmatprep.subr.mxu0 0.0
    %3743 = vmatpush2.msra.mxu0 0.0
    %3744 = vmatprep.subr.mxu0 0.0
    %3745 = vmatpush2.msra.mxu0 0.0
    %3746 = vmatprep.subr.mxu0 0.0
    %3747 = vmatpush2.msra.mxu0 0.0
    %3748 = vmatprep.subr.mxu0 0.0
    %3749 = vmatpush2.msra.mxu0 0.0
    %3750 = vmatprep.subr.mxu0 0.0
    %3751 = vmatpush2.msra.mxu0 0.0
    %3752 = vmatprep.subr.mxu0 0.0
    %3753 = vmatpush2.msra.mxu0 0.0
    %3754 = vmatprep.mubr.f32.mxu0 0.0
    %3755 = vmatmul.mubr.f32.gmra.mxu0 %v3553
    %v3756 = vpop.f32.mrf.mxu0
    %v3757 = vadd.f32 %v3689, %v3756
    %v3758 = vpop.f32.mrf.mxu0
    %3759 = vmatprep.mubr.f32.mxu0 0.0
    %3760 = vmatmul.mubr.f32.gmra.mxu0 %v3554
    %v3761 = vpop.f32.mrf.mxu0
    %v3762 = vadd.f32 %v3689, %v3761
    %v3763 = vpop.f32.mrf.mxu0
    %3764 = vdwg.mxu0
    %v3765 = vmul.f32 %v3757, 0.5
    %v3766 = vmul.f32 %v3762, 0.5
    %v3767 = vmul.f32 %v3757, %v3757
    %v3768 = vmul.f32 %v3762, %v3762
    %v3769 = vmul.f32 %v3767, %v3757
    %v3770 = vmul.f32 %v3768, %v3762
    %v3771 = vmul.f32 %v3769, 0.044715
    %v3772 = vmul.f32 %v3770, 0.044715
    %v3773 = vadd.f32 %v3757, %v3771
    %v3774 = vadd.f32 %v3762, %v3772
    %v3775 = vmul.f32 %v3773, 0.7978846
    %v3776 = vmul.f32 %v3774, 0.7978846
    %v3777 = vtanh.pop %v3775
    %v3778 = vtanh.pop %v3776
    %v3779 = vadd.f32 %v3777, 1.0
    %v3780 = vadd.f32 %v3778, 1.0
    %v3781 = vmul.f32 %v3765, %v3779
    %v3782 = vmul.f32 %v3766, %v3780
    %v3783 = vld [vmem:[%s315 + $0x300] sm:$0xff]
    %v3784 = vld [vmem:[%s315 + $0x308] sm:$0xff]
    %v3785 = vld [vmem:[%s315 + $0x310] sm:$0xff]
    %v3786 = vld [vmem:[%s315 + $0x318] sm:$0xff]
    %v3787 = vld [vmem:[%s315 + $0x320] sm:$0xff]
    %v3788 = vld [vmem:[%s315 + $0x328] sm:$0xff]
    %v3789 = vld [vmem:[%s315 + $0x330] sm:$0xff]
    %v3790 = vld [vmem:[%s315 + $0x338] sm:$0xff]
    %v3791 = vld [vmem:[%s315 + $0x340] sm:$0xff]
    %v3792 = vld [vmem:[%s315 + $0x348] sm:$0xff]
    %v3793 = vld [vmem:[%s315 + $0x350] sm:$0xff]
    %v3794 = vld [vmem:[%s315 + $0x358] sm:$0xff]
    %v3795 = vld [vmem:[%s315 + $0x360] sm:$0xff]
    %v3796 = vld [vmem:[%s315 + $0x368] sm:$0xff]
    %v3797 = vld [vmem:[%s315 + $0x370] sm:$0xff]
    %v3798 = vld [vmem:[%s315 + $0x378] sm:$0xff]
    %v3799 = vld [vmem:[%s315 + $0x380] sm:$0xff]
    %v3800 = vld [vmem:[%s315 + $0x388] sm:$0xff]
    %v3801 = vld [vmem:[%s315 + $0x390] sm:$0xff]
    %v3802 = vld [vmem:[%s315 + $0x398] sm:$0xff]
    %v3803 = vld [vmem:[%s315 + $0x3a0] sm:$0xff]
    %v3804 = vld [vmem:[%s315 + $0x3a8] sm:$0xff]
    %v3805 = vld [vmem:[%s315 + $0x3b0] sm:$0xff]
    %v3806 = vld [vmem:[%s315 + $0x3b8] sm:$0xff]
    %v3807 = vld [vmem:[%s315 + $0x3c0] sm:$0xff]
    %v3808 = vld [vmem:[%s315 + $0x3c8] sm:$0xff]
    %v3809 = vld [vmem:[%s315 + $0x3d0] sm:$0xff]
    %v3810 = vld [vmem:[%s315 + $0x3d8] sm:$0xff]
    %v3811 = vld [vmem:[%s315 + $0x3e0] sm:$0xff]
    %v3812 = vld [vmem:[%s315 + $0x3e8] sm:$0xff]
    %v3813 = vld [vmem:[%s315 + $0x3f0] sm:$0xff]
    %v3814 = vld [vmem:[%s315 + $0x3f8] sm:$0xff]
    %3815 = vmatprep.subr.mxu0 0.0
    %3816 = vmatpush1.msra.mxu0 %v3814
    %3817 = vmatprep.subr.mxu0 0.0
    %3818 = vmatpush1.msra.mxu0 %v3813
    %3819 = vmatprep.subr.mxu0 0.0
    %3820 = vmatpush1.msra.mxu0 %v3812
    %3821 = vmatprep.subr.mxu0 0.0
    %3822 = vmatpush1.msra.mxu0 %v3811
    %3823 = vmatprep.subr.mxu0 0.0
    %3824 = vmatpush1.msra.mxu0 %v3810
    %3825 = vmatprep.subr.mxu0 0.0
    %3826 = vmatpush1.msra.mxu0 %v3809
    %3827 = vmatprep.subr.mxu0 0.0
    %3828 = vmatpush1.msra.mxu0 %v3808
    %3829 = vmatprep.subr.mxu0 0.0
    %3830 = vmatpush1.msra.mxu0 %v3807
    %3831 = vmatprep.subr.mxu0 0.0
    %3832 = vmatpush1.msra.mxu0 %v3806
    %3833 = vmatprep.subr.mxu0 0.0
    %3834 = vmatpush1.msra.mxu0 %v3805
    %3835 = vmatprep.subr.mxu0 0.0
    %3836 = vmatpush1.msra.mxu0 %v3804
    %3837 = vmatprep.subr.mxu0 0.0
    %3838 = vmatpush1.msra.mxu0 %v3803
    %3839 = vmatprep.subr.mxu0 0.0
    %3840 = vmatpush1.msra.mxu0 %v3802
    %3841 = vmatprep.subr.mxu0 0.0
    %3842 = vmatpush1.msra.mxu0 %v3801
    %3843 = vmatprep.subr.mxu0 0.0
    %3844 = vmatpush1.msra.mxu0 %v3800
    %3845 = vmatprep.subr.mxu0 0.0
    %3846 = vmatpush1.msra.mxu0 %v3799
    %3847 = vmatprep.subr.mxu0 0.0
    %3848 = vmatpush2.msra.mxu0 0.0
    %3849 = vmatprep.subr.mxu0 0.0
    %3850 = vmatpush2.msra.mxu0 0.0
    %3851 = vmatprep.subr.mxu0 0.0
    %3852 = vmatpush2.msra.mxu0 0.0
    %3853 = vmatprep.subr.mxu0 0.0
    %3854 = vmatpush2.msra.mxu0 0.0
    %3855 = vmatprep.subr.mxu0 0.0
    %3856 = vmatpush2.msra.mxu0 0.0
    %3857 = vmatprep.subr.mxu0 0.0
    %3858 = vmatpush2.msra.mxu0 0.0
    %3859 = vmatprep.subr.mxu0 0.0
    %3860 = vmatpush2.msra.mxu0 0.0
    %3861 = vmatprep.subr.mxu0 0.0
    %3862 = vmatpush2.msra.mxu0 0.0
    %3863 = vmatprep.subr.mxu0 0.0
    %3864 = vmatpush2.msra.mxu0 0.0
    %3865 = vmatprep.subr.mxu0 0.0
    %3866 = vmatpush2.msra.mxu0 0.0
    %3867 = vmatprep.subr.mxu0 0.0
    %3868 = vmatpush2.msra.mxu0 0.0
    %3869 = vmatprep.subr.mxu0 0.0
    %3870 = vmatpush2.msra.mxu0 0.0
    %3871 = vmatprep.subr.mxu0 0.0
    %3872 = vmatpush2.msra.mxu0 0.0
    %3873 = vmatprep.subr.mxu0 0.0
    %3874 = vmatpush2.msra.mxu0 0.0
    %3875 = vmatprep.subr.mxu0 0.0
    %3876 = vmatpush2.msra.mxu0 0.0
    %3877 = vmatprep.subr.mxu0 0.0
    %3878 = vmatpush2.msra.mxu0 0.0
    %3879 = vmatprep.mubr.f32.mxu0 0.0
    %3880 = vmatmul.mubr.f32.gmra.mxu0 %v3781
    %v3881 = vpop.f32.mrf.mxu0
    %v3882 = vadd.f32 0.0, %v3881
    %v3883 = vpop.f32.mrf.mxu0
    %3884 = vmatprep.mubr.f32.mxu0 0.0
    %3885 = vmatmul.mubr.f32.gmra.mxu0 %v3782
    %v3886 = vpop.f32.mrf.mxu0
    %v3887 = vpop.f32.mrf.mxu0
    %3888 = vdwg.mxu0
    %3889 = vmatprep.subr.mxu0 0.0
    %3890 = vmatpush1.msra.mxu0 %v3798
    %3891 = vmatprep.subr.mxu0 0.0
    %3892 = vmatpush1.msra.mxu0 %v3797
    %3893 = vmatprep.subr.mxu0 0.0
    %3894 = vmatpush1.msra.mxu0 %v3796
    %3895 = vmatprep.subr.mxu0 0.0
    %3896 = vmatpush1.msra.mxu0 %v3795
    %3897 = vmatprep.subr.mxu0 0.0
    %3898 = vmatpush1.msra.mxu0 %v3794
    %3899 = vmatprep.subr.mxu0 0.0
    %3900 = vmatpush1.msra.mxu0 %v3793
    %3901 = vmatprep.subr.mxu0 0.0
    %3902 = vmatpush1.msra.mxu0 %v3792
    %3903 = vmatprep.subr.mxu0 0.0
    %3904 = vmatpush1.msra.mxu0 %v3791
    %3905 = vmatprep.subr.mxu0 0.0
    %3906 = vmatpush1.msra.mxu0 %v3790
    %3907 = vmatprep.subr.mxu0 0.0
    %3908 = vmatpush1.msra.mxu0 %v3789
    %3909 = vmatprep.subr.mxu0 0.0
    %3910 = vmatpush1.msra.mxu0 %v3788
    %3911 = vmatprep.subr.mxu0 0.0
    %3912 = vmatpush1.msra.mxu0 %v3787
    %3913 = vmatprep.subr.mxu0 0.0
    %3914 = vmatpush1.msra.mxu0 %v3786
    %3915 = vmatprep.subr.mxu0 0.0
    %3916 = vmatpush1.msra.mxu0 %v3785
    %3917 = vmatprep.subr.mxu0 0.0
    %3918 = vmatpush1.msra.mxu0 %v3784
    %3919 = vmatprep.subr.mxu0 0.0
    %3920 = vmatpush1.msra.mxu0 %v3783
    %3921 = vmatprep.subr.mxu0 0.0
    %3922 = vmatpush2.msra.mxu0 0.0
    %3923 = vmatprep.subr.mxu0 0.0
    %3924 = vmatpush2.msra.mxu0 0.0
    %3925 = vmatprep.subr.mxu0 0.0
    %3926 = vmatpush2.msra.mxu0 0.0
    %3927 = vmatprep.subr.mxu0 0.0
    %3928 = vmatpush2.msra.mxu0 0.0
    %3929 = vmatprep.subr.mxu0 0.0
    %3930 = vmatpush2.msra.mxu0 0.0
    %3931 = vmatprep.subr.mxu0 0.0
    %3932 = vmatpush2.msra.mxu0 0.0
    %3933 = vmatprep.subr.mxu0 0.0
    %3934 = vmatpush2.msra.mxu0 0.0
    %3935 = vmatprep.subr.mxu0 0.0
    %3936 = vmatpush2.msra.mxu0 0.0
    %3937 = vmatprep.subr.mxu0 0.0
    %3938 = vmatpush2.msra.mxu0 0.0
    %3939 = vmatprep.subr.mxu0 0.0
    %3940 = vmatpush2.msra.mxu0 0.0
    %3941 = vmatprep.subr.mxu0 0.0
    %3942 = vmatpush2.msra.mxu0 0.0
    %3943 = vmatprep.subr.mxu0 0.0
    %3944 = vmatpush2.msra.mxu0 0.0
    %3945 = vmatprep.subr.mxu0 0.0
    %3946 = vmatpush2.msra.mxu0 0.0
    %3947 = vmatprep.subr.mxu0 0.0
    %3948 = vmatpush2.msra.mxu0 0.0
    %3949 = vmatprep.subr.mxu0 0.0
    %3950 = vmatpush2.msra.mxu0 0.0
    %3951 = vmatprep.subr.mxu0 0.0
    %3952 = vmatpush2.msra.mxu0 0.0
    %3953 = vmatprep.mubr.f32.mxu0 0.0
    %3954 = vmatmul.mubr.f32.gmra.mxu0 %v3667
    %v3955 = vpop.f32.mrf.mxu0
    %v3956 = vadd.f32 %v3882, %v3955
    %v3957 = vpop.f32.mrf.mxu0
    %3958 = vmatprep.mubr.f32.mxu0 0.0
    %3959 = vmatmul.mubr.f32.gmra.mxu0 %v3668
    %v3960 = vpop.f32.mrf.mxu0
    %v3961 = vpop.f32.mrf.mxu0
    %3962 = vdwg.mxu0
    %v3963 = vld [vmem:[%s315 + $0x40b] sm:$0x1]
    %v3964 = vlaneseq
    %v3965 = vshrl.u32 %v3964, 7
    %v3966 = vsub.s32 0, %v3965
    %v3967 = vrot.slane %v3963, %v3966
    %v3968 = vadd.f32 %v3956, %v3967
    %v3969 = vld [vmem:[%s315 + $0x40c] sm:$0x1]
    %v3970 = vlaneseq
    %v3971 = vshrl.u32 %v3970, 7
    %v3972 = vsub.s32 0, %v3971
    %v3973 = vrot.slane %v3969, %v3972
    %v3974 = vmul.f32 %v3973, %v3968
    %v3975 = vadd.f32 %v3511, %v3974
    %v3976 = vld [vmem:[%s1 + $0x15c] sm:$0x1]
    %v3977 = vld [vmem:[%s1 + $0x15d] sm:$0x1]
    %v3978 = vmul.f32 %v3975, %v622
    %v3979 = vsel %vm927, %v3978, 0.0
    %3980 = vadd.xlane.f32.xlu0 %v3979
    %v3981 = vpop.xlane.xlu0 %3980
    %v3982 = vmul.f32 %v3981, 0.015625
    %v3983 = vsub.f32 %v3975, %v3982
    %v3984 = vmul.f32 %v3983, %v622
    %v3985 = vmul.f32 %v3984, %v3984
    %v3986 = vsel %vm927, %v3985, 0.0
    %3987 = vadd.xlane.f32.xlu0 %v3986
    %v3988 = vpop.xlane.xlu0 %3987
    %v3989 = vmul.f32 %v3988, 0.015625
    %v3990 = vadd.f32 %v3989, 1e-06
    %v3991 = vrsqrt.pop %v3990
    %v3992 = vmul.f32 %v3984, %v3991
    %v3993 = vlaneseq
    %v3994 = vshrl.u32 %v3993, 7
    %v3995 = vsub.s32 0, %v3994
    %v3996 = vrot.slane %v3976, %v3995
    %v3997 = vmul.f32 %v3992, %v3996
    %v3998 = vlaneseq
    %v3999 = vshrl.u32 %v3998, 7
    %v4000 = vsub.s32 0, %v3999
    %v4001 = vrot.slane %v3977, %v4000
    %v4002 = vadd.f32 %v3997, %v4001
    %4003 = vst [vmem:[#allocation4] sm:$0x3] %v4002
    // Predicated region
    $region78: #{dino_forward.1} parent=1 // pred_check
      _
    $region79: #{dino_forward.1} parent=1 // pred_check_branch
      %4005 = sbr.rel (0) target = $region81
    $region80: #{dino_forward.1} parent=1 // pred_region
      %s4007 = ssub.s32 32, 32
      %4008 = vsyncadd [#allocation5], %s4007
      %s4010 = sshll.u32 [#allocation4], 4
      %s4011 = int_to_ptr.vmem [resolvable:$true] %s4010
      %4013 = dma.vmem_to_hbm [thread:$0]  %s4011, 32, %s3, [#allocation5]
    $region81: #{dino_forward.1} parent=1 // pred_fallthru
      _
    // Predicated region
    $region82: #{dino_forward.1} parent=1 // pred_check
      _
    $region83: #{dino_forward.1} parent=1 // pred_check_branch
      %4015 = sbr.rel (0) target = $region85
    $region84: #{dino_forward.1} parent=1 // pred_region
      %4016 = dma.done [#allocation5], 32
    $region85: #{dino_forward.1} parent=1 // pred_fallthru
      _
    %4017 = vsyncpa [#allocation5], 1
  %4018 = vsyncmov [#allocation3]
  %s4019 = vpop.sfrf %4018
  %p4020 = scmp.eq.s32.totalorder %s4019, 0
  %p4021 = pneg %p4020
  %4023 = shalt.err (%p4021)
  %s4024 = scalar_lea.sflag [#allocation3], 1
  %4025 = vsyncmov %s4024
  %s4026 = vpop.sfrf %4025
  %p4027 = scmp.eq.s32.totalorder %s4026, 0
  %p4028 = pneg %p4027
  %4030 = shalt.err (%p4028)

</llo_original>
